<compile_context>
chip_gen: v7x
topology: tpu7x:2x2x1
jax: 0.10.0
libtpu: 0.0.40
codegen_flags: <defaults>
</compile_context>

<pallas_src>
import numpy as np
import jax
import jax.numpy as jnp
from jax.experimental import pallas as pl
from jax.experimental.pallas import tpu as pltpu

# Network dims fixed by the PyTorch module.
K_IN = 160    # latent dim of the generator input
H1 = 512
H2 = 1024


def generator_kernel(x_ref, w1_ref, b1_ref, w2_ref, b2_ref, w3_ref, b3_ref,
                     out_ref):
    # x tile arrives already in bf16; MXU matmuls accumulate in f32.
    x = x_ref[...]                                                  # (tm, 160) bf16
    h1 = jnp.dot(x, w1_ref[...], preferred_element_type=jnp.float32)
    h1 = jnp.maximum(h1 + b1_ref[...], 0.0).astype(jnp.bfloat16)    # f32 ReLU -> bf16
    h2 = jnp.dot(h1, w2_ref[...], preferred_element_type=jnp.float32)
    h2 = jnp.maximum(h2 + b2_ref[...], 0.0).astype(jnp.bfloat16)    # f32 ReLU -> bf16
    h3 = jnp.dot(h2, w3_ref[...], preferred_element_type=jnp.float32)
    out_ref[...] = jax.nn.sigmoid(h3 + b3_ref[...]).astype(out_ref.dtype)


def _pick_tile_m(batch, max_tm=512):
    """Tile rows over the batch.

    * batch < 16: single full-extent tile (too small to split usefully).
    * otherwise: an even number of tiles >= 2 (v7x megacore gets balanced work),
      each tile <= max_tm rows (amortizes per-grid-step overhead on v5e/v6e) and
      a multiple of 8 (sublane alignment).
    """
    if batch < 16:
        return batch
    n_tiles = max(2, pl.cdiv(batch, max_tm))
    if n_tiles % 2:
        n_tiles += 1
    tm = ((pl.cdiv(batch, n_tiles) + 7) // 8) * 8
    return min(tm, batch)


def generator_forward(x, params, out_shape, *, tile_m=None):
    """x: (B, 160) float (cast to bf16 if needed); params from prepare_params().
    Matches Generator.forward: l1->ReLU->l2->ReLU->l3->Sigmoid->reshape(out_shape)."""
    w1, b1, w2, b2, w3, b3 = params
    B = x.shape[0]
    P = w3.shape[1]
    tm = _pick_tile_m(B) if tile_m is None else tile_m
    grid = (pl.cdiv(B, tm),)

    # Feed x to the kernel in bf16 (half the per-tile DMA bytes, no in-kernel cast).
    # Ideally the producer already emits bf16 so this cast is a no-op.
    if x.dtype != jnp.bfloat16:
        x = x.astype(jnp.bfloat16)

    def resident(shape):
        # Weights/biases: same block for every grid step -> stay VMEM-resident.
        # (pl.Buffered(1) would also drop the second pipeline buffer, but the
        #  resident footprint is only ~1.75 MiB so we skip it for portability.)
        return pl.BlockSpec(shape, lambda i: (0, 0))

    in_specs = [
        pl.BlockSpec((tm, K_IN), lambda i: (i, 0)),   # x tile, pipelined over batch
        resident((K_IN, H1)), resident((1, H1)),
        resident((H1, H2)),   resident((1, H2)),
        resident((H2, P)),    resident((1, P)),
    ]
    out_specs = pl.BlockSpec((tm, P), lambda i: (i, 0))

    flops = 2 * B * (K_IN * H1 + H1 * H2 + H2 * P)
    bytes_accessed = int(
        B * K_IN * 2                                            # bf16 x
        + sum(int(p.size) * p.dtype.itemsize for p in params)   # resident weights
        + B * P * 4)                                            # f32 out

    out_flat = pl.pallas_call(
        generator_kernel,
        out_shape=jax.ShapeDtypeStruct((B, P), jnp.float32),
        grid=grid,
        in_specs=in_specs,
        out_specs=out_specs,
        compiler_params=pltpu.CompilerParams(
            dimension_semantics=("parallel",)),
        cost_estimate=pl.CostEstimate(
            flops=flops, transcendentals=2 * B * P,
            bytes_accessed=bytes_accessed),
    )(x, w1, b1, w2, b2, w3, b3)

    # torch.reshape(x, out_shape) is only valid when B * P == prod(out_shape)
    # (the module's B == 1 case, since P = prod(out_shape)); otherwise treat
    # out_shape as per-sample and prepend the batch dim.
    if B * P == int(np.prod(out_shape)):
        return out_flat.reshape(tuple(out_shape))
    return out_flat.reshape((B,) + tuple(out_shape))
    # TODO(synk): for repeated B=1 inference the remaining win is keeping the bf16
    # weights VMEM-resident across calls (cross-call prefetch pattern), not tiling.


def init_linear_params(key, in_features, out_features):
    """Deterministic init mirroring PyTorch nn.Linear defaults
    (uniform(-1/sqrt(fan_in), 1/sqrt(fan_in))).  Weight stored as (in, out)."""
    k_w, k_b = jax.random.split(key)
    bound = 1.0 / np.sqrt(in_features)
    w = jax.random.uniform(k_w, (in_features, out_features), jnp.float32,
                           minval=-bound, maxval=bound)
    b = jax.random.uniform(k_b, (1, out_features), jnp.float32,
                           minval=-bound, maxval=bound)
    return w, b


def prepare_params(f32_params):
    """Kernel layout: bf16 matmul weights (unpadded), biases kept f32 as (1, N)."""
    w1, b1, w2, b2, w3, b3 = f32_params
    return (w1.astype(jnp.bfloat16), b1,
            w2.astype(jnp.bfloat16), b2,
            w3.astype(jnp.bfloat16), b3)


def generator_reference(x, f32_params):
    """Pure-JAX reference with the same bf16-matmul / f32-elementwise recipe."""
    w1, b1, w2, b2, w3, b3 = f32_params
    bf = jnp.bfloat16
    h1 = jax.nn.relu(jnp.dot(x.astype(bf), w1.astype(bf),
                             preferred_element_type=jnp.float32) + b1)
    h2 = jax.nn.relu(jnp.dot(h1.astype(bf), w2.astype(bf),
                             preferred_element_type=jnp.float32) + b2)
    return jax.nn.sigmoid(jnp.dot(h2.astype(bf), w3.astype(bf),
                                  preferred_element_type=jnp.float32) + b3)


if __name__ == "__main__":
    key = jax.random.PRNGKey(0)
    k_x, k1, k2, k3 = jax.random.split(key, 4)

    out_shape = (4, 8, 8)                     # per-sample output -> P = 256
    P = int(np.prod(out_shape))

    f32_params = (*init_linear_params(k1, K_IN, H1),
                  *init_linear_params(k2, H1, H2),
                  *init_linear_params(k3, H2, P))
    params = prepare_params(f32_params)

    # Small batched case: B=48 -> two 24-row tiles (both TCs busy on v7x).
    B = 48
    x = jax.random.normal(k_x, (B, K_IN), jnp.float32)
    out = jax.block_until_ready(generator_forward(x, params, out_shape))
    assert out.shape == (B,) + out_shape, out.shape

    ref = np.asarray(generator_reference(x, f32_params)).reshape((B,) + out_shape)
    np.testing.assert_allclose(np.asarray(out), ref, atol=2e-3, rtol=2e-3)
    assert bool(jnp.all((out >= 0.0) & (out <= 1.0)))   # sigmoid range sanity

    # Tiny single-tile case (B=4, below the 2-tile threshold).
    out4 = jax.block_until_ready(generator_forward(x[:4], params, out_shape))
    np.testing.assert_allclose(np.asarray(out4), ref[:4], atol=2e-3, rtol=2e-3)

    # B=1 case: exact torch.reshape(x, out_shape) semantics of the module.
    out_shape1 = (1, 4, 8, 8)                 # prod = 256 = P
    out1 = jax.block_until_ready(generator_forward(x[:1], params, out_shape1))
    assert out1.shape == out_shape1, out1.shape
    np.testing.assert_allclose(np.asarray(out1), ref[:1].reshape(out_shape1),
                               atol=2e-3, rtol=2e-3)

    print("KERNEL_OK")
</pallas_src>

<mosaic_0001>
module attributes {stable_mosaic.version = 11 : i64} {
  func.func @generator_kernel(%arg0: i32, %arg1: memref<24x160xbf16, #tpu.memory_space<vmem>>, %arg2: memref<160x512xbf16, #tpu.memory_space<vmem>>, %arg3: memref<1x512xf32, #tpu.memory_space<vmem>>, %arg4: memref<512x1024xbf16, #tpu.memory_space<vmem>>, %arg5: memref<1x1024xf32, #tpu.memory_space<vmem>>, %arg6: memref<1024x256xbf16, #tpu.memory_space<vmem>>, %arg7: memref<1x256xf32, #tpu.memory_space<vmem>>, %arg8: memref<24x256xf32, #tpu.memory_space<vmem>>) attributes {dimension_semantics = [#tpu.dimension_semantics<parallel>], iteration_bounds = array<i64: 2>, scalar_prefetch = 0 : i64, scratch_operands = 0 : i64, tpu.core_type = #tpu.core_type<tc>, window_params = [{transform_indices = @transform_0, window_bounds = array<i64: 24, 160>}, {pipeline_mode = #tpu.pipeline_mode<synchronous>, transform_indices = @transform_1, window_bounds = array<i64: 160, 512>}, {pipeline_mode = #tpu.pipeline_mode<synchronous>, transform_indices = @transform_2, window_bounds = array<i64: 1, 512>}, {pipeline_mode = #tpu.pipeline_mode<synchronous>, transform_indices = @transform_3, window_bounds = array<i64: 512, 1024>}, {pipeline_mode = #tpu.pipeline_mode<synchronous>, transform_indices = @transform_4, window_bounds = array<i64: 1, 1024>}, {pipeline_mode = #tpu.pipeline_mode<synchronous>, transform_indices = @transform_5, window_bounds = array<i64: 1024, 256>}, {pipeline_mode = #tpu.pipeline_mode<synchronous>, transform_indices = @transform_6, window_bounds = array<i64: 1, 256>}, {transform_indices = @transform_7, window_bounds = array<i64: 24, 256>}]} {
    %c0 = arith.constant 0 : index
    %c0_0 = arith.constant 0 : index
    %0 = vector.load %arg1[%c0, %c0_0] : memref<24x160xbf16, #tpu.memory_space<vmem>>, vector<24x160xbf16>
    %c0_1 = arith.constant 0 : index
    %c0_2 = arith.constant 0 : index
    %1 = vector.load %arg2[%c0_1, %c0_2] : memref<160x512xbf16, #tpu.memory_space<vmem>>, vector<160x512xbf16>
    %cst = arith.constant dense<0.000000e+00> : vector<24x512xf32>
    %2 = tpu.matmul %0, %1, %cst {dimension_numbers = #tpu.dot_dimension_numbers<[1], [0], [0], [1], [0, 0, 1, 1], [], []>} : vector<24x160xbf16>, vector<160x512xbf16>, vector<24x512xf32> -> vector<24x512xf32>
    %c0_3 = arith.constant 0 : index
    %c0_4 = arith.constant 0 : index
    %3 = vector.load %arg3[%c0_3, %c0_4] : memref<1x512xf32, #tpu.memory_space<vmem>>, vector<1x512xf32>
    %4 = vector.broadcast %3 : vector<1x512xf32> to vector<24x512xf32>
    %5 = arith.addf %2, %4 : vector<24x512xf32>
    %cst_5 = arith.constant 0.000000e+00 : f32
    %6 = vector.broadcast %cst_5 : f32 to vector<24x512xf32>
    %7 = arith.maximumf %5, %6 : vector<24x512xf32>
    %8 = arith.truncf %7 : vector<24x512xf32> to vector<24x512xbf16>
    %c0_6 = arith.constant 0 : index
    %c0_7 = arith.constant 0 : index
    %9 = vector.load %arg4[%c0_6, %c0_7] : memref<512x1024xbf16, #tpu.memory_space<vmem>>, vector<512x1024xbf16>
    %cst_8 = arith.constant dense<0.000000e+00> : vector<24x1024xf32>
    %10 = tpu.matmul %8, %9, %cst_8 {dimension_numbers = #tpu.dot_dimension_numbers<[1], [0], [0], [1], [0, 0, 1, 1], [], []>} : vector<24x512xbf16>, vector<512x1024xbf16>, vector<24x1024xf32> -> vector<24x1024xf32>
    %c0_9 = arith.constant 0 : index
    %c0_10 = arith.constant 0 : index
    %11 = vector.load %arg5[%c0_9, %c0_10] : memref<1x1024xf32, #tpu.memory_space<vmem>>, vector<1x1024xf32>
    %12 = vector.broadcast %11 : vector<1x1024xf32> to vector<24x1024xf32>
    %13 = arith.addf %10, %12 : vector<24x1024xf32>
    %cst_11 = arith.constant 0.000000e+00 : f32
    %14 = vector.broadcast %cst_11 : f32 to vector<24x1024xf32>
    %15 = arith.maximumf %13, %14 : vector<24x1024xf32>
    %16 = arith.truncf %15 : vector<24x1024xf32> to vector<24x1024xbf16>
    %c0_12 = arith.constant 0 : index
    %c0_13 = arith.constant 0 : index
    %17 = vector.load %arg6[%c0_12, %c0_13] : memref<1024x256xbf16, #tpu.memory_space<vmem>>, vector<1024x256xbf16>
    %cst_14 = arith.constant dense<0.000000e+00> : vector<24x256xf32>
    %18 = tpu.matmul %16, %17, %cst_14 {dimension_numbers = #tpu.dot_dimension_numbers<[1], [0], [0], [1], [0, 0, 1, 1], [], []>} : vector<24x1024xbf16>, vector<1024x256xbf16>, vector<24x256xf32> -> vector<24x256xf32>
    %c0_15 = arith.constant 0 : index
    %c0_16 = arith.constant 0 : index
    %19 = vector.load %arg7[%c0_15, %c0_16] : memref<1x256xf32, #tpu.memory_space<vmem>>, vector<1x256xf32>
    %20 = vector.broadcast %19 : vector<1x256xf32> to vector<24x256xf32>
    %21 = arith.addf %18, %20 : vector<24x256xf32>
    %22 = arith.negf %21 : vector<24x256xf32>
    %23 = math.exp %22 : vector<24x256xf32>
    %cst_17 = arith.constant 1.000000e+00 : f32
    %24 = vector.broadcast %cst_17 : f32 to vector<24x256xf32>
    %25 = arith.addf %24, %23 : vector<24x256xf32>
    %26 = arith.divf %24, %25 : vector<24x256xf32>
    %c0_18 = arith.constant 0 : index
    %c0_19 = arith.constant 0 : index
    %27 = vector.load %arg8[%c0_18, %c0_19] : memref<24x256xf32, #tpu.memory_space<vmem>>, vector<24x256xf32>
    tpu.vector_store %arg8[%c0_18, %c0_19], %26 {strides = array<i32>} : memref<24x256xf32, #tpu.memory_space<vmem>>, vector<24x256xf32>,
    return
  }
  func.func @transform_0(%arg0: i32) -> (i32, i32) {
    %c0_i32 = arith.constant 0 : i32
    %c0_i32_0 = arith.constant 0 : i32
    return %arg0, %c0_i32 : i32, i32
  }
  func.func @transform_1(%arg0: i32) -> (i32, i32) {
    %c0_i32 = arith.constant 0 : i32
    %c0_i32_0 = arith.constant 0 : i32
    %c0_i32_1 = arith.constant 0 : i32
    return %c0_i32, %c0_i32_0 : i32, i32
  }
  func.func @transform_2(%arg0: i32) -> (i32, i32) {
    %c0_i32 = arith.constant 0 : i32
    %c0_i32_0 = arith.constant 0 : i32
    %c0_i32_1 = arith.constant 0 : i32
    return %c0_i32, %c0_i32_0 : i32, i32
  }
  func.func @transform_3(%arg0: i32) -> (i32, i32) {
    %c0_i32 = arith.constant 0 : i32
    %c0_i32_0 = arith.constant 0 : i32
    %c0_i32_1 = arith.constant 0 : i32
    return %c0_i32, %c0_i32_0 : i32, i32
  }
  func.func @transform_4(%arg0: i32) -> (i32, i32) {
    %c0_i32 = arith.constant 0 : i32
    %c0_i32_0 = arith.constant 0 : i32
    %c0_i32_1 = arith.constant 0 : i32
    return %c0_i32, %c0_i32_0 : i32, i32
  }
  func.func @transform_5(%arg0: i32) -> (i32, i32) {
    %c0_i32 = arith.constant 0 : i32
    %c0_i32_0 = arith.constant 0 : i32
    %c0_i32_1 = arith.constant 0 : i32
    return %c0_i32, %c0_i32_0 : i32, i32
  }
  func.func @transform_6(%arg0: i32) -> (i32, i32) {
    %c0_i32 = arith.constant 0 : i32
    %c0_i32_0 = arith.constant 0 : i32
    %c0_i32_1 = arith.constant 0 : i32
    return %c0_i32, %c0_i32_0 : i32, i32
  }
  func.func @transform_7(%arg0: i32) -> (i32, i32) {
    %c0_i32 = arith.constant 0 : i32
    %c0_i32_0 = arith.constant 0 : i32
    return %arg0, %c0_i32 : i32, i32
  }
}

</mosaic_0001>

<llo_original>
// kernel: tpu_custom_call.1
$region0: #{tpu_custom_call.1}
  #allocation0 [shape = 'u32[]', space=smem, size = 0x4, offset = 0x4, fixed_abs, tag = 'smem constant byte address 0x4 - core index']
  #allocation1 [shape = 'u32[144,128]{1,0:T(1,128)}', space=vmem, size = 0x12000, scoped, tag = 'internal scratch']
  %s0 = inlined_call_operand.hbm [shape: bf16[48,160], index: 0, kind: input, shape index: {}]
  %s1 = inlined_call_operand.hbm [shape: bf16[160,512], index: 1, kind: input, shape index: {}]
  %s2 = inlined_call_operand.vmem [shape: f32[1,512], index: 2, kind: input, shape index: {}]
  %s3 = inlined_call_operand.hbm [shape: bf16[512,1024], index: 3, kind: input, shape index: {}]
  %s4 = inlined_call_operand.vmem [shape: f32[1,1024], index: 4, kind: input, shape index: {}]
  %s5 = inlined_call_operand.hbm [shape: bf16[1024,256], index: 5, kind: input, shape index: {}]
  %s6 = inlined_call_operand.vmem [shape: f32[1,256], index: 6, kind: input, shape index: {}]
  %s7 = inlined_call_operand.hbm [shape: f32[48,256], index: 7, kind: output, shape index: {}]
  %s8 = sld [smem:[#allocation0]]
  $region77: #{tpu_custom_call.1} parent=0
    _
  %s10 = ssub.s32 1, %s8
  %s11 = scalar_select 0, %s10, %s8
  $region1: #{tpu_custom_call.1} parent=0
    #allocation2 [shape = 'u8[24576]{0}', space=vmem, size = 0x6000, scoped, tag = 'input window, operand 0']
    #allocation3 [shape = 's32[2]{0}', space=sflag, size = 0x8, scoped, tag = 'scoped memory for tpu_custom_call.1']
    #allocation4 [shape = 's32[2]{0}', space=sflag, size = 0x8, scoped, tag = 'scoped memory for tpu_custom_call.1']
    #allocation5 [shape = 'u8[163840]{0}', space=vmem, size = 0x28000, scoped, tag = 'input window, operand 1, single buffered']
    #allocation6 [shape = 's32[1]{0}', space=sflag, size = 0x4, scoped, tag = 'scoped memory for tpu_custom_call.1']
    #allocation7 [shape = 'u8[1048576]{0}', space=vmem, size = 0x100000, scoped, tag = 'input window, operand 3, single buffered']
    #allocation8 [shape = 'u8[524288]{0}', space=vmem, size = 0x80000, scoped, tag = 'input window, operand 5, single buffered']
    #allocation9 [shape = 's32[1]{0}', space=sflag, size = 0x4, scoped, tag = 'scoped memory for tpu_custom_call.1']
    #allocation10 [shape = 'u8[49152]{0}', space=vmem, size = 0xc000, scoped, tag = 'output window, operand 0']
    %12 = vsyncpa [#allocation3], 0
    %s13 = scalar_lea.sflag [#allocation3], 1
    %14 = vsyncpa %s13, 0
    %15 = vsyncpa [#allocation6], 0
    %16 = vsyncpa [#allocation9], 0
    %17 = vsyncpa [#allocation4], 0
    %s18 = scalar_lea.sflag [#allocation4], 1
    %19 = vsyncpa %s18, 0
    loop: start=0, step=1, limit=4
    $region2: #{tpu_custom_call.1} parent=1 // loop_pre_header
      _
    $region3: #{tpu_custom_call.1} parent=1 // loop_header
      %s21 = sphi 0, %s25
      %p22 = scmp.ge.s32.totalorder %s21, 4
      %s31 = sphi 0, %s33
      %s34 = sphi 0, %s31
      %s35 = sphi 0, %s34
      %s51 = sphi 0, %s35
      %s55 = sphi 0, %s55
      %s57 = sphi 0, %s55
      %s58 = sphi 0, %s57
      %s72 = sphi 0, %s58
      %s76 = sphi 0, %s76
      %s78 = sphi 0, %s76
      %s79 = sphi 0, %s78
      %s93 = sphi 0, %s79
      %s97 = sphi 0, %s97
      %s99 = sphi 0, %s97
      %s100 = sphi 0, %s99
      %s114 = sphi 0, %s100
      %s118 = sphi 0, %s118
      %s120 = sphi 0, %s118
      %s121 = sphi 0, %s120
      %s135 = sphi 0, %s121
      %s139 = sphi 0, %s139
      %s141 = sphi 0, %s139
      %s142 = sphi 0, %s141
      %s156 = sphi 0, %s142
      %s160 = sphi 0, %s160
      %s162 = sphi 0, %s160
      %s163 = sphi 0, %s162
      %s177 = sphi 0, %s163
      %s183 = sphi 0, %s185
      %s186 = sphi 0, %s183
      %s187 = sphi 0, %s186
      %s203 = sphi 0, %s187
    $region4: #{tpu_custom_call.1} parent=1 // loop_header_branch
      %24 = sbr.rel (%p22) target = $region8
    $region5: #{tpu_custom_call.1} parent=1 // loop_body
      %s26 = ssub.s32 %s21, 1
      %s27 = ssub.s32 %s21, 2
      %s28 = sadd.s32 %s21, 1
      %s29 = ssub.s32 %s21, %s28
      %p30 = scmp.eq.s32.totalorder %s29, 0
      %s32 = sadd.s32 %s31, 1
      %s33 = scalar_select %p30, %s31, %s32
      %p36 = pneg %p30
      %p37 = scmp.eq.s32.totalorder %s21, 1
      %p38 = por %p36, %p37
      %p39 = scmp.ne.s32.totalorder %s31, %s34
      %p40 = scmp.eq.s32.totalorder %s21, 0
      %p41 = por %p39, %p40
      %p42 = scmp.ne.s32.totalorder %s31, %s34
      %p43 = scmp.eq.s32.totalorder %s26, 1
      %p44 = por %p42, %p43
      %p45 = scmp.ne.s32.totalorder %s34, %s35
      %p46 = scmp.eq.s32.totalorder %s26, 0
      %p47 = por %p45, %p46
      %p48 = scmp.ne.s32.totalorder %s34, %s35
      %p49 = scmp.eq.s32.totalorder %s27, 1
      %p50 = por %p48, %p49
      %p52 = scmp.ne.s32.totalorder %s35, %s51
      %p53 = scmp.eq.s32.totalorder %s27, 0
      %p54 = por %p52, %p53
      %s56 = sadd.s32 %s55, 1
      %p59 = scmp.eq.s32.totalorder %s21, 1
      %p60 = scmp.ne.s32.totalorder %s55, %s57
      %p61 = scmp.eq.s32.totalorder %s21, 0
      %p62 = por %p60, %p61
      %p63 = scmp.ne.s32.totalorder %s55, %s57
      %p64 = scmp.eq.s32.totalorder %s26, 1
      %p65 = por %p63, %p64
      %p66 = scmp.ne.s32.totalorder %s57, %s58
      %p67 = scmp.eq.s32.totalorder %s26, 0
      %p68 = por %p66, %p67
      %p69 = scmp.ne.s32.totalorder %s57, %s58
      %p70 = scmp.eq.s32.totalorder %s27, 1
      %p71 = por %p69, %p70
      %p73 = scmp.ne.s32.totalorder %s58, %s72
      %p74 = scmp.eq.s32.totalorder %s27, 0
      %p75 = por %p73, %p74
      %s77 = sadd.s32 %s76, 1
      %p80 = scmp.eq.s32.totalorder %s21, 1
      %p81 = scmp.ne.s32.totalorder %s76, %s78
      %p82 = scmp.eq.s32.totalorder %s21, 0
      %p83 = por %p81, %p82
      %p84 = scmp.ne.s32.totalorder %s76, %s78
      %p85 = scmp.eq.s32.totalorder %s26, 1
      %p86 = por %p84, %p85
      %p87 = scmp.ne.s32.totalorder %s78, %s79
      %p88 = scmp.eq.s32.totalorder %s26, 0
      %p89 = por %p87, %p88
      %p90 = scmp.ne.s32.totalorder %s78, %s79
      %p91 = scmp.eq.s32.totalorder %s27, 1
      %p92 = por %p90, %p91
      %p94 = scmp.ne.s32.totalorder %s79, %s93
      %p95 = scmp.eq.s32.totalorder %s27, 0
      %p96 = por %p94, %p95
      %s98 = sadd.s32 %s97, 1
      %p101 = scmp.eq.s32.totalorder %s21, 1
      %p102 = scmp.ne.s32.totalorder %s97, %s99
      %p103 = scmp.eq.s32.totalorder %s21, 0
      %p104 = por %p102, %p103
      %p105 = scmp.ne.s32.totalorder %s97, %s99
      %p106 = scmp.eq.s32.totalorder %s26, 1
      %p107 = por %p105, %p106
      %p108 = scmp.ne.s32.totalorder %s99, %s100
      %p109 = scmp.eq.s32.totalorder %s26, 0
      %p110 = por %p108, %p109
      %p111 = scmp.ne.s32.totalorder %s99, %s100
      %p112 = scmp.eq.s32.totalorder %s27, 1
      %p113 = por %p111, %p112
      %p115 = scmp.ne.s32.totalorder %s100, %s114
      %p116 = scmp.eq.s32.totalorder %s27, 0
      %p117 = por %p115, %p116
      %s119 = sadd.s32 %s118, 1
      %p122 = scmp.eq.s32.totalorder %s21, 1
      %p123 = scmp.ne.s32.totalorder %s118, %s120
      %p124 = scmp.eq.s32.totalorder %s21, 0
      %p125 = por %p123, %p124
      %p126 = scmp.ne.s32.totalorder %s118, %s120
      %p127 = scmp.eq.s32.totalorder %s26, 1
      %p128 = por %p126, %p127
      %p129 = scmp.ne.s32.totalorder %s120, %s121
      %p130 = scmp.eq.s32.totalorder %s26, 0
      %p131 = por %p129, %p130
      %p132 = scmp.ne.s32.totalorder %s120, %s121
      %p133 = scmp.eq.s32.totalorder %s27, 1
      %p134 = por %p132, %p133
      %p136 = scmp.ne.s32.totalorder %s121, %s135
      %p137 = scmp.eq.s32.totalorder %s27, 0
      %p138 = por %p136, %p137
      %s140 = sadd.s32 %s139, 1
      %p143 = scmp.eq.s32.totalorder %s21, 1
      %p144 = scmp.ne.s32.totalorder %s139, %s141
      %p145 = scmp.eq.s32.totalorder %s21, 0
      %p146 = por %p144, %p145
      %p147 = scmp.ne.s32.totalorder %s139, %s141
      %p148 = scmp.eq.s32.totalorder %s26, 1
      %p149 = por %p147, %p148
      %p150 = scmp.ne.s32.totalorder %s141, %s142
      %p151 = scmp.eq.s32.totalorder %s26, 0
      %p152 = por %p150, %p151
      %p153 = scmp.ne.s32.totalorder %s141, %s142
      %p154 = scmp.eq.s32.totalorder %s27, 1
      %p155 = por %p153, %p154
      %p157 = scmp.ne.s32.totalorder %s142, %s156
      %p158 = scmp.eq.s32.totalorder %s27, 0
      %p159 = por %p157, %p158
      %s161 = sadd.s32 %s160, 1
      %p164 = scmp.eq.s32.totalorder %s21, 1
      %p165 = scmp.ne.s32.totalorder %s160, %s162
      %p166 = scmp.eq.s32.totalorder %s21, 0
      %p167 = por %p165, %p166
      %p168 = scmp.ne.s32.totalorder %s160, %s162
      %p169 = scmp.eq.s32.totalorder %s26, 1
      %p170 = por %p168, %p169
      %p171 = scmp.ne.s32.totalorder %s162, %s163
      %p172 = scmp.eq.s32.totalorder %s26, 0
      %p173 = por %p171, %p172
      %p174 = scmp.ne.s32.totalorder %s162, %s163
      %p175 = scmp.eq.s32.totalorder %s27, 1
      %p176 = por %p174, %p175
      %p178 = scmp.ne.s32.totalorder %s163, %s177
      %p179 = scmp.eq.s32.totalorder %s27, 0
      %p180 = por %p178, %p179
      %s181 = ssub.s32 %s21, %s28
      %p182 = scmp.eq.s32.totalorder %s181, 0
      %s184 = sadd.s32 %s183, 1
      %s185 = scalar_select %p182, %s183, %s184
      %p188 = pneg %p182
      %p189 = scmp.eq.s32.totalorder %s21, 1
      %p190 = por %p188, %p189
      %p191 = scmp.ne.s32.totalorder %s183, %s186
      %p192 = scmp.eq.s32.totalorder %s21, 0
      %p193 = por %p191, %p192
      %p194 = scmp.ne.s32.totalorder %s183, %s186
      %p195 = scmp.eq.s32.totalorder %s26, 1
      %p196 = por %p194, %p195
      %p197 = scmp.ne.s32.totalorder %s186, %s187
      %p198 = scmp.eq.s32.totalorder %s26, 0
      %p199 = por %p197, %p198
      %p200 = scmp.ne.s32.totalorder %s186, %s187
      %p201 = scmp.eq.s32.totalorder %s27, 1
      %p202 = por %p200, %p201
      %p204 = scmp.ne.s32.totalorder %s187, %s203
      %p205 = scmp.eq.s32.totalorder %s27, 0
      %p206 = por %p204, %p205
      %p207 = scmp.le.s32.totalorder 1, %s21
      %p208 = scmp.lt.s32.totalorder %s21, 3
      %p209 = pnand %p207, %p208
      %p210 = pneg %p209
      // Predicated region
      $region9: #{tpu_custom_call.1} parent=5 // pred_check
        _
      $region10: #{tpu_custom_call.1} parent=5 // pred_check_branch
        %212 = sbr.rel (%p209) target = $region12
      $region11: #{tpu_custom_call.1} parent=5 // pred_region
        %s213 = ssub.s32 %s21, 1
        // Predicated region
        $region13: #{tpu_custom_call.1} parent=11 // pred_check
          %p214 = pneg %p68
        $region14: #{tpu_custom_call.1} parent=11 // pred_check_branch
          %216 = sbr.rel (%p214) target = $region16
        $region15: #{tpu_custom_call.1} parent=11 // pred_region
          %s218 = ssub.s32 5120, 5120
          %219 = vsyncadd [#allocation6], %s218
          %s220 = sshll.u32 [#allocation5], 4
          %s221 = int_to_ptr.vmem [resolvable:$true] %s220
          %226 = dma.hbm_to_vmem [thread:$0]  %s1, 5120, %s221, [#allocation6], 256, 256, 16
        $region16: #{tpu_custom_call.1} parent=11 // pred_fallthru
          _
        // Predicated region
        $region17: #{tpu_custom_call.1} parent=11 // pred_check
          %p227 = pneg %p89
        $region18: #{tpu_custom_call.1} parent=11 // pred_check_branch
          %229 = sbr.rel (%p227) target = $region20
        $region19: #{tpu_custom_call.1} parent=11 // pred_region
          _
        $region20: #{tpu_custom_call.1} parent=11 // pred_fallthru
          _
        // Predicated region
        $region21: #{tpu_custom_call.1} parent=11 // pred_check
          %p230 = pneg %p110
        $region22: #{tpu_custom_call.1} parent=11 // pred_check_branch
          %232 = sbr.rel (%p230) target = $region24
        $region23: #{tpu_custom_call.1} parent=11 // pred_region
          %s234 = ssub.s32 32768, 32768
          %235 = vsyncadd [#allocation6], %s234
          %s236 = sshll.u32 [#allocation7], 4
          %s237 = int_to_ptr.vmem [resolvable:$true] %s236
          %242 = dma.hbm_to_vmem [thread:$0]  %s3, 32768, %s237, [#allocation6], 512, 512, 32
        $region24: #{tpu_custom_call.1} parent=11 // pred_fallthru
          _
        // Predicated region
        $region25: #{tpu_custom_call.1} parent=11 // pred_check
          %p243 = pneg %p131
        $region26: #{tpu_custom_call.1} parent=11 // pred_check_branch
          %245 = sbr.rel (%p243) target = $region28
        $region27: #{tpu_custom_call.1} parent=11 // pred_region
          _
        $region28: #{tpu_custom_call.1} parent=11 // pred_fallthru
          _
        // Predicated region
        $region29: #{tpu_custom_call.1} parent=11 // pred_check
          %p246 = pneg %p152
        $region30: #{tpu_custom_call.1} parent=11 // pred_check_branch
          %248 = sbr.rel (%p246) target = $region32
        $region31: #{tpu_custom_call.1} parent=11 // pred_region
          %s250 = ssub.s32 16384, 16384
          %251 = vsyncadd [#allocation9], %s250
          %s252 = sshll.u32 [#allocation8], 4
          %s253 = int_to_ptr.vmem [resolvable:$true] %s252
          %258 = dma.hbm_to_vmem [thread:$0]  %s5, 16384, %s253, [#allocation9], 128, 128, 8
        $region32: #{tpu_custom_call.1} parent=11 // pred_fallthru
          _
        // Predicated region
        $region33: #{tpu_custom_call.1} parent=11 // pred_check
          %p259 = pneg %p173
        $region34: #{tpu_custom_call.1} parent=11 // pred_check_branch
          %261 = sbr.rel (%p259) target = $region36
        $region35: #{tpu_custom_call.1} parent=11 // pred_region
          _
        $region36: #{tpu_custom_call.1} parent=11 // pred_fallthru
          _
      $region12: #{tpu_custom_call.1} parent=5 // pred_fallthru
        _
      %p262 = scmp.lt.s32.totalorder %s21, 2
      // Predicated region
      $region37: #{tpu_custom_call.1} parent=5 // pred_check
        %p263 = pneg %p262
      $region38: #{tpu_custom_call.1} parent=5 // pred_check_branch
        %265 = sbr.rel (%p263) target = $region40
      $region39: #{tpu_custom_call.1} parent=5 // pred_region
        // Predicated region
        $region41: #{tpu_custom_call.1} parent=39 // pred_check
          %p266 = pneg %p41
        $region42: #{tpu_custom_call.1} parent=39 // pred_check_branch
          %268 = sbr.rel (%p266) target = $region44
        $region43: #{tpu_custom_call.1} parent=39 // pred_region
          %s269 = sand.u32 %s31, 1
          %s270 = scalar_lea.sflag [#allocation3], %s269
          %s271 = sand.u32 %s31, 1
          %s272 = smul.addr %s271, 24
          %s273 = scalar_lea.vmem [#allocation2], %s272
          %s274 = smul.u32 3, %s21
          %s276 = ssub.s32 384, 384
          %277 = vsyncadd %s270, %s276
          %s278 = smul.addr %s274, 2
          %s279 = smul.addr %s278, 64
          %s280 = scalar_lea.hbm %s0, %s279
          %s281 = sshll.u32 %s273, 4
          %s282 = int_to_ptr.vmem [resolvable:$true] %s281
          %287 = dma.hbm_to_vmem [thread:$0]  %s280, 384, %s282, %s270, 128, 128, 8
        $region44: #{tpu_custom_call.1} parent=39 // pred_fallthru
          _
      $region40: #{tpu_custom_call.1} parent=5 // pred_fallthru
        _
      %p288 = scmp.le.s32.totalorder 1, %s21
      %p289 = scmp.lt.s32.totalorder %s21, 3
      %p290 = pnand %p288, %p289
      %p291 = pneg %p290
      // Predicated region
      $region45: #{tpu_custom_call.1} parent=5 // pred_check
        _
      $region46: #{tpu_custom_call.1} parent=5 // pred_check_branch
        %293 = sbr.rel (%p290) target = $region48
      $region47: #{tpu_custom_call.1} parent=5 // pred_region
        %s294 = ssub.s32 %s21, 1
        %s295 = sand.u32 %s34, 1
        %s296 = scalar_lea.sflag [#allocation3], %s295
        %s297 = sand.u32 %s34, 1
        %s298 = smul.addr %s297, 24
        %s299 = scalar_lea.vmem [#allocation2], %s298
        // Predicated region
        $region49: #{tpu_custom_call.1} parent=47 // pred_check
          %p300 = pneg %p47
        $region50: #{tpu_custom_call.1} parent=47 // pred_check_branch
          %302 = sbr.rel (%p300) target = $region52
        $region51: #{tpu_custom_call.1} parent=47 // pred_region
          %303 = dma.done %s296, 384
        $region52: #{tpu_custom_call.1} parent=47 // pred_fallthru
          _
        // Predicated region
        $region53: #{tpu_custom_call.1} parent=47 // pred_check
          %p304 = pneg %p68
        $region54: #{tpu_custom_call.1} parent=47 // pred_check_branch
          %306 = sbr.rel (%p304) target = $region56
        $region55: #{tpu_custom_call.1} parent=47 // pred_region
          %307 = dma.done [#allocation6], 5120
        $region56: #{tpu_custom_call.1} parent=47 // pred_fallthru
          _
        // Predicated region
        $region57: #{tpu_custom_call.1} parent=47 // pred_check
          %p308 = pneg %p110
        $region58: #{tpu_custom_call.1} parent=47 // pred_check_branch
          %310 = sbr.rel (%p308) target = $region60
        $region59: #{tpu_custom_call.1} parent=47 // pred_region
          %311 = dma.done [#allocation6], 32768
        $region60: #{tpu_custom_call.1} parent=47 // pred_fallthru
          _
        // Predicated region
        $region61: #{tpu_custom_call.1} parent=47 // pred_check
          %p312 = pneg %p152
        $region62: #{tpu_custom_call.1} parent=47 // pred_check_branch
          %314 = sbr.rel (%p312) target = $region64
        $region63: #{tpu_custom_call.1} parent=47 // pred_region
          %315 = dma.done [#allocation9], 16384
        $region64: #{tpu_custom_call.1} parent=47 // pred_fallthru
          _
        %s316 = sand.u32 %s34, 1
        %s317 = scalar_lea.sflag [#allocation3], %s316
        %s318 = sand.u32 %s34, 1
        %s319 = smul.addr %s318, 24
        %s320 = scalar_lea.vmem [#allocation2], %s319
        %p321 = pneg %p47
        %p322 = pneg %p44
        %p323 = pneg %p68
        %p324 = pneg %p65
        %p325 = pneg %p89
        %p326 = pneg %p86
        %p327 = pneg %p110
        %p328 = pneg %p107
        %p329 = pneg %p131
        %p330 = pneg %p128
        %p331 = pneg %p152
        %p332 = pneg %p149
        %p333 = pneg %p173
        %p334 = pneg %p170
        %p335 = pneg %p199
        %p336 = pneg %p196
        %s337 = sand.u32 %s186, 1
        %s338 = scalar_lea.sflag [#allocation4], %s337
        %s339 = sand.u32 %s186, 1
        %s340 = smul.addr %s339, 48
        %s341 = scalar_lea.vmem [#allocation10], %s340
        %s342 = smul.u32 3, %s26
        %s343 = smul.u32 3, %s26
        %v345 = vld [vmem:[%s299] sm:$0xff]
        %v346 = vld [vmem:[%s299 + $0x8] sm:$0xff]
        %v347 = vld [vmem:[%s299 + $0x10] sm:$0xff]
        %v348 = vld [vmem:[#allocation5] sm:$0xff]
        %v349 = vld [vmem:[#allocation5 + $0x8] sm:$0xff]
        %v350 = vld [vmem:[#allocation5 + $0x10] sm:$0xff]
        %v351 = vld [vmem:[#allocation5 + $0x18] sm:$0xff]
        %v352 = vld [vmem:[#allocation5 + $0x20] sm:$0xff]
        %v353 = vld [vmem:[#allocation5 + $0x28] sm:$0xff]
        %v354 = vld [vmem:[#allocation5 + $0x30] sm:$0xff]
        %v355 = vld [vmem:[#allocation5 + $0x38] sm:$0xff]
        %v356 = vld [vmem:[#allocation5 + $0x40] sm:$0xff]
        %v357 = vld [vmem:[#allocation5 + $0x48] sm:$0xff]
        %v358 = vld [vmem:[#allocation5 + $0x50] sm:$0xff]
        %v359 = vld [vmem:[#allocation5 + $0x58] sm:$0xff]
        %v360 = vld [vmem:[#allocation5 + $0x60] sm:$0xff]
        %v361 = vld [vmem:[#allocation5 + $0x68] sm:$0xff]
        %v362 = vld [vmem:[#allocation5 + $0x70] sm:$0xff]
        %v363 = vld [vmem:[#allocation5 + $0x78] sm:$0xff]
        %v364 = vld [vmem:[#allocation5 + $0x80] sm:$0xff]
        %v365 = vld [vmem:[#allocation5 + $0x88] sm:$0xff]
        %v366 = vld [vmem:[#allocation5 + $0x90] sm:$0xff]
        %v367 = vld [vmem:[#allocation5 + $0x98] sm:$0xff]
        %v368 = vld [vmem:[#allocation5 + $0xa0] sm:$0xff]
        %v369 = vld [vmem:[#allocation5 + $0xa8] sm:$0xff]
        %v370 = vld [vmem:[#allocation5 + $0xb0] sm:$0xff]
        %v371 = vld [vmem:[#allocation5 + $0xb8] sm:$0xff]
        %v372 = vld [vmem:[#allocation5 + $0xc0] sm:$0xff]
        %v373 = vld [vmem:[#allocation5 + $0xc8] sm:$0xff]
        %v374 = vld [vmem:[#allocation5 + $0xd0] sm:$0xff]
        %v375 = vld [vmem:[#allocation5 + $0xd8] sm:$0xff]
        %v376 = vld [vmem:[#allocation5 + $0xe0] sm:$0xff]
        %v377 = vld [vmem:[#allocation5 + $0xe8] sm:$0xff]
        %v378 = vld [vmem:[#allocation5 + $0xf0] sm:$0xff]
        %v379 = vld [vmem:[#allocation5 + $0xf8] sm:$0xff]
        %v380 = vld [vmem:[#allocation5 + $0x100] sm:$0xff]
        %v381 = vld [vmem:[#allocation5 + $0x108] sm:$0xff]
        %v382 = vld [vmem:[#allocation5 + $0x110] sm:$0xff]
        %v383 = vld [vmem:[#allocation5 + $0x118] sm:$0xff]
        %v384 = vld [vmem:[#allocation5 + $0x120] sm:$0xff]
        %v385 = vld [vmem:[#allocation5 + $0x128] sm:$0xff]
        %v386 = vld [vmem:[#allocation5 + $0x130] sm:$0xff]
        %v387 = vld [vmem:[#allocation5 + $0x138] sm:$0xff]
        %v388 = vld [vmem:[%s2] sm:$0xf]
        %v390 = vlaneseq
        %v391 = vshrl.u32 %v390, 7
        %v392 = vsub.s32 0, %v391
        %v393 = vrot.slane %v388, %v392
        %v394 = vlaneseq
        %v395 = vshrl.u32 %v394, 7
        %v396 = vsub.s32 1, %v395
        %v397 = vrot.slane %v388, %v396
        %v398 = vlaneseq
        %v399 = vshrl.u32 %v398, 7
        %v400 = vsub.s32 2, %v399
        %v401 = vrot.slane %v388, %v400
        %v402 = vlaneseq
        %v403 = vshrl.u32 %v402, 7
        %v404 = vsub.s32 3, %v403
        %v405 = vrot.slane %v388, %v404
        %v413 = vunpack.c.l.b16 %v345
        %v414 = vunpack.c.h.b16 %v345
        %v415 = vunpack.c.l.b16 %v346
        %v416 = vunpack.c.h.b16 %v346
        %v417 = vunpack.c.l.b16 %v347
        %v418 = vunpack.c.h.b16 %v347
        %v419 = vpack.c.b16 %v415, %v413
        %v420 = vpack.c.b16 %v416, %v414
        %v421 = vpack.c.b16 %v417, %v417
        %v422 = vpack.c.b16 %v418, %v418
        %v465 = vunpack.c.l.b16 %v348
        %v466 = vunpack.c.h.b16 %v348
        %v467 = vunpack.c.l.b16 %v349
        %v468 = vunpack.c.h.b16 %v349
        %v469 = vunpack.c.l.b16 %v350
        %v470 = vunpack.c.h.b16 %v350
        %v471 = vunpack.c.l.b16 %v351
        %v472 = vunpack.c.h.b16 %v351
        %v473 = vunpack.c.l.b16 %v352
        %v474 = vunpack.c.h.b16 %v352
        %v475 = vunpack.c.l.b16 %v353
        %v476 = vunpack.c.h.b16 %v353
        %v477 = vunpack.c.l.b16 %v354
        %v478 = vunpack.c.h.b16 %v354
        %v479 = vunpack.c.l.b16 %v355
        %v480 = vunpack.c.h.b16 %v355
        %v481 = vunpack.c.l.b16 %v356
        %v482 = vunpack.c.h.b16 %v356
        %v483 = vunpack.c.l.b16 %v357
        %v484 = vunpack.c.h.b16 %v357
        %v485 = vunpack.c.l.b16 %v358
        %v486 = vunpack.c.h.b16 %v358
        %v487 = vunpack.c.l.b16 %v359
        %v488 = vunpack.c.h.b16 %v359
        %v489 = vunpack.c.l.b16 %v360
        %v490 = vunpack.c.h.b16 %v360
        %v491 = vunpack.c.l.b16 %v361
        %v492 = vunpack.c.h.b16 %v361
        %v493 = vunpack.c.l.b16 %v362
        %v494 = vunpack.c.h.b16 %v362
        %v495 = vunpack.c.l.b16 %v363
        %v496 = vunpack.c.h.b16 %v363
        %v497 = vunpack.c.l.b16 %v364
        %v498 = vunpack.c.h.b16 %v364
        %v499 = vunpack.c.l.b16 %v365
        %v500 = vunpack.c.h.b16 %v365
        %v501 = vunpack.c.l.b16 %v366
        %v502 = vunpack.c.h.b16 %v366
        %v503 = vunpack.c.l.b16 %v367
        %v504 = vunpack.c.h.b16 %v367
        %v505 = vunpack.c.l.b16 %v368
        %v506 = vunpack.c.h.b16 %v368
        %v507 = vunpack.c.l.b16 %v369
        %v508 = vunpack.c.h.b16 %v369
        %v509 = vunpack.c.l.b16 %v370
        %v510 = vunpack.c.h.b16 %v370
        %v511 = vunpack.c.l.b16 %v371
        %v512 = vunpack.c.h.b16 %v371
        %v513 = vunpack.c.l.b16 %v372
        %v514 = vunpack.c.h.b16 %v372
        %v515 = vunpack.c.l.b16 %v373
        %v516 = vunpack.c.h.b16 %v373
        %v517 = vunpack.c.l.b16 %v374
        %v518 = vunpack.c.h.b16 %v374
        %v519 = vunpack.c.l.b16 %v375
        %v520 = vunpack.c.h.b16 %v375
        %v521 = vunpack.c.l.b16 %v376
        %v522 = vunpack.c.h.b16 %v376
        %v523 = vunpack.c.l.b16 %v377
        %v524 = vunpack.c.h.b16 %v377
        %v525 = vunpack.c.l.b16 %v378
        %v526 = vunpack.c.h.b16 %v378
        %v527 = vunpack.c.l.b16 %v379
        %v528 = vunpack.c.h.b16 %v379
        %v529 = vunpack.c.l.b16 %v380
        %v530 = vunpack.c.h.b16 %v380
        %v531 = vunpack.c.l.b16 %v381
        %v532 = vunpack.c.h.b16 %v381
        %v533 = vunpack.c.l.b16 %v382
        %v534 = vunpack.c.h.b16 %v382
        %v535 = vunpack.c.l.b16 %v383
        %v536 = vunpack.c.h.b16 %v383
        %v537 = vunpack.c.l.b16 %v384
        %v538 = vunpack.c.h.b16 %v384
        %v539 = vunpack.c.l.b16 %v385
        %v540 = vunpack.c.h.b16 %v385
        %v541 = vunpack.c.l.b16 %v386
        %v542 = vunpack.c.h.b16 %v386
        %v543 = vunpack.c.l.b16 %v387
        %v544 = vunpack.c.h.b16 %v387
        %v545 = vpack.c.b16 %v469, %v465
        %v546 = vpack.c.b16 %v470, %v466
        %v547 = vpack.c.b16 %v471, %v467
        %v548 = vpack.c.b16 %v472, %v468
        %v549 = vpack.c.b16 %v477, %v473
        %v550 = vpack.c.b16 %v478, %v474
        %v551 = vpack.c.b16 %v479, %v475
        %v552 = vpack.c.b16 %v480, %v476
        %v553 = vpack.c.b16 %v485, %v481
        %v554 = vpack.c.b16 %v486, %v482
        %v555 = vpack.c.b16 %v487, %v483
        %v556 = vpack.c.b16 %v488, %v484
        %v557 = vpack.c.b16 %v493, %v489
        %v558 = vpack.c.b16 %v494, %v490
        %v559 = vpack.c.b16 %v495, %v491
        %v560 = vpack.c.b16 %v496, %v492
        %v561 = vpack.c.b16 %v501, %v497
        %v562 = vpack.c.b16 %v502, %v498
        %v563 = vpack.c.b16 %v503, %v499
        %v564 = vpack.c.b16 %v504, %v500
        %v565 = vpack.c.b16 %v509, %v505
        %v566 = vpack.c.b16 %v510, %v506
        %v567 = vpack.c.b16 %v511, %v507
        %v568 = vpack.c.b16 %v512, %v508
        %v569 = vpack.c.b16 %v517, %v513
        %v570 = vpack.c.b16 %v518, %v514
        %v571 = vpack.c.b16 %v519, %v515
        %v572 = vpack.c.b16 %v520, %v516
        %v573 = vpack.c.b16 %v525, %v521
        %v574 = vpack.c.b16 %v526, %v522
        %v575 = vpack.c.b16 %v527, %v523
        %v576 = vpack.c.b16 %v528, %v524
        %v577 = vpack.c.b16 %v533, %v529
        %v578 = vpack.c.b16 %v534, %v530
        %v579 = vpack.c.b16 %v535, %v531
        %v580 = vpack.c.b16 %v536, %v532
        %v581 = vpack.c.b16 %v541, %v537
        %v582 = vpack.c.b16 %v542, %v538
        %v583 = vpack.c.b16 %v543, %v539
        %v584 = vpack.c.b16 %v544, %v540
        %vm625 = vcmask 261120
        %v627 = vsel %vm625, %v420, 0
        %v630 = vsel %vm625, %v422, 0
        %632 = vmatprep.subr.bf16.mxu0 %v546
        %633 = vmatpush1.bf16.msra.mxu0 %v545
        %634 = vmatprep.subr.bf16.mxu0 %v550
        %635 = vmatpush1.bf16.msra.mxu0 %v549
        %636 = vmatprep.subr.bf16.mxu0 %v554
        %637 = vmatpush1.bf16.msra.mxu0 %v553
        %638 = vmatprep.subr.bf16.mxu0 %v558
        %639 = vmatpush1.bf16.msra.mxu0 %v557
        %640 = vmatprep.subr.bf16.mxu0 %v562
        %641 = vmatpush1.bf16.msra.mxu0 %v561
        %642 = vmatprep.subr.bf16.mxu0 %v566
        %643 = vmatpush1.bf16.msra.mxu0 %v565
        %644 = vmatprep.subr.bf16.mxu0 %v570
        %645 = vmatpush1.bf16.msra.mxu0 %v569
        %646 = vmatprep.subr.bf16.mxu0 %v574
        %647 = vmatpush1.bf16.msra.mxu0 %v573
        %648 = vmatprep.subr.bf16.mxu0 %v578
        %649 = vmatpush1.bf16.msra.mxu0 %v577
        %650 = vmatprep.subr.bf16.mxu0 %v582
        %651 = vmatpush1.bf16.msra.mxu0 %v581
        %652 = vmatprep.subr.bf16.mxu0 0
        %653 = vmatpush1.bf16.msra.mxu0 0
        %654 = vmatprep.subr.bf16.mxu0 0
        %655 = vmatpush1.bf16.msra.mxu0 0
        %656 = vmatprep.subr.bf16.mxu0 0
        %657 = vmatpush1.bf16.msra.mxu0 0
        %658 = vmatprep.subr.bf16.mxu0 0
        %659 = vmatpush1.bf16.msra.mxu0 0
        %660 = vmatprep.subr.bf16.mxu0 0
        %661 = vmatpush1.bf16.msra.mxu0 0
        %662 = vmatprep.subr.bf16.mxu0 0
        %663 = vmatpush1.bf16.msra.mxu0 0
        %664 = vmatprep.mubr.bf16.mxu0 %v627
        %665 = vmatmul.mubr.bf16.gmra.mrb[0].mxu0 %v419
        %v666 = vpop.f32.mrb[0].mxu0
        %v667 = vadd.f32 %v393, %v666
        %v668 = vpop.f32.mrb[0].mxu0
        %v669 = vadd.f32 %v397, %v668
        %v670 = vpop.f32.mrb[0].mxu0
        %v671 = vadd.f32 %v393, %v670
        %v672 = vpop.f32.mrb[0].mxu0
        %v673 = vadd.f32 %v397, %v672
        %674 = vmatprep.mubr.bf16.mxu0 %v630
        %675 = vmatmul.mubr.bf16.gmra.mrb[0].mxu0 %v421
        %v676 = vpop.f32.mrb[0].mxu0
        %v677 = vadd.f32 %v393, %v676
        %v678 = vpop.f32.mrb[0].mxu0
        %v679 = vadd.f32 %v397, %v678
        %v680 = vpop.f32.mrb[0].mxu0
        %v681 = vpop.f32.mrb[0].mxu0
        %682 = vdwg.mxu0
        %683 = vmatprep.subr.bf16.mxu0 %v548
        %684 = vmatpush1.bf16.msra.mxu0 %v547
        %685 = vmatprep.subr.bf16.mxu0 %v552
        %686 = vmatpush1.bf16.msra.mxu0 %v551
        %687 = vmatprep.subr.bf16.mxu0 %v556
        %688 = vmatpush1.bf16.msra.mxu0 %v555
        %689 = vmatprep.subr.bf16.mxu0 %v560
        %690 = vmatpush1.bf16.msra.mxu0 %v559
        %691 = vmatprep.subr.bf16.mxu0 %v564
        %692 = vmatpush1.bf16.msra.mxu0 %v563
        %693 = vmatprep.subr.bf16.mxu0 %v568
        %694 = vmatpush1.bf16.msra.mxu0 %v567
        %695 = vmatprep.subr.bf16.mxu0 %v572
        %696 = vmatpush1.bf16.msra.mxu0 %v571
        %697 = vmatprep.subr.bf16.mxu0 %v576
        %698 = vmatpush1.bf16.msra.mxu0 %v575
        %699 = vmatprep.subr.bf16.mxu0 %v580
        %700 = vmatpush1.bf16.msra.mxu0 %v579
        %701 = vmatprep.subr.bf16.mxu0 %v584
        %702 = vmatpush1.bf16.msra.mxu0 %v583
        %703 = vmatprep.subr.bf16.mxu0 0
        %704 = vmatpush1.bf16.msra.mxu0 0
        %705 = vmatprep.subr.bf16.mxu0 0
        %706 = vmatpush1.bf16.msra.mxu0 0
        %707 = vmatprep.subr.bf16.mxu0 0
        %708 = vmatpush1.bf16.msra.mxu0 0
        %709 = vmatprep.subr.bf16.mxu0 0
        %710 = vmatpush1.bf16.msra.mxu0 0
        %711 = vmatprep.subr.bf16.mxu0 0
        %712 = vmatpush1.bf16.msra.mxu0 0
        %713 = vmatprep.subr.bf16.mxu0 0
        %714 = vmatpush1.bf16.msra.mxu0 0
        %715 = vmatprep.mubr.bf16.mxu0 %v627
        %716 = vmatmul.mubr.bf16.gmra.mrb[0].mxu0 %v419
        %v717 = vpop.f32.mrb[0].mxu0
        %v718 = vadd.f32 %v401, %v717
        %v719 = vpop.f32.mrb[0].mxu0
        %v720 = vadd.f32 %v405, %v719
        %v721 = vpop.f32.mrb[0].mxu0
        %v722 = vadd.f32 %v401, %v721
        %v723 = vpop.f32.mrb[0].mxu0
        %v724 = vadd.f32 %v405, %v723
        %725 = vmatprep.mubr.bf16.mxu0 %v630
        %726 = vmatmul.mubr.bf16.gmra.mrb[0].mxu0 %v421
        %v727 = vpop.f32.mrb[0].mxu0
        %v728 = vadd.f32 %v401, %v727
        %v729 = vpop.f32.mrb[0].mxu0
        %v730 = vadd.f32 %v405, %v729
        %v731 = vpop.f32.mrb[0].mxu0
        %v732 = vpop.f32.mrb[0].mxu0
        %733 = vdwg.mxu0
        %v734 = vmax.f32 %v667, 0.0
        %v735 = vmax.f32 %v669, 0.0
        %v736 = vmax.f32 %v718, 0.0
        %v737 = vmax.f32 %v720, 0.0
        %v738 = vmax.f32 %v671, 0.0
        %v739 = vmax.f32 %v673, 0.0
        %v740 = vmax.f32 %v722, 0.0
        %v741 = vmax.f32 %v724, 0.0
        %v742 = vmax.f32 %v677, 0.0
        %v743 = vmax.f32 %v679, 0.0
        %v744 = vmax.f32 %v728, 0.0
        %v745 = vmax.f32 %v730, 0.0
        %v746 = vpack.c.bf16 %v738, %v734
        %v747 = vpack.c.bf16 %v739, %v735
        %v748 = vpack.c.bf16 %v740, %v736
        %v749 = vpack.c.bf16 %v741, %v737
        %v750 = vpack.c.bf16 %v742, %v742
        %v751 = vpack.c.bf16 %v743, %v743
        %v752 = vpack.c.bf16 %v744, %v744
        %v753 = vpack.c.bf16 %v745, %v745
        %v754 = vld [vmem:[#allocation7] sm:$0xff]
        %v755 = vld [vmem:[#allocation7 + $0x8] sm:$0xff]
        %v756 = vld [vmem:[#allocation7 + $0x10] sm:$0xff]
        %v757 = vld [vmem:[#allocation7 + $0x18] sm:$0xff]
        %v758 = vld [vmem:[#allocation7 + $0x20] sm:$0xff]
        %v759 = vld [vmem:[#allocation7 + $0x28] sm:$0xff]
        %v760 = vld [vmem:[#allocation7 + $0x30] sm:$0xff]
        %v761 = vld [vmem:[#allocation7 + $0x38] sm:$0xff]
        %v762 = vld [vmem:[#allocation7 + $0x40] sm:$0xff]
        %v763 = vld [vmem:[#allocation7 + $0x48] sm:$0xff]
        %v764 = vld [vmem:[#allocation7 + $0x50] sm:$0xff]
        %v765 = vld [vmem:[#allocation7 + $0x58] sm:$0xff]
        %v766 = vld [vmem:[#allocation7 + $0x60] sm:$0xff]
        %v767 = vld [vmem:[#allocation7 + $0x68] sm:$0xff]
        %v768 = vld [vmem:[#allocation7 + $0x70] sm:$0xff]
        %v769 = vld [vmem:[#allocation7 + $0x78] sm:$0xff]
        %v770 = vld [vmem:[#allocation7 + $0x80] sm:$0xff]
        %v771 = vld [vmem:[#allocation7 + $0x88] sm:$0xff]
        %v772 = vld [vmem:[#allocation7 + $0x90] sm:$0xff]
        %v773 = vld [vmem:[#allocation7 + $0x98] sm:$0xff]
        %v774 = vld [vmem:[#allocation7 + $0xa0] sm:$0xff]
        %v775 = vld [vmem:[#allocation7 + $0xa8] sm:$0xff]
        %v776 = vld [vmem:[#allocation7 + $0xb0] sm:$0xff]
        %v777 = vld [vmem:[#allocation7 + $0xb8] sm:$0xff]
        %v778 = vld [vmem:[#allocation7 + $0xc0] sm:$0xff]
        %v779 = vld [vmem:[#allocation7 + $0xc8] sm:$0xff]
        %v780 = vld [vmem:[#allocation7 + $0xd0] sm:$0xff]
        %v781 = vld [vmem:[#allocation7 + $0xd8] sm:$0xff]
        %v782 = vld [vmem:[#allocation7 + $0xe0] sm:$0xff]
        %v783 = vld [vmem:[#allocation7 + $0xe8] sm:$0xff]
        %v784 = vld [vmem:[#allocation7 + $0xf0] sm:$0xff]
        %v785 = vld [vmem:[#allocation7 + $0xf8] sm:$0xff]
        %v786 = vld [vmem:[#allocation7 + $0x100] sm:$0xff]
        %v787 = vld [vmem:[#allocation7 + $0x108] sm:$0xff]
        %v788 = vld [vmem:[#allocation7 + $0x110] sm:$0xff]
        %v789 = vld [vmem:[#allocation7 + $0x118] sm:$0xff]
        %v790 = vld [vmem:[#allocation7 + $0x120] sm:$0xff]
        %v791 = vld [vmem:[#allocation7 + $0x128] sm:$0xff]
        %v792 = vld [vmem:[#allocation7 + $0x130] sm:$0xff]
        %v793 = vld [vmem:[#allocation7 + $0x138] sm:$0xff]
        %v794 = vld [vmem:[#allocation7 + $0x140] sm:$0xff]
        %v795 = vld [vmem:[#allocation7 + $0x148] sm:$0xff]
        %v796 = vld [vmem:[#allocation7 + $0x150] sm:$0xff]
        %v797 = vld [vmem:[#allocation7 + $0x158] sm:$0xff]
        %v798 = vld [vmem:[#allocation7 + $0x160] sm:$0xff]
        %v799 = vld [vmem:[#allocation7 + $0x168] sm:$0xff]
        %v800 = vld [vmem:[#allocation7 + $0x170] sm:$0xff]
        %v801 = vld [vmem:[#allocation7 + $0x178] sm:$0xff]
        %v802 = vld [vmem:[#allocation7 + $0x180] sm:$0xff]
        %v803 = vld [vmem:[#allocation7 + $0x188] sm:$0xff]
        %v804 = vld [vmem:[#allocation7 + $0x190] sm:$0xff]
        %v805 = vld [vmem:[#allocation7 + $0x198] sm:$0xff]
        %v806 = vld [vmem:[#allocation7 + $0x1a0] sm:$0xff]
        %v807 = vld [vmem:[#allocation7 + $0x1a8] sm:$0xff]
        %v808 = vld [vmem:[#allocation7 + $0x1b0] sm:$0xff]
        %v809 = vld [vmem:[#allocation7 + $0x1b8] sm:$0xff]
        %v810 = vld [vmem:[#allocation7 + $0x1c0] sm:$0xff]
        %v811 = vld [vmem:[#allocation7 + $0x1c8] sm:$0xff]
        %v812 = vld [vmem:[#allocation7 + $0x1d0] sm:$0xff]
        %v813 = vld [vmem:[#allocation7 + $0x1d8] sm:$0xff]
        %v814 = vld [vmem:[#allocation7 + $0x1e0] sm:$0xff]
        %v815 = vld [vmem:[#allocation7 + $0x1e8] sm:$0xff]
        %v816 = vld [vmem:[#allocation7 + $0x1f0] sm:$0xff]
        %v817 = vld [vmem:[#allocation7 + $0x1f8] sm:$0xff]
        %v818 = vld [vmem:[#allocation7 + $0x200] sm:$0xff]
        %v819 = vld [vmem:[#allocation7 + $0x208] sm:$0xff]
        %v820 = vld [vmem:[#allocation7 + $0x210] sm:$0xff]
        %v821 = vld [vmem:[#allocation7 + $0x218] sm:$0xff]
        %v822 = vld [vmem:[#allocation7 + $0x220] sm:$0xff]
        %v823 = vld [vmem:[#allocation7 + $0x228] sm:$0xff]
        %v824 = vld [vmem:[#allocation7 + $0x230] sm:$0xff]
        %v825 = vld [vmem:[#allocation7 + $0x238] sm:$0xff]
        %v826 = vld [vmem:[#allocation7 + $0x240] sm:$0xff]
        %v827 = vld [vmem:[#allocation7 + $0x248] sm:$0xff]
        %v828 = vld [vmem:[#allocation7 + $0x250] sm:$0xff]
        %v829 = vld [vmem:[#allocation7 + $0x258] sm:$0xff]
        %v830 = vld [vmem:[#allocation7 + $0x260] sm:$0xff]
        %v831 = vld [vmem:[#allocation7 + $0x268] sm:$0xff]
        %v832 = vld [vmem:[#allocation7 + $0x270] sm:$0xff]
        %v833 = vld [vmem:[#allocation7 + $0x278] sm:$0xff]
        %v834 = vld [vmem:[#allocation7 + $0x280] sm:$0xff]
        %v835 = vld [vmem:[#allocation7 + $0x288] sm:$0xff]
        %v836 = vld [vmem:[#allocation7 + $0x290] sm:$0xff]
        %v837 = vld [vmem:[#allocation7 + $0x298] sm:$0xff]
        %v838 = vld [vmem:[#allocation7 + $0x2a0] sm:$0xff]
        %v839 = vld [vmem:[#allocation7 + $0x2a8] sm:$0xff]
        %v840 = vld [vmem:[#allocation7 + $0x2b0] sm:$0xff]
        %v841 = vld [vmem:[#allocation7 + $0x2b8] sm:$0xff]
        %v842 = vld [vmem:[#allocation7 + $0x2c0] sm:$0xff]
        %v843 = vld [vmem:[#allocation7 + $0x2c8] sm:$0xff]
        %v844 = vld [vmem:[#allocation7 + $0x2d0] sm:$0xff]
        %v845 = vld [vmem:[#allocation7 + $0x2d8] sm:$0xff]
        %v846 = vld [vmem:[#allocation7 + $0x2e0] sm:$0xff]
        %v847 = vld [vmem:[#allocation7 + $0x2e8] sm:$0xff]
        %v848 = vld [vmem:[#allocation7 + $0x2f0] sm:$0xff]
        %v849 = vld [vmem:[#allocation7 + $0x2f8] sm:$0xff]
        %v850 = vld [vmem:[#allocation7 + $0x300] sm:$0xff]
        %v851 = vld [vmem:[#allocation7 + $0x308] sm:$0xff]
        %v852 = vld [vmem:[#allocation7 + $0x310] sm:$0xff]
        %v853 = vld [vmem:[#allocation7 + $0x318] sm:$0xff]
        %v854 = vld [vmem:[#allocation7 + $0x320] sm:$0xff]
        %v855 = vld [vmem:[#allocation7 + $0x328] sm:$0xff]
        %v856 = vld [vmem:[#allocation7 + $0x330] sm:$0xff]
        %v857 = vld [vmem:[#allocation7 + $0x338] sm:$0xff]
        %v858 = vld [vmem:[#allocation7 + $0x340] sm:$0xff]
        %v859 = vld [vmem:[#allocation7 + $0x348] sm:$0xff]
        %v860 = vld [vmem:[#allocation7 + $0x350] sm:$0xff]
        %v861 = vld [vmem:[#allocation7 + $0x358] sm:$0xff]
        %v862 = vld [vmem:[#allocation7 + $0x360] sm:$0xff]
        %v863 = vld [vmem:[#allocation7 + $0x368] sm:$0xff]
        %v864 = vld [vmem:[#allocation7 + $0x370] sm:$0xff]
        %v865 = vld [vmem:[#allocation7 + $0x378] sm:$0xff]
        %v866 = vld [vmem:[#allocation7 + $0x380] sm:$0xff]
        %v867 = vld [vmem:[#allocation7 + $0x388] sm:$0xff]
        %v868 = vld [vmem:[#allocation7 + $0x390] sm:$0xff]
        %v869 = vld [vmem:[#allocation7 + $0x398] sm:$0xff]
        %v870 = vld [vmem:[#allocation7 + $0x3a0] sm:$0xff]
        %v871 = vld [vmem:[#allocation7 + $0x3a8] sm:$0xff]
        %v872 = vld [vmem:[#allocation7 + $0x3b0] sm:$0xff]
        %v873 = vld [vmem:[#allocation7 + $0x3b8] sm:$0xff]
        %v874 = vld [vmem:[#allocation7 + $0x3c0] sm:$0xff]
        %v875 = vld [vmem:[#allocation7 + $0x3c8] sm:$0xff]
        %v876 = vld [vmem:[#allocation7 + $0x3d0] sm:$0xff]
        %v877 = vld [vmem:[#allocation7 + $0x3d8] sm:$0xff]
        %v878 = vld [vmem:[#allocation7 + $0x3e0] sm:$0xff]
        %v879 = vld [vmem:[#allocation7 + $0x3e8] sm:$0xff]
        %v880 = vld [vmem:[#allocation7 + $0x3f0] sm:$0xff]
        %v881 = vld [vmem:[#allocation7 + $0x3f8] sm:$0xff]
        %v882 = vld [vmem:[#allocation7 + $0x400] sm:$0xff]
        %v883 = vld [vmem:[#allocation7 + $0x408] sm:$0xff]
        %v884 = vld [vmem:[#allocation7 + $0x410] sm:$0xff]
        %v885 = vld [vmem:[#allocation7 + $0x418] sm:$0xff]
        %v886 = vld [vmem:[#allocation7 + $0x420] sm:$0xff]
        %v887 = vld [vmem:[#allocation7 + $0x428] sm:$0xff]
        %v888 = vld [vmem:[#allocation7 + $0x430] sm:$0xff]
        %v889 = vld [vmem:[#allocation7 + $0x438] sm:$0xff]
        %v890 = vld [vmem:[#allocation7 + $0x440] sm:$0xff]
        %v891 = vld [vmem:[#allocation7 + $0x448] sm:$0xff]
        %v892 = vld [vmem:[#allocation7 + $0x450] sm:$0xff]
        %v893 = vld [vmem:[#allocation7 + $0x458] sm:$0xff]
        %v894 = vld [vmem:[#allocation7 + $0x460] sm:$0xff]
        %v895 = vld [vmem:[#allocation7 + $0x468] sm:$0xff]
        %v896 = vld [vmem:[#allocation7 + $0x470] sm:$0xff]
        %v897 = vld [vmem:[#allocation7 + $0x478] sm:$0xff]
        %v898 = vld [vmem:[#allocation7 + $0x480] sm:$0xff]
        %v899 = vld [vmem:[#allocation7 + $0x488] sm:$0xff]
        %v900 = vld [vmem:[#allocation7 + $0x490] sm:$0xff]
        %v901 = vld [vmem:[#allocation7 + $0x498] sm:$0xff]
        %v902 = vld [vmem:[#allocation7 + $0x4a0] sm:$0xff]
        %v903 = vld [vmem:[#allocation7 + $0x4a8] sm:$0xff]
        %v904 = vld [vmem:[#allocation7 + $0x4b0] sm:$0xff]
        %v905 = vld [vmem:[#allocation7 + $0x4b8] sm:$0xff]
        %v906 = vld [vmem:[#allocation7 + $0x4c0] sm:$0xff]
        %v907 = vld [vmem:[#allocation7 + $0x4c8] sm:$0xff]
        %v908 = vld [vmem:[#allocation7 + $0x4d0] sm:$0xff]
        %v909 = vld [vmem:[#allocation7 + $0x4d8] sm:$0xff]
        %v910 = vld [vmem:[#allocation7 + $0x4e0] sm:$0xff]
        %v911 = vld [vmem:[#allocation7 + $0x4e8] sm:$0xff]
        %v912 = vld [vmem:[#allocation7 + $0x4f0] sm:$0xff]
        %v913 = vld [vmem:[#allocation7 + $0x4f8] sm:$0xff]
        %v914 = vld [vmem:[#allocation7 + $0x500] sm:$0xff]
        %v915 = vld [vmem:[#allocation7 + $0x508] sm:$0xff]
        %v916 = vld [vmem:[#allocation7 + $0x510] sm:$0xff]
        %v917 = vld [vmem:[#allocation7 + $0x518] sm:$0xff]
        %v918 = vld [vmem:[#allocation7 + $0x520] sm:$0xff]
        %v919 = vld [vmem:[#allocation7 + $0x528] sm:$0xff]
        %v920 = vld [vmem:[#allocation7 + $0x530] sm:$0xff]
        %v921 = vld [vmem:[#allocation7 + $0x538] sm:$0xff]
        %v922 = vld [vmem:[#allocation7 + $0x540] sm:$0xff]
        %v923 = vld [vmem:[#allocation7 + $0x548] sm:$0xff]
        %v924 = vld [vmem:[#allocation7 + $0x550] sm:$0xff]
        %v925 = vld [vmem:[#allocation7 + $0x558] sm:$0xff]
        %v926 = vld [vmem:[#allocation7 + $0x560] sm:$0xff]
        %v927 = vld [vmem:[#allocation7 + $0x568] sm:$0xff]
        %v928 = vld [vmem:[#allocation7 + $0x570] sm:$0xff]
        %v929 = vld [vmem:[#allocation7 + $0x578] sm:$0xff]
        %v930 = vld [vmem:[#allocation7 + $0x580] sm:$0xff]
        %v931 = vld [vmem:[#allocation7 + $0x588] sm:$0xff]
        %v932 = vld [vmem:[#allocation7 + $0x590] sm:$0xff]
        %v933 = vld [vmem:[#allocation7 + $0x598] sm:$0xff]
        %v934 = vld [vmem:[#allocation7 + $0x5a0] sm:$0xff]
        %v935 = vld [vmem:[#allocation7 + $0x5a8] sm:$0xff]
        %v936 = vld [vmem:[#allocation7 + $0x5b0] sm:$0xff]
        %v937 = vld [vmem:[#allocation7 + $0x5b8] sm:$0xff]
        %v938 = vld [vmem:[#allocation7 + $0x5c0] sm:$0xff]
        %v939 = vld [vmem:[#allocation7 + $0x5c8] sm:$0xff]
        %v940 = vld [vmem:[#allocation7 + $0x5d0] sm:$0xff]
        %v941 = vld [vmem:[#allocation7 + $0x5d8] sm:$0xff]
        %v942 = vld [vmem:[#allocation7 + $0x5e0] sm:$0xff]
        %v943 = vld [vmem:[#allocation7 + $0x5e8] sm:$0xff]
        %v944 = vld [vmem:[#allocation7 + $0x5f0] sm:$0xff]
        %v945 = vld [vmem:[#allocation7 + $0x5f8] sm:$0xff]
        %v946 = vld [vmem:[#allocation7 + $0x600] sm:$0xff]
        %v947 = vld [vmem:[#allocation7 + $0x608] sm:$0xff]
        %v948 = vld [vmem:[#allocation7 + $0x610] sm:$0xff]
        %v949 = vld [vmem:[#allocation7 + $0x618] sm:$0xff]
        %v950 = vld [vmem:[#allocation7 + $0x620] sm:$0xff]
        %v951 = vld [vmem:[#allocation7 + $0x628] sm:$0xff]
        %v952 = vld [vmem:[#allocation7 + $0x630] sm:$0xff]
        %v953 = vld [vmem:[#allocation7 + $0x638] sm:$0xff]
        %v954 = vld [vmem:[#allocation7 + $0x640] sm:$0xff]
        %v955 = vld [vmem:[#allocation7 + $0x648] sm:$0xff]
        %v956 = vld [vmem:[#allocation7 + $0x650] sm:$0xff]
        %v957 = vld [vmem:[#allocation7 + $0x658] sm:$0xff]
        %v958 = vld [vmem:[#allocation7 + $0x660] sm:$0xff]
        %v959 = vld [vmem:[#allocation7 + $0x668] sm:$0xff]
        %v960 = vld [vmem:[#allocation7 + $0x670] sm:$0xff]
        %v961 = vld [vmem:[#allocation7 + $0x678] sm:$0xff]
        %v962 = vld [vmem:[#allocation7 + $0x680] sm:$0xff]
        %v963 = vld [vmem:[#allocation7 + $0x688] sm:$0xff]
        %v964 = vld [vmem:[#allocation7 + $0x690] sm:$0xff]
        %v965 = vld [vmem:[#allocation7 + $0x698] sm:$0xff]
        %v966 = vld [vmem:[#allocation7 + $0x6a0] sm:$0xff]
        %v967 = vld [vmem:[#allocation7 + $0x6a8] sm:$0xff]
        %v968 = vld [vmem:[#allocation7 + $0x6b0] sm:$0xff]
        %v969 = vld [vmem:[#allocation7 + $0x6b8] sm:$0xff]
        %v970 = vld [vmem:[#allocation7 + $0x6c0] sm:$0xff]
        %v971 = vld [vmem:[#allocation7 + $0x6c8] sm:$0xff]
        %v972 = vld [vmem:[#allocation7 + $0x6d0] sm:$0xff]
        %v973 = vld [vmem:[#allocation7 + $0x6d8] sm:$0xff]
        %v974 = vld [vmem:[#allocation7 + $0x6e0] sm:$0xff]
        %v975 = vld [vmem:[#allocation7 + $0x6e8] sm:$0xff]
        %v976 = vld [vmem:[#allocation7 + $0x6f0] sm:$0xff]
        %v977 = vld [vmem:[#allocation7 + $0x6f8] sm:$0xff]
        %v978 = vld [vmem:[#allocation7 + $0x700] sm:$0xff]
        %v979 = vld [vmem:[#allocation7 + $0x708] sm:$0xff]
        %v980 = vld [vmem:[#allocation7 + $0x710] sm:$0xff]
        %v981 = vld [vmem:[#allocation7 + $0x718] sm:$0xff]
        %v982 = vld [vmem:[#allocation7 + $0x720] sm:$0xff]
        %v983 = vld [vmem:[#allocation7 + $0x728] sm:$0xff]
        %v984 = vld [vmem:[#allocation7 + $0x730] sm:$0xff]
        %v985 = vld [vmem:[#allocation7 + $0x738] sm:$0xff]
        %v986 = vld [vmem:[#allocation7 + $0x740] sm:$0xff]
        %v987 = vld [vmem:[#allocation7 + $0x748] sm:$0xff]
        %v988 = vld [vmem:[#allocation7 + $0x750] sm:$0xff]
        %v989 = vld [vmem:[#allocation7 + $0x758] sm:$0xff]
        %v990 = vld [vmem:[#allocation7 + $0x760] sm:$0xff]
        %v991 = vld [vmem:[#allocation7 + $0x768] sm:$0xff]
        %v992 = vld [vmem:[#allocation7 + $0x770] sm:$0xff]
        %v993 = vld [vmem:[#allocation7 + $0x778] sm:$0xff]
        %v994 = vld [vmem:[#allocation7 + $0x780] sm:$0xff]
        %v995 = vld [vmem:[#allocation7 + $0x788] sm:$0xff]
        %v996 = vld [vmem:[#allocation7 + $0x790] sm:$0xff]
        %v997 = vld [vmem:[#allocation7 + $0x798] sm:$0xff]
        %v998 = vld [vmem:[#allocation7 + $0x7a0] sm:$0xff]
        %v999 = vld [vmem:[#allocation7 + $0x7a8] sm:$0xff]
        %v1000 = vld [vmem:[#allocation7 + $0x7b0] sm:$0xff]
        %v1001 = vld [vmem:[#allocation7 + $0x7b8] sm:$0xff]
        %v1002 = vld [vmem:[#allocation7 + $0x7c0] sm:$0xff]
        %v1003 = vld [vmem:[#allocation7 + $0x7c8] sm:$0xff]
        %v1004 = vld [vmem:[#allocation7 + $0x7d0] sm:$0xff]
        %v1005 = vld [vmem:[#allocation7 + $0x7d8] sm:$0xff]
        %v1006 = vld [vmem:[#allocation7 + $0x7e0] sm:$0xff]
        %v1007 = vld [vmem:[#allocation7 + $0x7e8] sm:$0xff]
        %v1008 = vld [vmem:[#allocation7 + $0x7f0] sm:$0xff]
        %v1009 = vld [vmem:[#allocation7 + $0x7f8] sm:$0xff]
        %v1010 = vld [vmem:[%s4] sm:$0xff]
        %v1012 = vlaneseq
        %v1013 = vshrl.u32 %v1012, 7
        %v1014 = vsub.s32 0, %v1013
        %v1015 = vrot.slane %v1010, %v1014
        %v1016 = vlaneseq
        %v1017 = vshrl.u32 %v1016, 7
        %v1018 = vsub.s32 1, %v1017
        %v1019 = vrot.slane %v1010, %v1018
        %v1020 = vlaneseq
        %v1021 = vshrl.u32 %v1020, 7
        %v1022 = vsub.s32 2, %v1021
        %v1023 = vrot.slane %v1010, %v1022
        %v1024 = vlaneseq
        %v1025 = vshrl.u32 %v1024, 7
        %v1026 = vsub.s32 3, %v1025
        %v1027 = vrot.slane %v1010, %v1026
        %v1028 = vlaneseq
        %v1029 = vshrl.u32 %v1028, 7
        %v1030 = vsub.s32 4, %v1029
        %v1031 = vrot.slane %v1010, %v1030
        %v1032 = vlaneseq
        %v1033 = vshrl.u32 %v1032, 7
        %v1034 = vsub.s32 5, %v1033
        %v1035 = vrot.slane %v1010, %v1034
        %v1036 = vlaneseq
        %v1037 = vshrl.u32 %v1036, 7
        %v1038 = vsub.s32 6, %v1037
        %v1039 = vrot.slane %v1010, %v1038
        %v1040 = vlaneseq
        %v1041 = vshrl.u32 %v1040, 7
        %v1042 = vsub.s32 7, %v1041
        %v1043 = vrot.slane %v1010, %v1042
        %v1308 = vunpack.c.l.b16 %v754
        %v1309 = vunpack.c.h.b16 %v754
        %v1310 = vunpack.c.l.b16 %v755
        %v1311 = vunpack.c.h.b16 %v755
        %v1312 = vunpack.c.l.b16 %v756
        %v1313 = vunpack.c.h.b16 %v756
        %v1314 = vunpack.c.l.b16 %v757
        %v1315 = vunpack.c.h.b16 %v757
        %v1316 = vunpack.c.l.b16 %v758
        %v1317 = vunpack.c.h.b16 %v758
        %v1318 = vunpack.c.l.b16 %v759
        %v1319 = vunpack.c.h.b16 %v759
        %v1320 = vunpack.c.l.b16 %v760
        %v1321 = vunpack.c.h.b16 %v760
        %v1322 = vunpack.c.l.b16 %v761
        %v1323 = vunpack.c.h.b16 %v761
        %v1324 = vunpack.c.l.b16 %v762
        %v1325 = vunpack.c.h.b16 %v762
        %v1326 = vunpack.c.l.b16 %v763
        %v1327 = vunpack.c.h.b16 %v763
        %v1328 = vunpack.c.l.b16 %v764
        %v1329 = vunpack.c.h.b16 %v764
        %v1330 = vunpack.c.l.b16 %v765
        %v1331 = vunpack.c.h.b16 %v765
        %v1332 = vunpack.c.l.b16 %v766
        %v1333 = vunpack.c.h.b16 %v766
        %v1334 = vunpack.c.l.b16 %v767
        %v1335 = vunpack.c.h.b16 %v767
        %v1336 = vunpack.c.l.b16 %v768
        %v1337 = vunpack.c.h.b16 %v768
        %v1338 = vunpack.c.l.b16 %v769
        %v1339 = vunpack.c.h.b16 %v769
        %v1340 = vunpack.c.l.b16 %v770
        %v1341 = vunpack.c.h.b16 %v770
        %v1342 = vunpack.c.l.b16 %v771
        %v1343 = vunpack.c.h.b16 %v771
        %v1344 = vunpack.c.l.b16 %v772
        %v1345 = vunpack.c.h.b16 %v772
        %v1346 = vunpack.c.l.b16 %v773
        %v1347 = vunpack.c.h.b16 %v773
        %v1348 = vunpack.c.l.b16 %v774
        %v1349 = vunpack.c.h.b16 %v774
        %v1350 = vunpack.c.l.b16 %v775
        %v1351 = vunpack.c.h.b16 %v775
        %v1352 = vunpack.c.l.b16 %v776
        %v1353 = vunpack.c.h.b16 %v776
        %v1354 = vunpack.c.l.b16 %v777
        %v1355 = vunpack.c.h.b16 %v777
        %v1356 = vunpack.c.l.b16 %v778
        %v1357 = vunpack.c.h.b16 %v778
        %v1358 = vunpack.c.l.b16 %v779
        %v1359 = vunpack.c.h.b16 %v779
        %v1360 = vunpack.c.l.b16 %v780
        %v1361 = vunpack.c.h.b16 %v780
        %v1362 = vunpack.c.l.b16 %v781
        %v1363 = vunpack.c.h.b16 %v781
        %v1364 = vunpack.c.l.b16 %v782
        %v1365 = vunpack.c.h.b16 %v782
        %v1366 = vunpack.c.l.b16 %v783
        %v1367 = vunpack.c.h.b16 %v783
        %v1368 = vunpack.c.l.b16 %v784
        %v1369 = vunpack.c.h.b16 %v784
        %v1370 = vunpack.c.l.b16 %v785
        %v1371 = vunpack.c.h.b16 %v785
        %v1372 = vunpack.c.l.b16 %v786
        %v1373 = vunpack.c.h.b16 %v786
        %v1374 = vunpack.c.l.b16 %v787
        %v1375 = vunpack.c.h.b16 %v787
        %v1376 = vunpack.c.l.b16 %v788
        %v1377 = vunpack.c.h.b16 %v788
        %v1378 = vunpack.c.l.b16 %v789
        %v1379 = vunpack.c.h.b16 %v789
        %v1380 = vunpack.c.l.b16 %v790
        %v1381 = vunpack.c.h.b16 %v790
        %v1382 = vunpack.c.l.b16 %v791
        %v1383 = vunpack.c.h.b16 %v791
        %v1384 = vunpack.c.l.b16 %v792
        %v1385 = vunpack.c.h.b16 %v792
        %v1386 = vunpack.c.l.b16 %v793
        %v1387 = vunpack.c.h.b16 %v793
        %v1388 = vunpack.c.l.b16 %v794
        %v1389 = vunpack.c.h.b16 %v794
        %v1390 = vunpack.c.l.b16 %v795
        %v1391 = vunpack.c.h.b16 %v795
        %v1392 = vunpack.c.l.b16 %v796
        %v1393 = vunpack.c.h.b16 %v796
        %v1394 = vunpack.c.l.b16 %v797
        %v1395 = vunpack.c.h.b16 %v797
        %v1396 = vunpack.c.l.b16 %v798
        %v1397 = vunpack.c.h.b16 %v798
        %v1398 = vunpack.c.l.b16 %v799
        %v1399 = vunpack.c.h.b16 %v799
        %v1400 = vunpack.c.l.b16 %v800
        %v1401 = vunpack.c.h.b16 %v800
        %v1402 = vunpack.c.l.b16 %v801
        %v1403 = vunpack.c.h.b16 %v801
        %v1404 = vunpack.c.l.b16 %v802
        %v1405 = vunpack.c.h.b16 %v802
        %v1406 = vunpack.c.l.b16 %v803
        %v1407 = vunpack.c.h.b16 %v803
        %v1408 = vunpack.c.l.b16 %v804
        %v1409 = vunpack.c.h.b16 %v804
        %v1410 = vunpack.c.l.b16 %v805
        %v1411 = vunpack.c.h.b16 %v805
        %v1412 = vunpack.c.l.b16 %v806
        %v1413 = vunpack.c.h.b16 %v806
        %v1414 = vunpack.c.l.b16 %v807
        %v1415 = vunpack.c.h.b16 %v807
        %v1416 = vunpack.c.l.b16 %v808
        %v1417 = vunpack.c.h.b16 %v808
        %v1418 = vunpack.c.l.b16 %v809
        %v1419 = vunpack.c.h.b16 %v809
        %v1420 = vunpack.c.l.b16 %v810
        %v1421 = vunpack.c.h.b16 %v810
        %v1422 = vunpack.c.l.b16 %v811
        %v1423 = vunpack.c.h.b16 %v811
        %v1424 = vunpack.c.l.b16 %v812
        %v1425 = vunpack.c.h.b16 %v812
        %v1426 = vunpack.c.l.b16 %v813
        %v1427 = vunpack.c.h.b16 %v813
        %v1428 = vunpack.c.l.b16 %v814
        %v1429 = vunpack.c.h.b16 %v814
        %v1430 = vunpack.c.l.b16 %v815
        %v1431 = vunpack.c.h.b16 %v815
        %v1432 = vunpack.c.l.b16 %v816
        %v1433 = vunpack.c.h.b16 %v816
        %v1434 = vunpack.c.l.b16 %v817
        %v1435 = vunpack.c.h.b16 %v817
        %v1436 = vunpack.c.l.b16 %v818
        %v1437 = vunpack.c.h.b16 %v818
        %v1438 = vunpack.c.l.b16 %v819
        %v1439 = vunpack.c.h.b16 %v819
        %v1440 = vunpack.c.l.b16 %v820
        %v1441 = vunpack.c.h.b16 %v820
        %v1442 = vunpack.c.l.b16 %v821
        %v1443 = vunpack.c.h.b16 %v821
        %v1444 = vunpack.c.l.b16 %v822
        %v1445 = vunpack.c.h.b16 %v822
        %v1446 = vunpack.c.l.b16 %v823
        %v1447 = vunpack.c.h.b16 %v823
        %v1448 = vunpack.c.l.b16 %v824
        %v1449 = vunpack.c.h.b16 %v824
        %v1450 = vunpack.c.l.b16 %v825
        %v1451 = vunpack.c.h.b16 %v825
        %v1452 = vunpack.c.l.b16 %v826
        %v1453 = vunpack.c.h.b16 %v826
        %v1454 = vunpack.c.l.b16 %v827
        %v1455 = vunpack.c.h.b16 %v827
        %v1456 = vunpack.c.l.b16 %v828
        %v1457 = vunpack.c.h.b16 %v828
        %v1458 = vunpack.c.l.b16 %v829
        %v1459 = vunpack.c.h.b16 %v829
        %v1460 = vunpack.c.l.b16 %v830
        %v1461 = vunpack.c.h.b16 %v830
        %v1462 = vunpack.c.l.b16 %v831
        %v1463 = vunpack.c.h.b16 %v831
        %v1464 = vunpack.c.l.b16 %v832
        %v1465 = vunpack.c.h.b16 %v832
        %v1466 = vunpack.c.l.b16 %v833
        %v1467 = vunpack.c.h.b16 %v833
        %v1468 = vunpack.c.l.b16 %v834
        %v1469 = vunpack.c.h.b16 %v834
        %v1470 = vunpack.c.l.b16 %v835
        %v1471 = vunpack.c.h.b16 %v835
        %v1472 = vunpack.c.l.b16 %v836
        %v1473 = vunpack.c.h.b16 %v836
        %v1474 = vunpack.c.l.b16 %v837
        %v1475 = vunpack.c.h.b16 %v837
        %v1476 = vunpack.c.l.b16 %v838
        %v1477 = vunpack.c.h.b16 %v838
        %v1478 = vunpack.c.l.b16 %v839
        %v1479 = vunpack.c.h.b16 %v839
        %v1480 = vunpack.c.l.b16 %v840
        %v1481 = vunpack.c.h.b16 %v840
        %v1482 = vunpack.c.l.b16 %v841
        %v1483 = vunpack.c.h.b16 %v841
        %v1484 = vunpack.c.l.b16 %v842
        %v1485 = vunpack.c.h.b16 %v842
        %v1486 = vunpack.c.l.b16 %v843
        %v1487 = vunpack.c.h.b16 %v843
        %v1488 = vunpack.c.l.b16 %v844
        %v1489 = vunpack.c.h.b16 %v844
        %v1490 = vunpack.c.l.b16 %v845
        %v1491 = vunpack.c.h.b16 %v845
        %v1492 = vunpack.c.l.b16 %v846
        %v1493 = vunpack.c.h.b16 %v846
        %v1494 = vunpack.c.l.b16 %v847
        %v1495 = vunpack.c.h.b16 %v847
        %v1496 = vunpack.c.l.b16 %v848
        %v1497 = vunpack.c.h.b16 %v848
        %v1498 = vunpack.c.l.b16 %v849
        %v1499 = vunpack.c.h.b16 %v849
        %v1500 = vunpack.c.l.b16 %v850
        %v1501 = vunpack.c.h.b16 %v850
        %v1502 = vunpack.c.l.b16 %v851
        %v1503 = vunpack.c.h.b16 %v851
        %v1504 = vunpack.c.l.b16 %v852
        %v1505 = vunpack.c.h.b16 %v852
        %v1506 = vunpack.c.l.b16 %v853
        %v1507 = vunpack.c.h.b16 %v853
        %v1508 = vunpack.c.l.b16 %v854
        %v1509 = vunpack.c.h.b16 %v854
        %v1510 = vunpack.c.l.b16 %v855
        %v1511 = vunpack.c.h.b16 %v855
        %v1512 = vunpack.c.l.b16 %v856
        %v1513 = vunpack.c.h.b16 %v856
        %v1514 = vunpack.c.l.b16 %v857
        %v1515 = vunpack.c.h.b16 %v857
        %v1516 = vunpack.c.l.b16 %v858
        %v1517 = vunpack.c.h.b16 %v858
        %v1518 = vunpack.c.l.b16 %v859
        %v1519 = vunpack.c.h.b16 %v859
        %v1520 = vunpack.c.l.b16 %v860
        %v1521 = vunpack.c.h.b16 %v860
        %v1522 = vunpack.c.l.b16 %v861
        %v1523 = vunpack.c.h.b16 %v861
        %v1524 = vunpack.c.l.b16 %v862
        %v1525 = vunpack.c.h.b16 %v862
        %v1526 = vunpack.c.l.b16 %v863
        %v1527 = vunpack.c.h.b16 %v863
        %v1528 = vunpack.c.l.b16 %v864
        %v1529 = vunpack.c.h.b16 %v864
        %v1530 = vunpack.c.l.b16 %v865
        %v1531 = vunpack.c.h.b16 %v865
        %v1532 = vunpack.c.l.b16 %v866
        %v1533 = vunpack.c.h.b16 %v866
        %v1534 = vunpack.c.l.b16 %v867
        %v1535 = vunpack.c.h.b16 %v867
        %v1536 = vunpack.c.l.b16 %v868
        %v1537 = vunpack.c.h.b16 %v868
        %v1538 = vunpack.c.l.b16 %v869
        %v1539 = vunpack.c.h.b16 %v869
        %v1540 = vunpack.c.l.b16 %v870
        %v1541 = vunpack.c.h.b16 %v870
        %v1542 = vunpack.c.l.b16 %v871
        %v1543 = vunpack.c.h.b16 %v871
        %v1544 = vunpack.c.l.b16 %v872
        %v1545 = vunpack.c.h.b16 %v872
        %v1546 = vunpack.c.l.b16 %v873
        %v1547 = vunpack.c.h.b16 %v873
        %v1548 = vunpack.c.l.b16 %v874
        %v1549 = vunpack.c.h.b16 %v874
        %v1550 = vunpack.c.l.b16 %v875
        %v1551 = vunpack.c.h.b16 %v875
        %v1552 = vunpack.c.l.b16 %v876
        %v1553 = vunpack.c.h.b16 %v876
        %v1554 = vunpack.c.l.b16 %v877
        %v1555 = vunpack.c.h.b16 %v877
        %v1556 = vunpack.c.l.b16 %v878
        %v1557 = vunpack.c.h.b16 %v878
        %v1558 = vunpack.c.l.b16 %v879
        %v1559 = vunpack.c.h.b16 %v879
        %v1560 = vunpack.c.l.b16 %v880
        %v1561 = vunpack.c.h.b16 %v880
        %v1562 = vunpack.c.l.b16 %v881
        %v1563 = vunpack.c.h.b16 %v881
        %v1564 = vunpack.c.l.b16 %v882
        %v1565 = vunpack.c.h.b16 %v882
        %v1566 = vunpack.c.l.b16 %v883
        %v1567 = vunpack.c.h.b16 %v883
        %v1568 = vunpack.c.l.b16 %v884
        %v1569 = vunpack.c.h.b16 %v884
        %v1570 = vunpack.c.l.b16 %v885
        %v1571 = vunpack.c.h.b16 %v885
        %v1572 = vunpack.c.l.b16 %v886
        %v1573 = vunpack.c.h.b16 %v886
        %v1574 = vunpack.c.l.b16 %v887
        %v1575 = vunpack.c.h.b16 %v887
        %v1576 = vunpack.c.l.b16 %v888
        %v1577 = vunpack.c.h.b16 %v888
        %v1578 = vunpack.c.l.b16 %v889
        %v1579 = vunpack.c.h.b16 %v889
        %v1580 = vunpack.c.l.b16 %v890
        %v1581 = vunpack.c.h.b16 %v890
        %v1582 = vunpack.c.l.b16 %v891
        %v1583 = vunpack.c.h.b16 %v891
        %v1584 = vunpack.c.l.b16 %v892
        %v1585 = vunpack.c.h.b16 %v892
        %v1586 = vunpack.c.l.b16 %v893
        %v1587 = vunpack.c.h.b16 %v893
        %v1588 = vunpack.c.l.b16 %v894
        %v1589 = vunpack.c.h.b16 %v894
        %v1590 = vunpack.c.l.b16 %v895
        %v1591 = vunpack.c.h.b16 %v895
        %v1592 = vunpack.c.l.b16 %v896
        %v1593 = vunpack.c.h.b16 %v896
        %v1594 = vunpack.c.l.b16 %v897
        %v1595 = vunpack.c.h.b16 %v897
        %v1596 = vunpack.c.l.b16 %v898
        %v1597 = vunpack.c.h.b16 %v898
        %v1598 = vunpack.c.l.b16 %v899
        %v1599 = vunpack.c.h.b16 %v899
        %v1600 = vunpack.c.l.b16 %v900
        %v1601 = vunpack.c.h.b16 %v900
        %v1602 = vunpack.c.l.b16 %v901
        %v1603 = vunpack.c.h.b16 %v901
        %v1604 = vunpack.c.l.b16 %v902
        %v1605 = vunpack.c.h.b16 %v902
        %v1606 = vunpack.c.l.b16 %v903
        %v1607 = vunpack.c.h.b16 %v903
        %v1608 = vunpack.c.l.b16 %v904
        %v1609 = vunpack.c.h.b16 %v904
        %v1610 = vunpack.c.l.b16 %v905
        %v1611 = vunpack.c.h.b16 %v905
        %v1612 = vunpack.c.l.b16 %v906
        %v1613 = vunpack.c.h.b16 %v906
        %v1614 = vunpack.c.l.b16 %v907
        %v1615 = vunpack.c.h.b16 %v907
        %v1616 = vunpack.c.l.b16 %v908
        %v1617 = vunpack.c.h.b16 %v908
        %v1618 = vunpack.c.l.b16 %v909
        %v1619 = vunpack.c.h.b16 %v909
        %v1620 = vunpack.c.l.b16 %v910
        %v1621 = vunpack.c.h.b16 %v910
        %v1622 = vunpack.c.l.b16 %v911
        %v1623 = vunpack.c.h.b16 %v911
        %v1624 = vunpack.c.l.b16 %v912
        %v1625 = vunpack.c.h.b16 %v912
        %v1626 = vunpack.c.l.b16 %v913
        %v1627 = vunpack.c.h.b16 %v913
        %v1628 = vunpack.c.l.b16 %v914
        %v1629 = vunpack.c.h.b16 %v914
        %v1630 = vunpack.c.l.b16 %v915
        %v1631 = vunpack.c.h.b16 %v915
        %v1632 = vunpack.c.l.b16 %v916
        %v1633 = vunpack.c.h.b16 %v916
        %v1634 = vunpack.c.l.b16 %v917
        %v1635 = vunpack.c.h.b16 %v917
        %v1636 = vunpack.c.l.b16 %v918
        %v1637 = vunpack.c.h.b16 %v918
        %v1638 = vunpack.c.l.b16 %v919
        %v1639 = vunpack.c.h.b16 %v919
        %v1640 = vunpack.c.l.b16 %v920
        %v1641 = vunpack.c.h.b16 %v920
        %v1642 = vunpack.c.l.b16 %v921
        %v1643 = vunpack.c.h.b16 %v921
        %v1644 = vunpack.c.l.b16 %v922
        %v1645 = vunpack.c.h.b16 %v922
        %v1646 = vunpack.c.l.b16 %v923
        %v1647 = vunpack.c.h.b16 %v923
        %v1648 = vunpack.c.l.b16 %v924
        %v1649 = vunpack.c.h.b16 %v924
        %v1650 = vunpack.c.l.b16 %v925
        %v1651 = vunpack.c.h.b16 %v925
        %v1652 = vunpack.c.l.b16 %v926
        %v1653 = vunpack.c.h.b16 %v926
        %v1654 = vunpack.c.l.b16 %v927
        %v1655 = vunpack.c.h.b16 %v927
        %v1656 = vunpack.c.l.b16 %v928
        %v1657 = vunpack.c.h.b16 %v928
        %v1658 = vunpack.c.l.b16 %v929
        %v1659 = vunpack.c.h.b16 %v929
        %v1660 = vunpack.c.l.b16 %v930
        %v1661 = vunpack.c.h.b16 %v930
        %v1662 = vunpack.c.l.b16 %v931
        %v1663 = vunpack.c.h.b16 %v931
        %v1664 = vunpack.c.l.b16 %v932
        %v1665 = vunpack.c.h.b16 %v932
        %v1666 = vunpack.c.l.b16 %v933
        %v1667 = vunpack.c.h.b16 %v933
        %v1668 = vunpack.c.l.b16 %v934
        %v1669 = vunpack.c.h.b16 %v934
        %v1670 = vunpack.c.l.b16 %v935
        %v1671 = vunpack.c.h.b16 %v935
        %v1672 = vunpack.c.l.b16 %v936
        %v1673 = vunpack.c.h.b16 %v936
        %v1674 = vunpack.c.l.b16 %v937
        %v1675 = vunpack.c.h.b16 %v937
        %v1676 = vunpack.c.l.b16 %v938
        %v1677 = vunpack.c.h.b16 %v938
        %v1678 = vunpack.c.l.b16 %v939
        %v1679 = vunpack.c.h.b16 %v939
        %v1680 = vunpack.c.l.b16 %v940
        %v1681 = vunpack.c.h.b16 %v940
        %v1682 = vunpack.c.l.b16 %v941
        %v1683 = vunpack.c.h.b16 %v941
        %v1684 = vunpack.c.l.b16 %v942
        %v1685 = vunpack.c.h.b16 %v942
        %v1686 = vunpack.c.l.b16 %v943
        %v1687 = vunpack.c.h.b16 %v943
        %v1688 = vunpack.c.l.b16 %v944
        %v1689 = vunpack.c.h.b16 %v944
        %v1690 = vunpack.c.l.b16 %v945
        %v1691 = vunpack.c.h.b16 %v945
        %v1692 = vunpack.c.l.b16 %v946
        %v1693 = vunpack.c.h.b16 %v946
        %v1694 = vunpack.c.l.b16 %v947
        %v1695 = vunpack.c.h.b16 %v947
        %v1696 = vunpack.c.l.b16 %v948
        %v1697 = vunpack.c.h.b16 %v948
        %v1698 = vunpack.c.l.b16 %v949
        %v1699 = vunpack.c.h.b16 %v949
        %v1700 = vunpack.c.l.b16 %v950
        %v1701 = vunpack.c.h.b16 %v950
        %v1702 = vunpack.c.l.b16 %v951
        %v1703 = vunpack.c.h.b16 %v951
        %v1704 = vunpack.c.l.b16 %v952
        %v1705 = vunpack.c.h.b16 %v952
        %v1706 = vunpack.c.l.b16 %v953
        %v1707 = vunpack.c.h.b16 %v953
        %v1708 = vunpack.c.l.b16 %v954
        %v1709 = vunpack.c.h.b16 %v954
        %v1710 = vunpack.c.l.b16 %v955
        %v1711 = vunpack.c.h.b16 %v955
        %v1712 = vunpack.c.l.b16 %v956
        %v1713 = vunpack.c.h.b16 %v956
        %v1714 = vunpack.c.l.b16 %v957
        %v1715 = vunpack.c.h.b16 %v957
        %v1716 = vunpack.c.l.b16 %v958
        %v1717 = vunpack.c.h.b16 %v958
        %v1718 = vunpack.c.l.b16 %v959
        %v1719 = vunpack.c.h.b16 %v959
        %v1720 = vunpack.c.l.b16 %v960
        %v1721 = vunpack.c.h.b16 %v960
        %v1722 = vunpack.c.l.b16 %v961
        %v1723 = vunpack.c.h.b16 %v961
        %v1724 = vunpack.c.l.b16 %v962
        %v1725 = vunpack.c.h.b16 %v962
        %v1726 = vunpack.c.l.b16 %v963
        %v1727 = vunpack.c.h.b16 %v963
        %v1728 = vunpack.c.l.b16 %v964
        %v1729 = vunpack.c.h.b16 %v964
        %v1730 = vunpack.c.l.b16 %v965
        %v1731 = vunpack.c.h.b16 %v965
        %v1732 = vunpack.c.l.b16 %v966
        %v1733 = vunpack.c.h.b16 %v966
        %v1734 = vunpack.c.l.b16 %v967
        %v1735 = vunpack.c.h.b16 %v967
        %v1736 = vunpack.c.l.b16 %v968
        %v1737 = vunpack.c.h.b16 %v968
        %v1738 = vunpack.c.l.b16 %v969
        %v1739 = vunpack.c.h.b16 %v969
        %v1740 = vunpack.c.l.b16 %v970
        %v1741 = vunpack.c.h.b16 %v970
        %v1742 = vunpack.c.l.b16 %v971
        %v1743 = vunpack.c.h.b16 %v971
        %v1744 = vunpack.c.l.b16 %v972
        %v1745 = vunpack.c.h.b16 %v972
        %v1746 = vunpack.c.l.b16 %v973
        %v1747 = vunpack.c.h.b16 %v973
        %v1748 = vunpack.c.l.b16 %v974
        %v1749 = vunpack.c.h.b16 %v974
        %v1750 = vunpack.c.l.b16 %v975
        %v1751 = vunpack.c.h.b16 %v975
        %v1752 = vunpack.c.l.b16 %v976
        %v1753 = vunpack.c.h.b16 %v976
        %v1754 = vunpack.c.l.b16 %v977
        %v1755 = vunpack.c.h.b16 %v977
        %v1756 = vunpack.c.l.b16 %v978
        %v1757 = vunpack.c.h.b16 %v978
        %v1758 = vunpack.c.l.b16 %v979
        %v1759 = vunpack.c.h.b16 %v979
        %v1760 = vunpack.c.l.b16 %v980
        %v1761 = vunpack.c.h.b16 %v980
        %v1762 = vunpack.c.l.b16 %v981
        %v1763 = vunpack.c.h.b16 %v981
        %v1764 = vunpack.c.l.b16 %v982
        %v1765 = vunpack.c.h.b16 %v982
        %v1766 = vunpack.c.l.b16 %v983
        %v1767 = vunpack.c.h.b16 %v983
        %v1768 = vunpack.c.l.b16 %v984
        %v1769 = vunpack.c.h.b16 %v984
        %v1770 = vunpack.c.l.b16 %v985
        %v1771 = vunpack.c.h.b16 %v985
        %v1772 = vunpack.c.l.b16 %v986
        %v1773 = vunpack.c.h.b16 %v986
        %v1774 = vunpack.c.l.b16 %v987
        %v1775 = vunpack.c.h.b16 %v987
        %v1776 = vunpack.c.l.b16 %v988
        %v1777 = vunpack.c.h.b16 %v988
        %v1778 = vunpack.c.l.b16 %v989
        %v1779 = vunpack.c.h.b16 %v989
        %v1780 = vunpack.c.l.b16 %v990
        %v1781 = vunpack.c.h.b16 %v990
        %v1782 = vunpack.c.l.b16 %v991
        %v1783 = vunpack.c.h.b16 %v991
        %v1784 = vunpack.c.l.b16 %v992
        %v1785 = vunpack.c.h.b16 %v992
        %v1786 = vunpack.c.l.b16 %v993
        %v1787 = vunpack.c.h.b16 %v993
        %v1788 = vunpack.c.l.b16 %v994
        %v1789 = vunpack.c.h.b16 %v994
        %v1790 = vunpack.c.l.b16 %v995
        %v1791 = vunpack.c.h.b16 %v995
        %v1792 = vunpack.c.l.b16 %v996
        %v1793 = vunpack.c.h.b16 %v996
        %v1794 = vunpack.c.l.b16 %v997
        %v1795 = vunpack.c.h.b16 %v997
        %v1796 = vunpack.c.l.b16 %v998
        %v1797 = vunpack.c.h.b16 %v998
        %v1798 = vunpack.c.l.b16 %v999
        %v1799 = vunpack.c.h.b16 %v999
        %v1800 = vunpack.c.l.b16 %v1000
        %v1801 = vunpack.c.h.b16 %v1000
        %v1802 = vunpack.c.l.b16 %v1001
        %v1803 = vunpack.c.h.b16 %v1001
        %v1804 = vunpack.c.l.b16 %v1002
        %v1805 = vunpack.c.h.b16 %v1002
        %v1806 = vunpack.c.l.b16 %v1003
        %v1807 = vunpack.c.h.b16 %v1003
        %v1808 = vunpack.c.l.b16 %v1004
        %v1809 = vunpack.c.h.b16 %v1004
        %v1810 = vunpack.c.l.b16 %v1005
        %v1811 = vunpack.c.h.b16 %v1005
        %v1812 = vunpack.c.l.b16 %v1006
        %v1813 = vunpack.c.h.b16 %v1006
        %v1814 = vunpack.c.l.b16 %v1007
        %v1815 = vunpack.c.h.b16 %v1007
        %v1816 = vunpack.c.l.b16 %v1008
        %v1817 = vunpack.c.h.b16 %v1008
        %v1818 = vunpack.c.l.b16 %v1009
        %v1819 = vunpack.c.h.b16 %v1009
        %v1820 = vpack.c.b16 %v1316, %v1308
        %v1821 = vpack.c.b16 %v1317, %v1309
        %v1822 = vpack.c.b16 %v1318, %v1310
        %v1823 = vpack.c.b16 %v1319, %v1311
        %v1824 = vpack.c.b16 %v1320, %v1312
        %v1825 = vpack.c.b16 %v1321, %v1313
        %v1826 = vpack.c.b16 %v1322, %v1314
        %v1827 = vpack.c.b16 %v1323, %v1315
        %v1828 = vpack.c.b16 %v1332, %v1324
        %v1829 = vpack.c.b16 %v1333, %v1325
        %v1830 = vpack.c.b16 %v1334, %v1326
        %v1831 = vpack.c.b16 %v1335, %v1327
        %v1832 = vpack.c.b16 %v1336, %v1328
        %v1833 = vpack.c.b16 %v1337, %v1329
        %v1834 = vpack.c.b16 %v1338, %v1330
        %v1835 = vpack.c.b16 %v1339, %v1331
        %v1836 = vpack.c.b16 %v1348, %v1340
        %v1837 = vpack.c.b16 %v1349, %v1341
        %v1838 = vpack.c.b16 %v1350, %v1342
        %v1839 = vpack.c.b16 %v1351, %v1343
        %v1840 = vpack.c.b16 %v1352, %v1344
        %v1841 = vpack.c.b16 %v1353, %v1345
        %v1842 = vpack.c.b16 %v1354, %v1346
        %v1843 = vpack.c.b16 %v1355, %v1347
        %v1844 = vpack.c.b16 %v1364, %v1356
        %v1845 = vpack.c.b16 %v1365, %v1357
        %v1846 = vpack.c.b16 %v1366, %v1358
        %v1847 = vpack.c.b16 %v1367, %v1359
        %v1848 = vpack.c.b16 %v1368, %v1360
        %v1849 = vpack.c.b16 %v1369, %v1361
        %v1850 = vpack.c.b16 %v1370, %v1362
        %v1851 = vpack.c.b16 %v1371, %v1363
        %v1852 = vpack.c.b16 %v1380, %v1372
        %v1853 = vpack.c.b16 %v1381, %v1373
        %v1854 = vpack.c.b16 %v1382, %v1374
        %v1855 = vpack.c.b16 %v1383, %v1375
        %v1856 = vpack.c.b16 %v1384, %v1376
        %v1857 = vpack.c.b16 %v1385, %v1377
        %v1858 = vpack.c.b16 %v1386, %v1378
        %v1859 = vpack.c.b16 %v1387, %v1379
        %v1860 = vpack.c.b16 %v1396, %v1388
        %v1861 = vpack.c.b16 %v1397, %v1389
        %v1862 = vpack.c.b16 %v1398, %v1390
        %v1863 = vpack.c.b16 %v1399, %v1391
        %v1864 = vpack.c.b16 %v1400, %v1392
        %v1865 = vpack.c.b16 %v1401, %v1393
        %v1866 = vpack.c.b16 %v1402, %v1394
        %v1867 = vpack.c.b16 %v1403, %v1395
        %v1868 = vpack.c.b16 %v1412, %v1404
        %v1869 = vpack.c.b16 %v1413, %v1405
        %v1870 = vpack.c.b16 %v1414, %v1406
        %v1871 = vpack.c.b16 %v1415, %v1407
        %v1872 = vpack.c.b16 %v1416, %v1408
        %v1873 = vpack.c.b16 %v1417, %v1409
        %v1874 = vpack.c.b16 %v1418, %v1410
        %v1875 = vpack.c.b16 %v1419, %v1411
        %v1876 = vpack.c.b16 %v1428, %v1420
        %v1877 = vpack.c.b16 %v1429, %v1421
        %v1878 = vpack.c.b16 %v1430, %v1422
        %v1879 = vpack.c.b16 %v1431, %v1423
        %v1880 = vpack.c.b16 %v1432, %v1424
        %v1881 = vpack.c.b16 %v1433, %v1425
        %v1882 = vpack.c.b16 %v1434, %v1426
        %v1883 = vpack.c.b16 %v1435, %v1427
        %v1884 = vpack.c.b16 %v1444, %v1436
        %v1885 = vpack.c.b16 %v1445, %v1437
        %v1886 = vpack.c.b16 %v1446, %v1438
        %v1887 = vpack.c.b16 %v1447, %v1439
        %v1888 = vpack.c.b16 %v1448, %v1440
        %v1889 = vpack.c.b16 %v1449, %v1441
        %v1890 = vpack.c.b16 %v1450, %v1442
        %v1891 = vpack.c.b16 %v1451, %v1443
        %v1892 = vpack.c.b16 %v1460, %v1452
        %v1893 = vpack.c.b16 %v1461, %v1453
        %v1894 = vpack.c.b16 %v1462, %v1454
        %v1895 = vpack.c.b16 %v1463, %v1455
        %v1896 = vpack.c.b16 %v1464, %v1456
        %v1897 = vpack.c.b16 %v1465, %v1457
        %v1898 = vpack.c.b16 %v1466, %v1458
        %v1899 = vpack.c.b16 %v1467, %v1459
        %v1900 = vpack.c.b16 %v1476, %v1468
        %v1901 = vpack.c.b16 %v1477, %v1469
        %v1902 = vpack.c.b16 %v1478, %v1470
        %v1903 = vpack.c.b16 %v1479, %v1471
        %v1904 = vpack.c.b16 %v1480, %v1472
        %v1905 = vpack.c.b16 %v1481, %v1473
        %v1906 = vpack.c.b16 %v1482, %v1474
        %v1907 = vpack.c.b16 %v1483, %v1475
        %v1908 = vpack.c.b16 %v1492, %v1484
        %v1909 = vpack.c.b16 %v1493, %v1485
        %v1910 = vpack.c.b16 %v1494, %v1486
        %v1911 = vpack.c.b16 %v1495, %v1487
        %v1912 = vpack.c.b16 %v1496, %v1488
        %v1913 = vpack.c.b16 %v1497, %v1489
        %v1914 = vpack.c.b16 %v1498, %v1490
        %v1915 = vpack.c.b16 %v1499, %v1491
        %v1916 = vpack.c.b16 %v1508, %v1500
        %v1917 = vpack.c.b16 %v1509, %v1501
        %v1918 = vpack.c.b16 %v1510, %v1502
        %v1919 = vpack.c.b16 %v1511, %v1503
        %v1920 = vpack.c.b16 %v1512, %v1504
        %v1921 = vpack.c.b16 %v1513, %v1505
        %v1922 = vpack.c.b16 %v1514, %v1506
        %v1923 = vpack.c.b16 %v1515, %v1507
        %v1924 = vpack.c.b16 %v1524, %v1516
        %v1925 = vpack.c.b16 %v1525, %v1517
        %v1926 = vpack.c.b16 %v1526, %v1518
        %v1927 = vpack.c.b16 %v1527, %v1519
        %v1928 = vpack.c.b16 %v1528, %v1520
        %v1929 = vpack.c.b16 %v1529, %v1521
        %v1930 = vpack.c.b16 %v1530, %v1522
        %v1931 = vpack.c.b16 %v1531, %v1523
        %v1932 = vpack.c.b16 %v1540, %v1532
        %v1933 = vpack.c.b16 %v1541, %v1533
        %v1934 = vpack.c.b16 %v1542, %v1534
        %v1935 = vpack.c.b16 %v1543, %v1535
        %v1936 = vpack.c.b16 %v1544, %v1536
        %v1937 = vpack.c.b16 %v1545, %v1537
        %v1938 = vpack.c.b16 %v1546, %v1538
        %v1939 = vpack.c.b16 %v1547, %v1539
        %v1940 = vpack.c.b16 %v1556, %v1548
        %v1941 = vpack.c.b16 %v1557, %v1549
        %v1942 = vpack.c.b16 %v1558, %v1550
        %v1943 = vpack.c.b16 %v1559, %v1551
        %v1944 = vpack.c.b16 %v1560, %v1552
        %v1945 = vpack.c.b16 %v1561, %v1553
        %v1946 = vpack.c.b16 %v1562, %v1554
        %v1947 = vpack.c.b16 %v1563, %v1555
        %v1948 = vpack.c.b16 %v1572, %v1564
        %v1949 = vpack.c.b16 %v1573, %v1565
        %v1950 = vpack.c.b16 %v1574, %v1566
        %v1951 = vpack.c.b16 %v1575, %v1567
        %v1952 = vpack.c.b16 %v1576, %v1568
        %v1953 = vpack.c.b16 %v1577, %v1569
        %v1954 = vpack.c.b16 %v1578, %v1570
        %v1955 = vpack.c.b16 %v1579, %v1571
        %v1956 = vpack.c.b16 %v1588, %v1580
        %v1957 = vpack.c.b16 %v1589, %v1581
        %v1958 = vpack.c.b16 %v1590, %v1582
        %v1959 = vpack.c.b16 %v1591, %v1583
        %v1960 = vpack.c.b16 %v1592, %v1584
        %v1961 = vpack.c.b16 %v1593, %v1585
        %v1962 = vpack.c.b16 %v1594, %v1586
        %v1963 = vpack.c.b16 %v1595, %v1587
        %v1964 = vpack.c.b16 %v1604, %v1596
        %v1965 = vpack.c.b16 %v1605, %v1597
        %v1966 = vpack.c.b16 %v1606, %v1598
        %v1967 = vpack.c.b16 %v1607, %v1599
        %v1968 = vpack.c.b16 %v1608, %v1600
        %v1969 = vpack.c.b16 %v1609, %v1601
        %v1970 = vpack.c.b16 %v1610, %v1602
        %v1971 = vpack.c.b16 %v1611, %v1603
        %v1972 = vpack.c.b16 %v1620, %v1612
        %v1973 = vpack.c.b16 %v1621, %v1613
        %v1974 = vpack.c.b16 %v1622, %v1614
        %v1975 = vpack.c.b16 %v1623, %v1615
        %v1976 = vpack.c.b16 %v1624, %v1616
        %v1977 = vpack.c.b16 %v1625, %v1617
        %v1978 = vpack.c.b16 %v1626, %v1618
        %v1979 = vpack.c.b16 %v1627, %v1619
        %v1980 = vpack.c.b16 %v1636, %v1628
        %v1981 = vpack.c.b16 %v1637, %v1629
        %v1982 = vpack.c.b16 %v1638, %v1630
        %v1983 = vpack.c.b16 %v1639, %v1631
        %v1984 = vpack.c.b16 %v1640, %v1632
        %v1985 = vpack.c.b16 %v1641, %v1633
        %v1986 = vpack.c.b16 %v1642, %v1634
        %v1987 = vpack.c.b16 %v1643, %v1635
        %v1988 = vpack.c.b16 %v1652, %v1644
        %v1989 = vpack.c.b16 %v1653, %v1645
        %v1990 = vpack.c.b16 %v1654, %v1646
        %v1991 = vpack.c.b16 %v1655, %v1647
        %v1992 = vpack.c.b16 %v1656, %v1648
        %v1993 = vpack.c.b16 %v1657, %v1649
        %v1994 = vpack.c.b16 %v1658, %v1650
        %v1995 = vpack.c.b16 %v1659, %v1651
        %v1996 = vpack.c.b16 %v1668, %v1660
        %v1997 = vpack.c.b16 %v1669, %v1661
        %v1998 = vpack.c.b16 %v1670, %v1662
        %v1999 = vpack.c.b16 %v1671, %v1663
        %v2000 = vpack.c.b16 %v1672, %v1664
        %v2001 = vpack.c.b16 %v1673, %v1665
        %v2002 = vpack.c.b16 %v1674, %v1666
        %v2003 = vpack.c.b16 %v1675, %v1667
        %v2004 = vpack.c.b16 %v1684, %v1676
        %v2005 = vpack.c.b16 %v1685, %v1677
        %v2006 = vpack.c.b16 %v1686, %v1678
        %v2007 = vpack.c.b16 %v1687, %v1679
        %v2008 = vpack.c.b16 %v1688, %v1680
        %v2009 = vpack.c.b16 %v1689, %v1681
        %v2010 = vpack.c.b16 %v1690, %v1682
        %v2011 = vpack.c.b16 %v1691, %v1683
        %v2012 = vpack.c.b16 %v1700, %v1692
        %v2013 = vpack.c.b16 %v1701, %v1693
        %v2014 = vpack.c.b16 %v1702, %v1694
        %v2015 = vpack.c.b16 %v1703, %v1695
        %v2016 = vpack.c.b16 %v1704, %v1696
        %v2017 = vpack.c.b16 %v1705, %v1697
        %v2018 = vpack.c.b16 %v1706, %v1698
        %v2019 = vpack.c.b16 %v1707, %v1699
        %v2020 = vpack.c.b16 %v1716, %v1708
        %v2021 = vpack.c.b16 %v1717, %v1709
        %v2022 = vpack.c.b16 %v1718, %v1710
        %v2023 = vpack.c.b16 %v1719, %v1711
        %v2024 = vpack.c.b16 %v1720, %v1712
        %v2025 = vpack.c.b16 %v1721, %v1713
        %v2026 = vpack.c.b16 %v1722, %v1714
        %v2027 = vpack.c.b16 %v1723, %v1715
        %v2028 = vpack.c.b16 %v1732, %v1724
        %v2029 = vpack.c.b16 %v1733, %v1725
        %v2030 = vpack.c.b16 %v1734, %v1726
        %v2031 = vpack.c.b16 %v1735, %v1727
        %v2032 = vpack.c.b16 %v1736, %v1728
        %v2033 = vpack.c.b16 %v1737, %v1729
        %v2034 = vpack.c.b16 %v1738, %v1730
        %v2035 = vpack.c.b16 %v1739, %v1731
        %v2036 = vpack.c.b16 %v1748, %v1740
        %v2037 = vpack.c.b16 %v1749, %v1741
        %v2038 = vpack.c.b16 %v1750, %v1742
        %v2039 = vpack.c.b16 %v1751, %v1743
        %v2040 = vpack.c.b16 %v1752, %v1744
        %v2041 = vpack.c.b16 %v1753, %v1745
        %v2042 = vpack.c.b16 %v1754, %v1746
        %v2043 = vpack.c.b16 %v1755, %v1747
        %v2044 = vpack.c.b16 %v1764, %v1756
        %v2045 = vpack.c.b16 %v1765, %v1757
        %v2046 = vpack.c.b16 %v1766, %v1758
        %v2047 = vpack.c.b16 %v1767, %v1759
        %v2048 = vpack.c.b16 %v1768, %v1760
        %v2049 = vpack.c.b16 %v1769, %v1761
        %v2050 = vpack.c.b16 %v1770, %v1762
        %v2051 = vpack.c.b16 %v1771, %v1763
        %v2052 = vpack.c.b16 %v1780, %v1772
        %v2053 = vpack.c.b16 %v1781, %v1773
        %v2054 = vpack.c.b16 %v1782, %v1774
        %v2055 = vpack.c.b16 %v1783, %v1775
        %v2056 = vpack.c.b16 %v1784, %v1776
        %v2057 = vpack.c.b16 %v1785, %v1777
        %v2058 = vpack.c.b16 %v1786, %v1778
        %v2059 = vpack.c.b16 %v1787, %v1779
        %v2060 = vpack.c.b16 %v1796, %v1788
        %v2061 = vpack.c.b16 %v1797, %v1789
        %v2062 = vpack.c.b16 %v1798, %v1790
        %v2063 = vpack.c.b16 %v1799, %v1791
        %v2064 = vpack.c.b16 %v1800, %v1792
        %v2065 = vpack.c.b16 %v1801, %v1793
        %v2066 = vpack.c.b16 %v1802, %v1794
        %v2067 = vpack.c.b16 %v1803, %v1795
        %v2068 = vpack.c.b16 %v1812, %v1804
        %v2069 = vpack.c.b16 %v1813, %v1805
        %v2070 = vpack.c.b16 %v1814, %v1806
        %v2071 = vpack.c.b16 %v1815, %v1807
        %v2072 = vpack.c.b16 %v1816, %v1808
        %v2073 = vpack.c.b16 %v1817, %v1809
        %v2074 = vpack.c.b16 %v1818, %v1810
        %v2075 = vpack.c.b16 %v1819, %v1811
        %2332 = vmatprep.subr.bf16.mxu0 %v1821
        %2333 = vmatpush1.bf16.msra.mxu0 %v1820
        %2334 = vmatprep.subr.bf16.mxu0 %v1829
        %2335 = vmatpush1.bf16.msra.mxu0 %v1828
        %2336 = vmatprep.subr.bf16.mxu0 %v1837
        %2337 = vmatpush1.bf16.msra.mxu0 %v1836
        %2338 = vmatprep.subr.bf16.mxu0 %v1845
        %2339 = vmatpush1.bf16.msra.mxu0 %v1844
        %2340 = vmatprep.subr.bf16.mxu0 %v1853
        %2341 = vmatpush1.bf16.msra.mxu0 %v1852
        %2342 = vmatprep.subr.bf16.mxu0 %v1861
        %2343 = vmatpush1.bf16.msra.mxu0 %v1860
        %2344 = vmatprep.subr.bf16.mxu0 %v1869
        %2345 = vmatpush1.bf16.msra.mxu0 %v1868
        %2346 = vmatprep.subr.bf16.mxu0 %v1877
        %2347 = vmatpush1.bf16.msra.mxu0 %v1876
        %2348 = vmatprep.subr.bf16.mxu0 %v1885
        %2349 = vmatpush1.bf16.msra.mxu0 %v1884
        %2350 = vmatprep.subr.bf16.mxu0 %v1893
        %2351 = vmatpush1.bf16.msra.mxu0 %v1892
        %2352 = vmatprep.subr.bf16.mxu0 %v1901
        %2353 = vmatpush1.bf16.msra.mxu0 %v1900
        %2354 = vmatprep.subr.bf16.mxu0 %v1909
        %2355 = vmatpush1.bf16.msra.mxu0 %v1908
        %2356 = vmatprep.subr.bf16.mxu0 %v1917
        %2357 = vmatpush1.bf16.msra.mxu0 %v1916
        %2358 = vmatprep.subr.bf16.mxu0 %v1925
        %2359 = vmatpush1.bf16.msra.mxu0 %v1924
        %2360 = vmatprep.subr.bf16.mxu0 %v1933
        %2361 = vmatpush1.bf16.msra.mxu0 %v1932
        %2362 = vmatprep.subr.bf16.mxu0 %v1941
        %2363 = vmatpush1.bf16.msra.mxu0 %v1940
        %2364 = vmatprep.mubr.bf16.mxu0 %v747
        %2365 = vmatmul.mubr.bf16.gmra.mrb[0].mxu0 %v746
        %v2366 = vpop.f32.mrb[0].mxu0
        %v2367 = vadd.f32 %v1015, %v2366
        %v2368 = vpop.f32.mrb[0].mxu0
        %v2369 = vadd.f32 %v1019, %v2368
        %v2370 = vpop.f32.mrb[0].mxu0
        %v2371 = vadd.f32 %v1015, %v2370
        %v2372 = vpop.f32.mrb[0].mxu0
        %v2373 = vadd.f32 %v1019, %v2372
        %2374 = vmatprep.mubr.bf16.mxu0 %v751
        %2375 = vmatmul.mubr.bf16.gmra.mrb[0].mxu0 %v750
        %v2376 = vpop.f32.mrb[0].mxu0
        %v2377 = vadd.f32 %v1015, %v2376
        %v2378 = vpop.f32.mrb[0].mxu0
        %v2379 = vadd.f32 %v1019, %v2378
        %v2380 = vpop.f32.mrb[0].mxu0
        %v2381 = vpop.f32.mrb[0].mxu0
        %2382 = vdwg.mxu0
        %2383 = vmatprep.subr.bf16.mxu0 %v1949
        %2384 = vmatpush1.bf16.msra.mxu0 %v1948
        %2385 = vmatprep.subr.bf16.mxu0 %v1957
        %2386 = vmatpush1.bf16.msra.mxu0 %v1956
        %2387 = vmatprep.subr.bf16.mxu0 %v1965
        %2388 = vmatpush1.bf16.msra.mxu0 %v1964
        %2389 = vmatprep.subr.bf16.mxu0 %v1973
        %2390 = vmatpush1.bf16.msra.mxu0 %v1972
        %2391 = vmatprep.subr.bf16.mxu0 %v1981
        %2392 = vmatpush1.bf16.msra.mxu0 %v1980
        %2393 = vmatprep.subr.bf16.mxu0 %v1989
        %2394 = vmatpush1.bf16.msra.mxu0 %v1988
        %2395 = vmatprep.subr.bf16.mxu0 %v1997
        %2396 = vmatpush1.bf16.msra.mxu0 %v1996
        %2397 = vmatprep.subr.bf16.mxu0 %v2005
        %2398 = vmatpush1.bf16.msra.mxu0 %v2004
        %2399 = vmatprep.subr.bf16.mxu0 %v2013
        %2400 = vmatpush1.bf16.msra.mxu0 %v2012
        %2401 = vmatprep.subr.bf16.mxu0 %v2021
        %2402 = vmatpush1.bf16.msra.mxu0 %v2020
        %2403 = vmatprep.subr.bf16.mxu0 %v2029
        %2404 = vmatpush1.bf16.msra.mxu0 %v2028
        %2405 = vmatprep.subr.bf16.mxu0 %v2037
        %2406 = vmatpush1.bf16.msra.mxu0 %v2036
        %2407 = vmatprep.subr.bf16.mxu0 %v2045
        %2408 = vmatpush1.bf16.msra.mxu0 %v2044
        %2409 = vmatprep.subr.bf16.mxu0 %v2053
        %2410 = vmatpush1.bf16.msra.mxu0 %v2052
        %2411 = vmatprep.subr.bf16.mxu0 %v2061
        %2412 = vmatpush1.bf16.msra.mxu0 %v2060
        %2413 = vmatprep.subr.bf16.mxu0 %v2069
        %2414 = vmatpush1.bf16.msra.mxu0 %v2068
        %2415 = vmatprep.mubr.bf16.mxu0 %v749
        %2416 = vmatmul.mubr.bf16.gmra.mrb[0].mxu0 %v748
        %v2417 = vpop.f32.mrb[0].mxu0
        %v2418 = vadd.f32 %v2367, %v2417
        %v2419 = vpop.f32.mrb[0].mxu0
        %v2420 = vadd.f32 %v2369, %v2419
        %v2421 = vpop.f32.mrb[0].mxu0
        %v2422 = vadd.f32 %v2371, %v2421
        %v2423 = vpop.f32.mrb[0].mxu0
        %v2424 = vadd.f32 %v2373, %v2423
        %2425 = vmatprep.mubr.bf16.mxu0 %v753
        %2426 = vmatmul.mubr.bf16.gmra.mrb[0].mxu0 %v752
        %v2427 = vpop.f32.mrb[0].mxu0
        %v2428 = vadd.f32 %v2377, %v2427
        %v2429 = vpop.f32.mrb[0].mxu0
        %v2430 = vadd.f32 %v2379, %v2429
        %v2431 = vpop.f32.mrb[0].mxu0
        %v2432 = vpop.f32.mrb[0].mxu0
        %2433 = vdwg.mxu0
        %2434 = vmatprep.subr.bf16.mxu0 %v1823
        %2435 = vmatpush1.bf16.msra.mxu0 %v1822
        %2436 = vmatprep.subr.bf16.mxu0 %v1831
        %2437 = vmatpush1.bf16.msra.mxu0 %v1830
        %2438 = vmatprep.subr.bf16.mxu0 %v1839
        %2439 = vmatpush1.bf16.msra.mxu0 %v1838
        %2440 = vmatprep.subr.bf16.mxu0 %v1847
        %2441 = vmatpush1.bf16.msra.mxu0 %v1846
        %2442 = vmatprep.subr.bf16.mxu0 %v1855
        %2443 = vmatpush1.bf16.msra.mxu0 %v1854
        %2444 = vmatprep.subr.bf16.mxu0 %v1863
        %2445 = vmatpush1.bf16.msra.mxu0 %v1862
        %2446 = vmatprep.subr.bf16.mxu0 %v1871
        %2447 = vmatpush1.bf16.msra.mxu0 %v1870
        %2448 = vmatprep.subr.bf16.mxu0 %v1879
        %2449 = vmatpush1.bf16.msra.mxu0 %v1878
        %2450 = vmatprep.subr.bf16.mxu0 %v1887
        %2451 = vmatpush1.bf16.msra.mxu0 %v1886
        %2452 = vmatprep.subr.bf16.mxu0 %v1895
        %2453 = vmatpush1.bf16.msra.mxu0 %v1894
        %2454 = vmatprep.subr.bf16.mxu0 %v1903
        %2455 = vmatpush1.bf16.msra.mxu0 %v1902
        %2456 = vmatprep.subr.bf16.mxu0 %v1911
        %2457 = vmatpush1.bf16.msra.mxu0 %v1910
        %2458 = vmatprep.subr.bf16.mxu0 %v1919
        %2459 = vmatpush1.bf16.msra.mxu0 %v1918
        %2460 = vmatprep.subr.bf16.mxu0 %v1927
        %2461 = vmatpush1.bf16.msra.mxu0 %v1926
        %2462 = vmatprep.subr.bf16.mxu0 %v1935
        %2463 = vmatpush1.bf16.msra.mxu0 %v1934
        %2464 = vmatprep.subr.bf16.mxu0 %v1943
        %2465 = vmatpush1.bf16.msra.mxu0 %v1942
        %2466 = vmatprep.mubr.bf16.mxu0 %v747
        %2467 = vmatmul.mubr.bf16.gmra.mrb[0].mxu0 %v746
        %v2468 = vpop.f32.mrb[0].mxu0
        %v2469 = vadd.f32 %v1023, %v2468
        %v2470 = vpop.f32.mrb[0].mxu0
        %v2471 = vadd.f32 %v1027, %v2470
        %v2472 = vpop.f32.mrb[0].mxu0
        %v2473 = vadd.f32 %v1023, %v2472
        %v2474 = vpop.f32.mrb[0].mxu0
        %v2475 = vadd.f32 %v1027, %v2474
        %2476 = vmatprep.mubr.bf16.mxu0 %v751
        %2477 = vmatmul.mubr.bf16.gmra.mrb[0].mxu0 %v750
        %v2478 = vpop.f32.mrb[0].mxu0
        %v2479 = vadd.f32 %v1023, %v2478
        %v2480 = vpop.f32.mrb[0].mxu0
        %v2481 = vadd.f32 %v1027, %v2480
        %v2482 = vpop.f32.mrb[0].mxu0
        %v2483 = vpop.f32.mrb[0].mxu0
        %2484 = vdwg.mxu0
        %2485 = vmatprep.subr.bf16.mxu0 %v1951
        %2486 = vmatpush1.bf16.msra.mxu0 %v1950
        %2487 = vmatprep.subr.bf16.mxu0 %v1959
        %2488 = vmatpush1.bf16.msra.mxu0 %v1958
        %2489 = vmatprep.subr.bf16.mxu0 %v1967
        %2490 = vmatpush1.bf16.msra.mxu0 %v1966
        %2491 = vmatprep.subr.bf16.mxu0 %v1975
        %2492 = vmatpush1.bf16.msra.mxu0 %v1974
        %2493 = vmatprep.subr.bf16.mxu0 %v1983
        %2494 = vmatpush1.bf16.msra.mxu0 %v1982
        %2495 = vmatprep.subr.bf16.mxu0 %v1991
        %2496 = vmatpush1.bf16.msra.mxu0 %v1990
        %2497 = vmatprep.subr.bf16.mxu0 %v1999
        %2498 = vmatpush1.bf16.msra.mxu0 %v1998
        %2499 = vmatprep.subr.bf16.mxu0 %v2007
        %2500 = vmatpush1.bf16.msra.mxu0 %v2006
        %2501 = vmatprep.subr.bf16.mxu0 %v2015
        %2502 = vmatpush1.bf16.msra.mxu0 %v2014
        %2503 = vmatprep.subr.bf16.mxu0 %v2023
        %2504 = vmatpush1.bf16.msra.mxu0 %v2022
        %2505 = vmatprep.subr.bf16.mxu0 %v2031
        %2506 = vmatpush1.bf16.msra.mxu0 %v2030
        %2507 = vmatprep.subr.bf16.mxu0 %v2039
        %2508 = vmatpush1.bf16.msra.mxu0 %v2038
        %2509 = vmatprep.subr.bf16.mxu0 %v2047
        %2510 = vmatpush1.bf16.msra.mxu0 %v2046
        %2511 = vmatprep.subr.bf16.mxu0 %v2055
        %2512 = vmatpush1.bf16.msra.mxu0 %v2054
        %2513 = vmatprep.subr.bf16.mxu0 %v2063
        %2514 = vmatpush1.bf16.msra.mxu0 %v2062
        %2515 = vmatprep.subr.bf16.mxu0 %v2071
        %2516 = vmatpush1.bf16.msra.mxu0 %v2070
        %2517 = vmatprep.mubr.bf16.mxu0 %v749
        %2518 = vmatmul.mubr.bf16.gmra.mrb[0].mxu0 %v748
        %v2519 = vpop.f32.mrb[0].mxu0
        %v2520 = vadd.f32 %v2469, %v2519
        %v2521 = vpop.f32.mrb[0].mxu0
        %v2522 = vadd.f32 %v2471, %v2521
        %v2523 = vpop.f32.mrb[0].mxu0
        %v2524 = vadd.f32 %v2473, %v2523
        %v2525 = vpop.f32.mrb[0].mxu0
        %v2526 = vadd.f32 %v2475, %v2525
        %2527 = vmatprep.mubr.bf16.mxu0 %v753
        %2528 = vmatmul.mubr.bf16.gmra.mrb[0].mxu0 %v752
        %v2529 = vpop.f32.mrb[0].mxu0
        %v2530 = vadd.f32 %v2479, %v2529
        %v2531 = vpop.f32.mrb[0].mxu0
        %v2532 = vadd.f32 %v2481, %v2531
        %v2533 = vpop.f32.mrb[0].mxu0
        %v2534 = vpop.f32.mrb[0].mxu0
        %2535 = vdwg.mxu0
        %2536 = vmatprep.subr.bf16.mxu0 %v1825
        %2537 = vmatpush1.bf16.msra.mxu0 %v1824
        %2538 = vmatprep.subr.bf16.mxu0 %v1833
        %2539 = vmatpush1.bf16.msra.mxu0 %v1832
        %2540 = vmatprep.subr.bf16.mxu0 %v1841
        %2541 = vmatpush1.bf16.msra.mxu0 %v1840
        %2542 = vmatprep.subr.bf16.mxu0 %v1849
        %2543 = vmatpush1.bf16.msra.mxu0 %v1848
        %2544 = vmatprep.subr.bf16.mxu0 %v1857
        %2545 = vmatpush1.bf16.msra.mxu0 %v1856
        %2546 = vmatprep.subr.bf16.mxu0 %v1865
        %2547 = vmatpush1.bf16.msra.mxu0 %v1864
        %2548 = vmatprep.subr.bf16.mxu0 %v1873
        %2549 = vmatpush1.bf16.msra.mxu0 %v1872
        %2550 = vmatprep.subr.bf16.mxu0 %v1881
        %2551 = vmatpush1.bf16.msra.mxu0 %v1880
        %2552 = vmatprep.subr.bf16.mxu0 %v1889
        %2553 = vmatpush1.bf16.msra.mxu0 %v1888
        %2554 = vmatprep.subr.bf16.mxu0 %v1897
        %2555 = vmatpush1.bf16.msra.mxu0 %v1896
        %2556 = vmatprep.subr.bf16.mxu0 %v1905
        %2557 = vmatpush1.bf16.msra.mxu0 %v1904
        %2558 = vmatprep.subr.bf16.mxu0 %v1913
        %2559 = vmatpush1.bf16.msra.mxu0 %v1912
        %2560 = vmatprep.subr.bf16.mxu0 %v1921
        %2561 = vmatpush1.bf16.msra.mxu0 %v1920
        %2562 = vmatprep.subr.bf16.mxu0 %v1929
        %2563 = vmatpush1.bf16.msra.mxu0 %v1928
        %2564 = vmatprep.subr.bf16.mxu0 %v1937
        %2565 = vmatpush1.bf16.msra.mxu0 %v1936
        %2566 = vmatprep.subr.bf16.mxu0 %v1945
        %2567 = vmatpush1.bf16.msra.mxu0 %v1944
        %2568 = vmatprep.mubr.bf16.mxu0 %v747
        %2569 = vmatmul.mubr.bf16.gmra.mrb[0].mxu0 %v746
        %v2570 = vpop.f32.mrb[0].mxu0
        %v2571 = vadd.f32 %v1031, %v2570
        %v2572 = vpop.f32.mrb[0].mxu0
        %v2573 = vadd.f32 %v1035, %v2572
        %v2574 = vpop.f32.mrb[0].mxu0
        %v2575 = vadd.f32 %v1031, %v2574
        %v2576 = vpop.f32.mrb[0].mxu0
        %v2577 = vadd.f32 %v1035, %v2576
        %2578 = vmatprep.mubr.bf16.mxu0 %v751
        %2579 = vmatmul.mubr.bf16.gmra.mrb[0].mxu0 %v750
        %v2580 = vpop.f32.mrb[0].mxu0
        %v2581 = vadd.f32 %v1031, %v2580
        %v2582 = vpop.f32.mrb[0].mxu0
        %v2583 = vadd.f32 %v1035, %v2582
        %v2584 = vpop.f32.mrb[0].mxu0
        %v2585 = vpop.f32.mrb[0].mxu0
        %2586 = vdwg.mxu0
        %2587 = vmatprep.subr.bf16.mxu0 %v1953
        %2588 = vmatpush1.bf16.msra.mxu0 %v1952
        %2589 = vmatprep.subr.bf16.mxu0 %v1961
        %2590 = vmatpush1.bf16.msra.mxu0 %v1960
        %2591 = vmatprep.subr.bf16.mxu0 %v1969
        %2592 = vmatpush1.bf16.msra.mxu0 %v1968
        %2593 = vmatprep.subr.bf16.mxu0 %v1977
        %2594 = vmatpush1.bf16.msra.mxu0 %v1976
        %2595 = vmatprep.subr.bf16.mxu0 %v1985
        %2596 = vmatpush1.bf16.msra.mxu0 %v1984
        %2597 = vmatprep.subr.bf16.mxu0 %v1993
        %2598 = vmatpush1.bf16.msra.mxu0 %v1992
        %2599 = vmatprep.subr.bf16.mxu0 %v2001
        %2600 = vmatpush1.bf16.msra.mxu0 %v2000
        %2601 = vmatprep.subr.bf16.mxu0 %v2009
        %2602 = vmatpush1.bf16.msra.mxu0 %v2008
        %2603 = vmatprep.subr.bf16.mxu0 %v2017
        %2604 = vmatpush1.bf16.msra.mxu0 %v2016
        %2605 = vmatprep.subr.bf16.mxu0 %v2025
        %2606 = vmatpush1.bf16.msra.mxu0 %v2024
        %2607 = vmatprep.subr.bf16.mxu0 %v2033
        %2608 = vmatpush1.bf16.msra.mxu0 %v2032
        %2609 = vmatprep.subr.bf16.mxu0 %v2041
        %2610 = vmatpush1.bf16.msra.mxu0 %v2040
        %2611 = vmatprep.subr.bf16.mxu0 %v2049
        %2612 = vmatpush1.bf16.msra.mxu0 %v2048
        %2613 = vmatprep.subr.bf16.mxu0 %v2057
        %2614 = vmatpush1.bf16.msra.mxu0 %v2056
        %2615 = vmatprep.subr.bf16.mxu0 %v2065
        %2616 = vmatpush1.bf16.msra.mxu0 %v2064
        %2617 = vmatprep.subr.bf16.mxu0 %v2073
        %2618 = vmatpush1.bf16.msra.mxu0 %v2072
        %2619 = vmatprep.mubr.bf16.mxu0 %v749
        %2620 = vmatmul.mubr.bf16.gmra.mrb[0].mxu0 %v748
        %v2621 = vpop.f32.mrb[0].mxu0
        %v2622 = vadd.f32 %v2571, %v2621
        %v2623 = vpop.f32.mrb[0].mxu0
        %v2624 = vadd.f32 %v2573, %v2623
        %v2625 = vpop.f32.mrb[0].mxu0
        %v2626 = vadd.f32 %v2575, %v2625
        %v2627 = vpop.f32.mrb[0].mxu0
        %v2628 = vadd.f32 %v2577, %v2627
        %2629 = vmatprep.mubr.bf16.mxu0 %v753
        %2630 = vmatmul.mubr.bf16.gmra.mrb[0].mxu0 %v752
        %v2631 = vpop.f32.mrb[0].mxu0
        %v2632 = vadd.f32 %v2581, %v2631
        %v2633 = vpop.f32.mrb[0].mxu0
        %v2634 = vadd.f32 %v2583, %v2633
        %v2635 = vpop.f32.mrb[0].mxu0
        %v2636 = vpop.f32.mrb[0].mxu0
        %2637 = vdwg.mxu0
        %2638 = vmatprep.subr.bf16.mxu0 %v1827
        %2639 = vmatpush1.bf16.msra.mxu0 %v1826
        %2640 = vmatprep.subr.bf16.mxu0 %v1835
        %2641 = vmatpush1.bf16.msra.mxu0 %v1834
        %2642 = vmatprep.subr.bf16.mxu0 %v1843
        %2643 = vmatpush1.bf16.msra.mxu0 %v1842
        %2644 = vmatprep.subr.bf16.mxu0 %v1851
        %2645 = vmatpush1.bf16.msra.mxu0 %v1850
        %2646 = vmatprep.subr.bf16.mxu0 %v1859
        %2647 = vmatpush1.bf16.msra.mxu0 %v1858
        %2648 = vmatprep.subr.bf16.mxu0 %v1867
        %2649 = vmatpush1.bf16.msra.mxu0 %v1866
        %2650 = vmatprep.subr.bf16.mxu0 %v1875
        %2651 = vmatpush1.bf16.msra.mxu0 %v1874
        %2652 = vmatprep.subr.bf16.mxu0 %v1883
        %2653 = vmatpush1.bf16.msra.mxu0 %v1882
        %2654 = vmatprep.subr.bf16.mxu0 %v1891
        %2655 = vmatpush1.bf16.msra.mxu0 %v1890
        %2656 = vmatprep.subr.bf16.mxu0 %v1899
        %2657 = vmatpush1.bf16.msra.mxu0 %v1898
        %2658 = vmatprep.subr.bf16.mxu0 %v1907
        %2659 = vmatpush1.bf16.msra.mxu0 %v1906
        %2660 = vmatprep.subr.bf16.mxu0 %v1915
        %2661 = vmatpush1.bf16.msra.mxu0 %v1914
        %2662 = vmatprep.subr.bf16.mxu0 %v1923
        %2663 = vmatpush1.bf16.msra.mxu0 %v1922
        %2664 = vmatprep.subr.bf16.mxu0 %v1931
        %2665 = vmatpush1.bf16.msra.mxu0 %v1930
        %2666 = vmatprep.subr.bf16.mxu0 %v1939
        %2667 = vmatpush1.bf16.msra.mxu0 %v1938
        %2668 = vmatprep.subr.bf16.mxu0 %v1947
        %2669 = vmatpush1.bf16.msra.mxu0 %v1946
        %2670 = vmatprep.mubr.bf16.mxu0 %v747
        %2671 = vmatmul.mubr.bf16.gmra.mrb[0].mxu0 %v746
        %v2672 = vpop.f32.mrb[0].mxu0
        %v2673 = vadd.f32 %v1039, %v2672
        %v2674 = vpop.f32.mrb[0].mxu0
        %v2675 = vadd.f32 %v1043, %v2674
        %v2676 = vpop.f32.mrb[0].mxu0
        %v2677 = vadd.f32 %v1039, %v2676
        %v2678 = vpop.f32.mrb[0].mxu0
        %v2679 = vadd.f32 %v1043, %v2678
        %2680 = vmatprep.mubr.bf16.mxu0 %v751
        %2681 = vmatmul.mubr.bf16.gmra.mrb[0].mxu0 %v750
        %v2682 = vpop.f32.mrb[0].mxu0
        %v2683 = vadd.f32 %v1039, %v2682
        %v2684 = vpop.f32.mrb[0].mxu0
        %v2685 = vadd.f32 %v1043, %v2684
        %v2686 = vpop.f32.mrb[0].mxu0
        %v2687 = vpop.f32.mrb[0].mxu0
        %2688 = vdwg.mxu0
        %2689 = vmatprep.subr.bf16.mxu0 %v1955
        %2690 = vmatpush1.bf16.msra.mxu0 %v1954
        %2691 = vmatprep.subr.bf16.mxu0 %v1963
        %2692 = vmatpush1.bf16.msra.mxu0 %v1962
        %2693 = vmatprep.subr.bf16.mxu0 %v1971
        %2694 = vmatpush1.bf16.msra.mxu0 %v1970
        %2695 = vmatprep.subr.bf16.mxu0 %v1979
        %2696 = vmatpush1.bf16.msra.mxu0 %v1978
        %2697 = vmatprep.subr.bf16.mxu0 %v1987
        %2698 = vmatpush1.bf16.msra.mxu0 %v1986
        %2699 = vmatprep.subr.bf16.mxu0 %v1995
        %2700 = vmatpush1.bf16.msra.mxu0 %v1994
        %2701 = vmatprep.subr.bf16.mxu0 %v2003
        %2702 = vmatpush1.bf16.msra.mxu0 %v2002
        %2703 = vmatprep.subr.bf16.mxu0 %v2011
        %2704 = vmatpush1.bf16.msra.mxu0 %v2010
        %2705 = vmatprep.subr.bf16.mxu0 %v2019
        %2706 = vmatpush1.bf16.msra.mxu0 %v2018
        %2707 = vmatprep.subr.bf16.mxu0 %v2027
        %2708 = vmatpush1.bf16.msra.mxu0 %v2026
        %2709 = vmatprep.subr.bf16.mxu0 %v2035
        %2710 = vmatpush1.bf16.msra.mxu0 %v2034
        %2711 = vmatprep.subr.bf16.mxu0 %v2043
        %2712 = vmatpush1.bf16.msra.mxu0 %v2042
        %2713 = vmatprep.subr.bf16.mxu0 %v2051
        %2714 = vmatpush1.bf16.msra.mxu0 %v2050
        %2715 = vmatprep.subr.bf16.mxu0 %v2059
        %2716 = vmatpush1.bf16.msra.mxu0 %v2058
        %2717 = vmatprep.subr.bf16.mxu0 %v2067
        %2718 = vmatpush1.bf16.msra.mxu0 %v2066
        %2719 = vmatprep.subr.bf16.mxu0 %v2075
        %2720 = vmatpush1.bf16.msra.mxu0 %v2074
        %2721 = vmatprep.mubr.bf16.mxu0 %v749
        %2722 = vmatmul.mubr.bf16.gmra.mrb[0].mxu0 %v748
        %v2723 = vpop.f32.mrb[0].mxu0
        %v2724 = vadd.f32 %v2673, %v2723
        %v2725 = vpop.f32.mrb[0].mxu0
        %v2726 = vadd.f32 %v2675, %v2725
        %v2727 = vpop.f32.mrb[0].mxu0
        %v2728 = vadd.f32 %v2677, %v2727
        %v2729 = vpop.f32.mrb[0].mxu0
        %v2730 = vadd.f32 %v2679, %v2729
        %2731 = vmatprep.mubr.bf16.mxu0 %v753
        %2732 = vmatmul.mubr.bf16.gmra.mrb[0].mxu0 %v752
        %v2733 = vpop.f32.mrb[0].mxu0
        %v2734 = vadd.f32 %v2683, %v2733
        %v2735 = vpop.f32.mrb[0].mxu0
        %v2736 = vadd.f32 %v2685, %v2735
        %v2737 = vpop.f32.mrb[0].mxu0
        %v2738 = vpop.f32.mrb[0].mxu0
        %2739 = vdwg.mxu0
        %v2740 = vmax.f32 %v2418, 0.0
        %v2741 = vmax.f32 %v2420, 0.0
        %v2742 = vmax.f32 %v2520, 0.0
        %v2743 = vmax.f32 %v2522, 0.0
        %v2744 = vmax.f32 %v2622, 0.0
        %v2745 = vmax.f32 %v2624, 0.0
        %v2746 = vmax.f32 %v2724, 0.0
        %v2747 = vmax.f32 %v2726, 0.0
        %v2748 = vmax.f32 %v2422, 0.0
        %v2749 = vmax.f32 %v2424, 0.0
        %v2750 = vmax.f32 %v2524, 0.0
        %v2751 = vmax.f32 %v2526, 0.0
        %v2752 = vmax.f32 %v2626, 0.0
        %v2753 = vmax.f32 %v2628, 0.0
        %v2754 = vmax.f32 %v2728, 0.0
        %v2755 = vmax.f32 %v2730, 0.0
        %v2756 = vmax.f32 %v2428, 0.0
        %v2757 = vmax.f32 %v2430, 0.0
        %v2758 = vmax.f32 %v2530, 0.0
        %v2759 = vmax.f32 %v2532, 0.0
        %v2760 = vmax.f32 %v2632, 0.0
        %v2761 = vmax.f32 %v2634, 0.0
        %v2762 = vmax.f32 %v2734, 0.0
        %v2763 = vmax.f32 %v2736, 0.0
        %v2764 = vpack.c.bf16 %v2748, %v2740
        %v2765 = vpack.c.bf16 %v2749, %v2741
        %v2766 = vpack.c.bf16 %v2750, %v2742
        %v2767 = vpack.c.bf16 %v2751, %v2743
        %v2768 = vpack.c.bf16 %v2752, %v2744
        %v2769 = vpack.c.bf16 %v2753, %v2745
        %v2770 = vpack.c.bf16 %v2754, %v2746
        %v2771 = vpack.c.bf16 %v2755, %v2747
        %v2772 = vpack.c.bf16 %v2756, %v2756
        %v2773 = vpack.c.bf16 %v2757, %v2757
        %v2774 = vpack.c.bf16 %v2758, %v2758
        %v2775 = vpack.c.bf16 %v2759, %v2759
        %v2776 = vpack.c.bf16 %v2760, %v2760
        %v2777 = vpack.c.bf16 %v2761, %v2761
        %v2778 = vpack.c.bf16 %v2762, %v2762
        %v2779 = vpack.c.bf16 %v2763, %v2763
        %v2780 = vld [vmem:[#allocation8] sm:$0xff]
        %v2781 = vld [vmem:[#allocation8 + $0x8] sm:$0xff]
        %v2782 = vld [vmem:[#allocation8 + $0x10] sm:$0xff]
        %v2783 = vld [vmem:[#allocation8 + $0x18] sm:$0xff]
        %v2784 = vld [vmem:[#allocation8 + $0x20] sm:$0xff]
        %v2785 = vld [vmem:[#allocation8 + $0x28] sm:$0xff]
        %v2786 = vld [vmem:[#allocation8 + $0x30] sm:$0xff]
        %v2787 = vld [vmem:[#allocation8 + $0x38] sm:$0xff]
        %v2788 = vld [vmem:[#allocation8 + $0x40] sm:$0xff]
        %v2789 = vld [vmem:[#allocation8 + $0x48] sm:$0xff]
        %v2790 = vld [vmem:[#allocation8 + $0x50] sm:$0xff]
        %v2791 = vld [vmem:[#allocation8 + $0x58] sm:$0xff]
        %v2792 = vld [vmem:[#allocation8 + $0x60] sm:$0xff]
        %v2793 = vld [vmem:[#allocation8 + $0x68] sm:$0xff]
        %v2794 = vld [vmem:[#allocation8 + $0x70] sm:$0xff]
        %v2795 = vld [vmem:[#allocation8 + $0x78] sm:$0xff]
        %v2796 = vld [vmem:[#allocation8 + $0x80] sm:$0xff]
        %v2797 = vld [vmem:[#allocation8 + $0x88] sm:$0xff]
        %v2798 = vld [vmem:[#allocation8 + $0x90] sm:$0xff]
        %v2799 = vld [vmem:[#allocation8 + $0x98] sm:$0xff]
        %v2800 = vld [vmem:[#allocation8 + $0xa0] sm:$0xff]
        %v2801 = vld [vmem:[#allocation8 + $0xa8] sm:$0xff]
        %v2802 = vld [vmem:[#allocation8 + $0xb0] sm:$0xff]
        %v2803 = vld [vmem:[#allocation8 + $0xb8] sm:$0xff]
        %v2804 = vld [vmem:[#allocation8 + $0xc0] sm:$0xff]
        %v2805 = vld [vmem:[#allocation8 + $0xc8] sm:$0xff]
        %v2806 = vld [vmem:[#allocation8 + $0xd0] sm:$0xff]
        %v2807 = vld [vmem:[#allocation8 + $0xd8] sm:$0xff]
        %v2808 = vld [vmem:[#allocation8 + $0xe0] sm:$0xff]
        %v2809 = vld [vmem:[#allocation8 + $0xe8] sm:$0xff]
        %v2810 = vld [vmem:[#allocation8 + $0xf0] sm:$0xff]
        %v2811 = vld [vmem:[#allocation8 + $0xf8] sm:$0xff]
        %v2812 = vld [vmem:[#allocation8 + $0x100] sm:$0xff]
        %v2813 = vld [vmem:[#allocation8 + $0x108] sm:$0xff]
        %v2814 = vld [vmem:[#allocation8 + $0x110] sm:$0xff]
        %v2815 = vld [vmem:[#allocation8 + $0x118] sm:$0xff]
        %v2816 = vld [vmem:[#allocation8 + $0x120] sm:$0xff]
        %v2817 = vld [vmem:[#allocation8 + $0x128] sm:$0xff]
        %v2818 = vld [vmem:[#allocation8 + $0x130] sm:$0xff]
        %v2819 = vld [vmem:[#allocation8 + $0x138] sm:$0xff]
        %v2820 = vld [vmem:[#allocation8 + $0x140] sm:$0xff]
        %v2821 = vld [vmem:[#allocation8 + $0x148] sm:$0xff]
        %v2822 = vld [vmem:[#allocation8 + $0x150] sm:$0xff]
        %v2823 = vld [vmem:[#allocation8 + $0x158] sm:$0xff]
        %v2824 = vld [vmem:[#allocation8 + $0x160] sm:$0xff]
        %v2825 = vld [vmem:[#allocation8 + $0x168] sm:$0xff]
        %v2826 = vld [vmem:[#allocation8 + $0x170] sm:$0xff]
        %v2827 = vld [vmem:[#allocation8 + $0x178] sm:$0xff]
        %v2828 = vld [vmem:[#allocation8 + $0x180] sm:$0xff]
        %v2829 = vld [vmem:[#allocation8 + $0x188] sm:$0xff]
        %v2830 = vld [vmem:[#allocation8 + $0x190] sm:$0xff]
        %v2831 = vld [vmem:[#allocation8 + $0x198] sm:$0xff]
        %v2832 = vld [vmem:[#allocation8 + $0x1a0] sm:$0xff]
        %v2833 = vld [vmem:[#allocation8 + $0x1a8] sm:$0xff]
        %v2834 = vld [vmem:[#allocation8 + $0x1b0] sm:$0xff]
        %v2835 = vld [vmem:[#allocation8 + $0x1b8] sm:$0xff]
        %v2836 = vld [vmem:[#allocation8 + $0x1c0] sm:$0xff]
        %v2837 = vld [vmem:[#allocation8 + $0x1c8] sm:$0xff]
        %v2838 = vld [vmem:[#allocation8 + $0x1d0] sm:$0xff]
        %v2839 = vld [vmem:[#allocation8 + $0x1d8] sm:$0xff]
        %v2840 = vld [vmem:[#allocation8 + $0x1e0] sm:$0xff]
        %v2841 = vld [vmem:[#allocation8 + $0x1e8] sm:$0xff]
        %v2842 = vld [vmem:[#allocation8 + $0x1f0] sm:$0xff]
        %v2843 = vld [vmem:[#allocation8 + $0x1f8] sm:$0xff]
        %v2844 = vld [vmem:[#allocation8 + $0x200] sm:$0xff]
        %v2845 = vld [vmem:[#allocation8 + $0x208] sm:$0xff]
        %v2846 = vld [vmem:[#allocation8 + $0x210] sm:$0xff]
        %v2847 = vld [vmem:[#allocation8 + $0x218] sm:$0xff]
        %v2848 = vld [vmem:[#allocation8 + $0x220] sm:$0xff]
        %v2849 = vld [vmem:[#allocation8 + $0x228] sm:$0xff]
        %v2850 = vld [vmem:[#allocation8 + $0x230] sm:$0xff]
        %v2851 = vld [vmem:[#allocation8 + $0x238] sm:$0xff]
        %v2852 = vld [vmem:[#allocation8 + $0x240] sm:$0xff]
        %v2853 = vld [vmem:[#allocation8 + $0x248] sm:$0xff]
        %v2854 = vld [vmem:[#allocation8 + $0x250] sm:$0xff]
        %v2855 = vld [vmem:[#allocation8 + $0x258] sm:$0xff]
        %v2856 = vld [vmem:[#allocation8 + $0x260] sm:$0xff]
        %v2857 = vld [vmem:[#allocation8 + $0x268] sm:$0xff]
        %v2858 = vld [vmem:[#allocation8 + $0x270] sm:$0xff]
        %v2859 = vld [vmem:[#allocation8 + $0x278] sm:$0xff]
        %v2860 = vld [vmem:[#allocation8 + $0x280] sm:$0xff]
        %v2861 = vld [vmem:[#allocation8 + $0x288] sm:$0xff]
        %v2862 = vld [vmem:[#allocation8 + $0x290] sm:$0xff]
        %v2863 = vld [vmem:[#allocation8 + $0x298] sm:$0xff]
        %v2864 = vld [vmem:[#allocation8 + $0x2a0] sm:$0xff]
        %v2865 = vld [vmem:[#allocation8 + $0x2a8] sm:$0xff]
        %v2866 = vld [vmem:[#allocation8 + $0x2b0] sm:$0xff]
        %v2867 = vld [vmem:[#allocation8 + $0x2b8] sm:$0xff]
        %v2868 = vld [vmem:[#allocation8 + $0x2c0] sm:$0xff]
        %v2869 = vld [vmem:[#allocation8 + $0x2c8] sm:$0xff]
        %v2870 = vld [vmem:[#allocation8 + $0x2d0] sm:$0xff]
        %v2871 = vld [vmem:[#allocation8 + $0x2d8] sm:$0xff]
        %v2872 = vld [vmem:[#allocation8 + $0x2e0] sm:$0xff]
        %v2873 = vld [vmem:[#allocation8 + $0x2e8] sm:$0xff]
        %v2874 = vld [vmem:[#allocation8 + $0x2f0] sm:$0xff]
        %v2875 = vld [vmem:[#allocation8 + $0x2f8] sm:$0xff]
        %v2876 = vld [vmem:[#allocation8 + $0x300] sm:$0xff]
        %v2877 = vld [vmem:[#allocation8 + $0x308] sm:$0xff]
        %v2878 = vld [vmem:[#allocation8 + $0x310] sm:$0xff]
        %v2879 = vld [vmem:[#allocation8 + $0x318] sm:$0xff]
        %v2880 = vld [vmem:[#allocation8 + $0x320] sm:$0xff]
        %v2881 = vld [vmem:[#allocation8 + $0x328] sm:$0xff]
        %v2882 = vld [vmem:[#allocation8 + $0x330] sm:$0xff]
        %v2883 = vld [vmem:[#allocation8 + $0x338] sm:$0xff]
        %v2884 = vld [vmem:[#allocation8 + $0x340] sm:$0xff]
        %v2885 = vld [vmem:[#allocation8 + $0x348] sm:$0xff]
        %v2886 = vld [vmem:[#allocation8 + $0x350] sm:$0xff]
        %v2887 = vld [vmem:[#allocation8 + $0x358] sm:$0xff]
        %v2888 = vld [vmem:[#allocation8 + $0x360] sm:$0xff]
        %v2889 = vld [vmem:[#allocation8 + $0x368] sm:$0xff]
        %v2890 = vld [vmem:[#allocation8 + $0x370] sm:$0xff]
        %v2891 = vld [vmem:[#allocation8 + $0x378] sm:$0xff]
        %v2892 = vld [vmem:[#allocation8 + $0x380] sm:$0xff]
        %v2893 = vld [vmem:[#allocation8 + $0x388] sm:$0xff]
        %v2894 = vld [vmem:[#allocation8 + $0x390] sm:$0xff]
        %v2895 = vld [vmem:[#allocation8 + $0x398] sm:$0xff]
        %v2896 = vld [vmem:[#allocation8 + $0x3a0] sm:$0xff]
        %v2897 = vld [vmem:[#allocation8 + $0x3a8] sm:$0xff]
        %v2898 = vld [vmem:[#allocation8 + $0x3b0] sm:$0xff]
        %v2899 = vld [vmem:[#allocation8 + $0x3b8] sm:$0xff]
        %v2900 = vld [vmem:[#allocation8 + $0x3c0] sm:$0xff]
        %v2901 = vld [vmem:[#allocation8 + $0x3c8] sm:$0xff]
        %v2902 = vld [vmem:[#allocation8 + $0x3d0] sm:$0xff]
        %v2903 = vld [vmem:[#allocation8 + $0x3d8] sm:$0xff]
        %v2904 = vld [vmem:[#allocation8 + $0x3e0] sm:$0xff]
        %v2905 = vld [vmem:[#allocation8 + $0x3e8] sm:$0xff]
        %v2906 = vld [vmem:[#allocation8 + $0x3f0] sm:$0xff]
        %v2907 = vld [vmem:[#allocation8 + $0x3f8] sm:$0xff]
        %v2908 = vld [vmem:[%s6] sm:$0x3]
        %v2910 = vlaneseq
        %v2911 = vshrl.u32 %v2910, 7
        %v2912 = vsub.s32 0, %v2911
        %v2913 = vrot.slane %v2908, %v2912
        %v2914 = vlaneseq
        %v2915 = vshrl.u32 %v2914, 7
        %v2916 = vsub.s32 1, %v2915
        %v2917 = vrot.slane %v2908, %v2916
        %v3048 = vunpack.c.l.b16 %v2780
        %v3049 = vunpack.c.h.b16 %v2780
        %v3050 = vunpack.c.l.b16 %v2781
        %v3051 = vunpack.c.h.b16 %v2781
        %v3052 = vunpack.c.l.b16 %v2782
        %v3053 = vunpack.c.h.b16 %v2782
        %v3054 = vunpack.c.l.b16 %v2783
        %v3055 = vunpack.c.h.b16 %v2783
        %v3056 = vunpack.c.l.b16 %v2784
        %v3057 = vunpack.c.h.b16 %v2784
        %v3058 = vunpack.c.l.b16 %v2785
        %v3059 = vunpack.c.h.b16 %v2785
        %v3060 = vunpack.c.l.b16 %v2786
        %v3061 = vunpack.c.h.b16 %v2786
        %v3062 = vunpack.c.l.b16 %v2787
        %v3063 = vunpack.c.h.b16 %v2787
        %v3064 = vunpack.c.l.b16 %v2788
        %v3065 = vunpack.c.h.b16 %v2788
        %v3066 = vunpack.c.l.b16 %v2789
        %v3067 = vunpack.c.h.b16 %v2789
        %v3068 = vunpack.c.l.b16 %v2790
        %v3069 = vunpack.c.h.b16 %v2790
        %v3070 = vunpack.c.l.b16 %v2791
        %v3071 = vunpack.c.h.b16 %v2791
        %v3072 = vunpack.c.l.b16 %v2792
        %v3073 = vunpack.c.h.b16 %v2792
        %v3074 = vunpack.c.l.b16 %v2793
        %v3075 = vunpack.c.h.b16 %v2793
        %v3076 = vunpack.c.l.b16 %v2794
        %v3077 = vunpack.c.h.b16 %v2794
        %v3078 = vunpack.c.l.b16 %v2795
        %v3079 = vunpack.c.h.b16 %v2795
        %v3080 = vunpack.c.l.b16 %v2796
        %v3081 = vunpack.c.h.b16 %v2796
        %v3082 = vunpack.c.l.b16 %v2797
        %v3083 = vunpack.c.h.b16 %v2797
        %v3084 = vunpack.c.l.b16 %v2798
        %v3085 = vunpack.c.h.b16 %v2798
        %v3086 = vunpack.c.l.b16 %v2799
        %v3087 = vunpack.c.h.b16 %v2799
        %v3088 = vunpack.c.l.b16 %v2800
        %v3089 = vunpack.c.h.b16 %v2800
        %v3090 = vunpack.c.l.b16 %v2801
        %v3091 = vunpack.c.h.b16 %v2801
        %v3092 = vunpack.c.l.b16 %v2802
        %v3093 = vunpack.c.h.b16 %v2802
        %v3094 = vunpack.c.l.b16 %v2803
        %v3095 = vunpack.c.h.b16 %v2803
        %v3096 = vunpack.c.l.b16 %v2804
        %v3097 = vunpack.c.h.b16 %v2804
        %v3098 = vunpack.c.l.b16 %v2805
        %v3099 = vunpack.c.h.b16 %v2805
        %v3100 = vunpack.c.l.b16 %v2806
        %v3101 = vunpack.c.h.b16 %v2806
        %v3102 = vunpack.c.l.b16 %v2807
        %v3103 = vunpack.c.h.b16 %v2807
        %v3104 = vunpack.c.l.b16 %v2808
        %v3105 = vunpack.c.h.b16 %v2808
        %v3106 = vunpack.c.l.b16 %v2809
        %v3107 = vunpack.c.h.b16 %v2809
        %v3108 = vunpack.c.l.b16 %v2810
        %v3109 = vunpack.c.h.b16 %v2810
        %v3110 = vunpack.c.l.b16 %v2811
        %v3111 = vunpack.c.h.b16 %v2811
        %v3112 = vunpack.c.l.b16 %v2812
        %v3113 = vunpack.c.h.b16 %v2812
        %v3114 = vunpack.c.l.b16 %v2813
        %v3115 = vunpack.c.h.b16 %v2813
        %v3116 = vunpack.c.l.b16 %v2814
        %v3117 = vunpack.c.h.b16 %v2814
        %v3118 = vunpack.c.l.b16 %v2815
        %v3119 = vunpack.c.h.b16 %v2815
        %v3120 = vunpack.c.l.b16 %v2816
        %v3121 = vunpack.c.h.b16 %v2816
        %v3122 = vunpack.c.l.b16 %v2817
        %v3123 = vunpack.c.h.b16 %v2817
        %v3124 = vunpack.c.l.b16 %v2818
        %v3125 = vunpack.c.h.b16 %v2818
        %v3126 = vunpack.c.l.b16 %v2819
        %v3127 = vunpack.c.h.b16 %v2819
        %v3128 = vunpack.c.l.b16 %v2820
        %v3129 = vunpack.c.h.b16 %v2820
        %v3130 = vunpack.c.l.b16 %v2821
        %v3131 = vunpack.c.h.b16 %v2821
        %v3132 = vunpack.c.l.b16 %v2822
        %v3133 = vunpack.c.h.b16 %v2822
        %v3134 = vunpack.c.l.b16 %v2823
        %v3135 = vunpack.c.h.b16 %v2823
        %v3136 = vunpack.c.l.b16 %v2824
        %v3137 = vunpack.c.h.b16 %v2824
        %v3138 = vunpack.c.l.b16 %v2825
        %v3139 = vunpack.c.h.b16 %v2825
        %v3140 = vunpack.c.l.b16 %v2826
        %v3141 = vunpack.c.h.b16 %v2826
        %v3142 = vunpack.c.l.b16 %v2827
        %v3143 = vunpack.c.h.b16 %v2827
        %v3144 = vunpack.c.l.b16 %v2828
        %v3145 = vunpack.c.h.b16 %v2828
        %v3146 = vunpack.c.l.b16 %v2829
        %v3147 = vunpack.c.h.b16 %v2829
        %v3148 = vunpack.c.l.b16 %v2830
        %v3149 = vunpack.c.h.b16 %v2830
        %v3150 = vunpack.c.l.b16 %v2831
        %v3151 = vunpack.c.h.b16 %v2831
        %v3152 = vunpack.c.l.b16 %v2832
        %v3153 = vunpack.c.h.b16 %v2832
        %v3154 = vunpack.c.l.b16 %v2833
        %v3155 = vunpack.c.h.b16 %v2833
        %v3156 = vunpack.c.l.b16 %v2834
        %v3157 = vunpack.c.h.b16 %v2834
        %v3158 = vunpack.c.l.b16 %v2835
        %v3159 = vunpack.c.h.b16 %v2835
        %v3160 = vunpack.c.l.b16 %v2836
        %v3161 = vunpack.c.h.b16 %v2836
        %v3162 = vunpack.c.l.b16 %v2837
        %v3163 = vunpack.c.h.b16 %v2837
        %v3164 = vunpack.c.l.b16 %v2838
        %v3165 = vunpack.c.h.b16 %v2838
        %v3166 = vunpack.c.l.b16 %v2839
        %v3167 = vunpack.c.h.b16 %v2839
        %v3168 = vunpack.c.l.b16 %v2840
        %v3169 = vunpack.c.h.b16 %v2840
        %v3170 = vunpack.c.l.b16 %v2841
        %v3171 = vunpack.c.h.b16 %v2841
        %v3172 = vunpack.c.l.b16 %v2842
        %v3173 = vunpack.c.h.b16 %v2842
        %v3174 = vunpack.c.l.b16 %v2843
        %v3175 = vunpack.c.h.b16 %v2843
        %v3176 = vunpack.c.l.b16 %v2844
        %v3177 = vunpack.c.h.b16 %v2844
        %v3178 = vunpack.c.l.b16 %v2845
        %v3179 = vunpack.c.h.b16 %v2845
        %v3180 = vunpack.c.l.b16 %v2846
        %v3181 = vunpack.c.h.b16 %v2846
        %v3182 = vunpack.c.l.b16 %v2847
        %v3183 = vunpack.c.h.b16 %v2847
        %v3184 = vunpack.c.l.b16 %v2848
        %v3185 = vunpack.c.h.b16 %v2848
        %v3186 = vunpack.c.l.b16 %v2849
        %v3187 = vunpack.c.h.b16 %v2849
        %v3188 = vunpack.c.l.b16 %v2850
        %v3189 = vunpack.c.h.b16 %v2850
        %v3190 = vunpack.c.l.b16 %v2851
        %v3191 = vunpack.c.h.b16 %v2851
        %v3192 = vunpack.c.l.b16 %v2852
        %v3193 = vunpack.c.h.b16 %v2852
        %v3194 = vunpack.c.l.b16 %v2853
        %v3195 = vunpack.c.h.b16 %v2853
        %v3196 = vunpack.c.l.b16 %v2854
        %v3197 = vunpack.c.h.b16 %v2854
        %v3198 = vunpack.c.l.b16 %v2855
        %v3199 = vunpack.c.h.b16 %v2855
        %v3200 = vunpack.c.l.b16 %v2856
        %v3201 = vunpack.c.h.b16 %v2856
        %v3202 = vunpack.c.l.b16 %v2857
        %v3203 = vunpack.c.h.b16 %v2857
        %v3204 = vunpack.c.l.b16 %v2858
        %v3205 = vunpack.c.h.b16 %v2858
        %v3206 = vunpack.c.l.b16 %v2859
        %v3207 = vunpack.c.h.b16 %v2859
        %v3208 = vunpack.c.l.b16 %v2860
        %v3209 = vunpack.c.h.b16 %v2860
        %v3210 = vunpack.c.l.b16 %v2861
        %v3211 = vunpack.c.h.b16 %v2861
        %v3212 = vunpack.c.l.b16 %v2862
        %v3213 = vunpack.c.h.b16 %v2862
        %v3214 = vunpack.c.l.b16 %v2863
        %v3215 = vunpack.c.h.b16 %v2863
        %v3216 = vunpack.c.l.b16 %v2864
        %v3217 = vunpack.c.h.b16 %v2864
        %v3218 = vunpack.c.l.b16 %v2865
        %v3219 = vunpack.c.h.b16 %v2865
        %v3220 = vunpack.c.l.b16 %v2866
        %v3221 = vunpack.c.h.b16 %v2866
        %v3222 = vunpack.c.l.b16 %v2867
        %v3223 = vunpack.c.h.b16 %v2867
        %v3224 = vunpack.c.l.b16 %v2868
        %v3225 = vunpack.c.h.b16 %v2868
        %v3226 = vunpack.c.l.b16 %v2869
        %v3227 = vunpack.c.h.b16 %v2869
        %v3228 = vunpack.c.l.b16 %v2870
        %v3229 = vunpack.c.h.b16 %v2870
        %v3230 = vunpack.c.l.b16 %v2871
        %v3231 = vunpack.c.h.b16 %v2871
        %v3232 = vunpack.c.l.b16 %v2872
        %v3233 = vunpack.c.h.b16 %v2872
        %v3234 = vunpack.c.l.b16 %v2873
        %v3235 = vunpack.c.h.b16 %v2873
        %v3236 = vunpack.c.l.b16 %v2874
        %v3237 = vunpack.c.h.b16 %v2874
        %v3238 = vunpack.c.l.b16 %v2875
        %v3239 = vunpack.c.h.b16 %v2875
        %v3240 = vunpack.c.l.b16 %v2876
        %v3241 = vunpack.c.h.b16 %v2876
        %v3242 = vunpack.c.l.b16 %v2877
        %v3243 = vunpack.c.h.b16 %v2877
        %v3244 = vunpack.c.l.b16 %v2878
        %v3245 = vunpack.c.h.b16 %v2878
        %v3246 = vunpack.c.l.b16 %v2879
        %v3247 = vunpack.c.h.b16 %v2879
        %v3248 = vunpack.c.l.b16 %v2880
        %v3249 = vunpack.c.h.b16 %v2880
        %v3250 = vunpack.c.l.b16 %v2881
        %v3251 = vunpack.c.h.b16 %v2881
        %v3252 = vunpack.c.l.b16 %v2882
        %v3253 = vunpack.c.h.b16 %v2882
        %v3254 = vunpack.c.l.b16 %v2883
        %v3255 = vunpack.c.h.b16 %v2883
        %v3256 = vunpack.c.l.b16 %v2884
        %v3257 = vunpack.c.h.b16 %v2884
        %v3258 = vunpack.c.l.b16 %v2885
        %v3259 = vunpack.c.h.b16 %v2885
        %v3260 = vunpack.c.l.b16 %v2886
        %v3261 = vunpack.c.h.b16 %v2886
        %v3262 = vunpack.c.l.b16 %v2887
        %v3263 = vunpack.c.h.b16 %v2887
        %v3264 = vunpack.c.l.b16 %v2888
        %v3265 = vunpack.c.h.b16 %v2888
        %v3266 = vunpack.c.l.b16 %v2889
        %v3267 = vunpack.c.h.b16 %v2889
        %v3268 = vunpack.c.l.b16 %v2890
        %v3269 = vunpack.c.h.b16 %v2890
        %v3270 = vunpack.c.l.b16 %v2891
        %v3271 = vunpack.c.h.b16 %v2891
        %v3272 = vunpack.c.l.b16 %v2892
        %v3273 = vunpack.c.h.b16 %v2892
        %v3274 = vunpack.c.l.b16 %v2893
        %v3275 = vunpack.c.h.b16 %v2893
        %v3276 = vunpack.c.l.b16 %v2894
        %v3277 = vunpack.c.h.b16 %v2894
        %v3278 = vunpack.c.l.b16 %v2895
        %v3279 = vunpack.c.h.b16 %v2895
        %v3280 = vunpack.c.l.b16 %v2896
        %v3281 = vunpack.c.h.b16 %v2896
        %v3282 = vunpack.c.l.b16 %v2897
        %v3283 = vunpack.c.h.b16 %v2897
        %v3284 = vunpack.c.l.b16 %v2898
        %v3285 = vunpack.c.h.b16 %v2898
        %v3286 = vunpack.c.l.b16 %v2899
        %v3287 = vunpack.c.h.b16 %v2899
        %v3288 = vunpack.c.l.b16 %v2900
        %v3289 = vunpack.c.h.b16 %v2900
        %v3290 = vunpack.c.l.b16 %v2901
        %v3291 = vunpack.c.h.b16 %v2901
        %v3292 = vunpack.c.l.b16 %v2902
        %v3293 = vunpack.c.h.b16 %v2902
        %v3294 = vunpack.c.l.b16 %v2903
        %v3295 = vunpack.c.h.b16 %v2903
        %v3296 = vunpack.c.l.b16 %v2904
        %v3297 = vunpack.c.h.b16 %v2904
        %v3298 = vunpack.c.l.b16 %v2905
        %v3299 = vunpack.c.h.b16 %v2905
        %v3300 = vunpack.c.l.b16 %v2906
        %v3301 = vunpack.c.h.b16 %v2906
        %v3302 = vunpack.c.l.b16 %v2907
        %v3303 = vunpack.c.h.b16 %v2907
        %v3304 = vpack.c.b16 %v3050, %v3048
        %v3305 = vpack.c.b16 %v3051, %v3049
        %v3306 = vpack.c.b16 %v3054, %v3052
        %v3307 = vpack.c.b16 %v3055, %v3053
        %v3308 = vpack.c.b16 %v3058, %v3056
        %v3309 = vpack.c.b16 %v3059, %v3057
        %v3310 = vpack.c.b16 %v3062, %v3060
        %v3311 = vpack.c.b16 %v3063, %v3061
        %v3312 = vpack.c.b16 %v3066, %v3064
        %v3313 = vpack.c.b16 %v3067, %v3065
        %v3314 = vpack.c.b16 %v3070, %v3068
        %v3315 = vpack.c.b16 %v3071, %v3069
        %v3316 = vpack.c.b16 %v3074, %v3072
        %v3317 = vpack.c.b16 %v3075, %v3073
        %v3318 = vpack.c.b16 %v3078, %v3076
        %v3319 = vpack.c.b16 %v3079, %v3077
        %v3320 = vpack.c.b16 %v3082, %v3080
        %v3321 = vpack.c.b16 %v3083, %v3081
        %v3322 = vpack.c.b16 %v3086, %v3084
        %v3323 = vpack.c.b16 %v3087, %v3085
        %v3324 = vpack.c.b16 %v3090, %v3088
        %v3325 = vpack.c.b16 %v3091, %v3089
        %v3326 = vpack.c.b16 %v3094, %v3092
        %v3327 = vpack.c.b16 %v3095, %v3093
        %v3328 = vpack.c.b16 %v3098, %v3096
        %v3329 = vpack.c.b16 %v3099, %v3097
        %v3330 = vpack.c.b16 %v3102, %v3100
        %v3331 = vpack.c.b16 %v3103, %v3101
        %v3332 = vpack.c.b16 %v3106, %v3104
        %v3333 = vpack.c.b16 %v3107, %v3105
        %v3334 = vpack.c.b16 %v3110, %v3108
        %v3335 = vpack.c.b16 %v3111, %v3109
        %v3336 = vpack.c.b16 %v3114, %v3112
        %v3337 = vpack.c.b16 %v3115, %v3113
        %v3338 = vpack.c.b16 %v3118, %v3116
        %v3339 = vpack.c.b16 %v3119, %v3117
        %v3340 = vpack.c.b16 %v3122, %v3120
        %v3341 = vpack.c.b16 %v3123, %v3121
        %v3342 = vpack.c.b16 %v3126, %v3124
        %v3343 = vpack.c.b16 %v3127, %v3125
        %v3344 = vpack.c.b16 %v3130, %v3128
        %v3345 = vpack.c.b16 %v3131, %v3129
        %v3346 = vpack.c.b16 %v3134, %v3132
        %v3347 = vpack.c.b16 %v3135, %v3133
        %v3348 = vpack.c.b16 %v3138, %v3136
        %v3349 = vpack.c.b16 %v3139, %v3137
        %v3350 = vpack.c.b16 %v3142, %v3140
        %v3351 = vpack.c.b16 %v3143, %v3141
        %v3352 = vpack.c.b16 %v3146, %v3144
        %v3353 = vpack.c.b16 %v3147, %v3145
        %v3354 = vpack.c.b16 %v3150, %v3148
        %v3355 = vpack.c.b16 %v3151, %v3149
        %v3356 = vpack.c.b16 %v3154, %v3152
        %v3357 = vpack.c.b16 %v3155, %v3153
        %v3358 = vpack.c.b16 %v3158, %v3156
        %v3359 = vpack.c.b16 %v3159, %v3157
        %v3360 = vpack.c.b16 %v3162, %v3160
        %v3361 = vpack.c.b16 %v3163, %v3161
        %v3362 = vpack.c.b16 %v3166, %v3164
        %v3363 = vpack.c.b16 %v3167, %v3165
        %v3364 = vpack.c.b16 %v3170, %v3168
        %v3365 = vpack.c.b16 %v3171, %v3169
        %v3366 = vpack.c.b16 %v3174, %v3172
        %v3367 = vpack.c.b16 %v3175, %v3173
        %v3368 = vpack.c.b16 %v3178, %v3176
        %v3369 = vpack.c.b16 %v3179, %v3177
        %v3370 = vpack.c.b16 %v3182, %v3180
        %v3371 = vpack.c.b16 %v3183, %v3181
        %v3372 = vpack.c.b16 %v3186, %v3184
        %v3373 = vpack.c.b16 %v3187, %v3185
        %v3374 = vpack.c.b16 %v3190, %v3188
        %v3375 = vpack.c.b16 %v3191, %v3189
        %v3376 = vpack.c.b16 %v3194, %v3192
        %v3377 = vpack.c.b16 %v3195, %v3193
        %v3378 = vpack.c.b16 %v3198, %v3196
        %v3379 = vpack.c.b16 %v3199, %v3197
        %v3380 = vpack.c.b16 %v3202, %v3200
        %v3381 = vpack.c.b16 %v3203, %v3201
        %v3382 = vpack.c.b16 %v3206, %v3204
        %v3383 = vpack.c.b16 %v3207, %v3205
        %v3384 = vpack.c.b16 %v3210, %v3208
        %v3385 = vpack.c.b16 %v3211, %v3209
        %v3386 = vpack.c.b16 %v3214, %v3212
        %v3387 = vpack.c.b16 %v3215, %v3213
        %v3388 = vpack.c.b16 %v3218, %v3216
        %v3389 = vpack.c.b16 %v3219, %v3217
        %v3390 = vpack.c.b16 %v3222, %v3220
        %v3391 = vpack.c.b16 %v3223, %v3221
        %v3392 = vpack.c.b16 %v3226, %v3224
        %v3393 = vpack.c.b16 %v3227, %v3225
        %v3394 = vpack.c.b16 %v3230, %v3228
        %v3395 = vpack.c.b16 %v3231, %v3229
        %v3396 = vpack.c.b16 %v3234, %v3232
        %v3397 = vpack.c.b16 %v3235, %v3233
        %v3398 = vpack.c.b16 %v3238, %v3236
        %v3399 = vpack.c.b16 %v3239, %v3237
        %v3400 = vpack.c.b16 %v3242, %v3240
        %v3401 = vpack.c.b16 %v3243, %v3241
        %v3402 = vpack.c.b16 %v3246, %v3244
        %v3403 = vpack.c.b16 %v3247, %v3245
        %v3404 = vpack.c.b16 %v3250, %v3248
        %v3405 = vpack.c.b16 %v3251, %v3249
        %v3406 = vpack.c.b16 %v3254, %v3252
        %v3407 = vpack.c.b16 %v3255, %v3253
        %v3408 = vpack.c.b16 %v3258, %v3256
        %v3409 = vpack.c.b16 %v3259, %v3257
        %v3410 = vpack.c.b16 %v3262, %v3260
        %v3411 = vpack.c.b16 %v3263, %v3261
        %v3412 = vpack.c.b16 %v3266, %v3264
        %v3413 = vpack.c.b16 %v3267, %v3265
        %v3414 = vpack.c.b16 %v3270, %v3268
        %v3415 = vpack.c.b16 %v3271, %v3269
        %v3416 = vpack.c.b16 %v3274, %v3272
        %v3417 = vpack.c.b16 %v3275, %v3273
        %v3418 = vpack.c.b16 %v3278, %v3276
        %v3419 = vpack.c.b16 %v3279, %v3277
        %v3420 = vpack.c.b16 %v3282, %v3280
        %v3421 = vpack.c.b16 %v3283, %v3281
        %v3422 = vpack.c.b16 %v3286, %v3284
        %v3423 = vpack.c.b16 %v3287, %v3285
        %v3424 = vpack.c.b16 %v3290, %v3288
        %v3425 = vpack.c.b16 %v3291, %v3289
        %v3426 = vpack.c.b16 %v3294, %v3292
        %v3427 = vpack.c.b16 %v3295, %v3293
        %v3428 = vpack.c.b16 %v3298, %v3296
        %v3429 = vpack.c.b16 %v3299, %v3297
        %v3430 = vpack.c.b16 %v3302, %v3300
        %v3431 = vpack.c.b16 %v3303, %v3301
        %3560 = vmatprep.subr.bf16.mxu0 %v3305
        %3561 = vmatpush1.bf16.msra.mxu0 %v3304
        %3562 = vmatprep.subr.bf16.mxu0 %v3307
        %3563 = vmatpush1.bf16.msra.mxu0 %v3306
        %3564 = vmatprep.subr.bf16.mxu0 %v3309
        %3565 = vmatpush1.bf16.msra.mxu0 %v3308
        %3566 = vmatprep.subr.bf16.mxu0 %v3311
        %3567 = vmatpush1.bf16.msra.mxu0 %v3310
        %3568 = vmatprep.subr.bf16.mxu0 %v3313
        %3569 = vmatpush1.bf16.msra.mxu0 %v3312
        %3570 = vmatprep.subr.bf16.mxu0 %v3315
        %3571 = vmatpush1.bf16.msra.mxu0 %v3314
        %3572 = vmatprep.subr.bf16.mxu0 %v3317
        %3573 = vmatpush1.bf16.msra.mxu0 %v3316
        %3574 = vmatprep.subr.bf16.mxu0 %v3319
        %3575 = vmatpush1.bf16.msra.mxu0 %v3318
        %3576 = vmatprep.subr.bf16.mxu0 %v3321
        %3577 = vmatpush1.bf16.msra.mxu0 %v3320
        %3578 = vmatprep.subr.bf16.mxu0 %v3323
        %3579 = vmatpush1.bf16.msra.mxu0 %v3322
        %3580 = vmatprep.subr.bf16.mxu0 %v3325
        %3581 = vmatpush1.bf16.msra.mxu0 %v3324
        %3582 = vmatprep.subr.bf16.mxu0 %v3327
        %3583 = vmatpush1.bf16.msra.mxu0 %v3326
        %3584 = vmatprep.subr.bf16.mxu0 %v3329
        %3585 = vmatpush1.bf16.msra.mxu0 %v3328
        %3586 = vmatprep.subr.bf16.mxu0 %v3331
        %3587 = vmatpush1.bf16.msra.mxu0 %v3330
        %3588 = vmatprep.subr.bf16.mxu0 %v3333
        %3589 = vmatpush1.bf16.msra.mxu0 %v3332
        %3590 = vmatprep.subr.bf16.mxu0 %v3335
        %3591 = vmatpush1.bf16.msra.mxu0 %v3334
        %3592 = vmatprep.mubr.bf16.mxu0 %v2765
        %3593 = vmatmul.mubr.bf16.gmra.mrb[0].mxu0 %v2764
        %v3594 = vpop.f32.mrb[0].mxu0
        %v3595 = vadd.f32 %v2913, %v3594
        %v3596 = vpop.f32.mrb[0].mxu0
        %v3597 = vadd.f32 %v2917, %v3596
        %v3598 = vpop.f32.mrb[0].mxu0
        %v3599 = vadd.f32 %v2913, %v3598
        %v3600 = vpop.f32.mrb[0].mxu0
        %v3601 = vadd.f32 %v2917, %v3600
        %3602 = vmatprep.mubr.bf16.mxu0 %v2773
        %3603 = vmatmul.mubr.bf16.gmra.mrb[0].mxu0 %v2772
        %v3604 = vpop.f32.mrb[0].mxu0
        %v3605 = vadd.f32 %v2913, %v3604
        %v3606 = vpop.f32.mrb[0].mxu0
        %v3607 = vadd.f32 %v2917, %v3606
        %v3608 = vpop.f32.mrb[0].mxu0
        %v3609 = vpop.f32.mrb[0].mxu0
        %3610 = vdwg.mxu0
        %3611 = vmatprep.subr.bf16.mxu0 %v3337
        %3612 = vmatpush1.bf16.msra.mxu0 %v3336
        %3613 = vmatprep.subr.bf16.mxu0 %v3339
        %3614 = vmatpush1.bf16.msra.mxu0 %v3338
        %3615 = vmatprep.subr.bf16.mxu0 %v3341
        %3616 = vmatpush1.bf16.msra.mxu0 %v3340
        %3617 = vmatprep.subr.bf16.mxu0 %v3343
        %3618 = vmatpush1.bf16.msra.mxu0 %v3342
        %3619 = vmatprep.subr.bf16.mxu0 %v3345
        %3620 = vmatpush1.bf16.msra.mxu0 %v3344
        %3621 = vmatprep.subr.bf16.mxu0 %v3347
        %3622 = vmatpush1.bf16.msra.mxu0 %v3346
        %3623 = vmatprep.subr.bf16.mxu0 %v3349
        %3624 = vmatpush1.bf16.msra.mxu0 %v3348
        %3625 = vmatprep.subr.bf16.mxu0 %v3351
        %3626 = vmatpush1.bf16.msra.mxu0 %v3350
        %3627 = vmatprep.subr.bf16.mxu0 %v3353
        %3628 = vmatpush1.bf16.msra.mxu0 %v3352
        %3629 = vmatprep.subr.bf16.mxu0 %v3355
        %3630 = vmatpush1.bf16.msra.mxu0 %v3354
        %3631 = vmatprep.subr.bf16.mxu0 %v3357
        %3632 = vmatpush1.bf16.msra.mxu0 %v3356
        %3633 = vmatprep.subr.bf16.mxu0 %v3359
        %3634 = vmatpush1.bf16.msra.mxu0 %v3358
        %3635 = vmatprep.subr.bf16.mxu0 %v3361
        %3636 = vmatpush1.bf16.msra.mxu0 %v3360
        %3637 = vmatprep.subr.bf16.mxu0 %v3363
        %3638 = vmatpush1.bf16.msra.mxu0 %v3362
        %3639 = vmatprep.subr.bf16.mxu0 %v3365
        %3640 = vmatpush1.bf16.msra.mxu0 %v3364
        %3641 = vmatprep.subr.bf16.mxu0 %v3367
        %3642 = vmatpush1.bf16.msra.mxu0 %v3366
        %3643 = vmatprep.mubr.bf16.mxu0 %v2767
        %3644 = vmatmul.mubr.bf16.gmra.mrb[0].mxu0 %v2766
        %v3645 = vpop.f32.mrb[0].mxu0
        %v3646 = vadd.f32 %v3595, %v3645
        %v3647 = vpop.f32.mrb[0].mxu0
        %v3648 = vadd.f32 %v3597, %v3647
        %v3649 = vpop.f32.mrb[0].mxu0
        %v3650 = vadd.f32 %v3599, %v3649
        %v3651 = vpop.f32.mrb[0].mxu0
        %v3652 = vadd.f32 %v3601, %v3651
        %3653 = vmatprep.mubr.bf16.mxu0 %v2775
        %3654 = vmatmul.mubr.bf16.gmra.mrb[0].mxu0 %v2774
        %v3655 = vpop.f32.mrb[0].mxu0
        %v3656 = vadd.f32 %v3605, %v3655
        %v3657 = vpop.f32.mrb[0].mxu0
        %v3658 = vadd.f32 %v3607, %v3657
        %v3659 = vpop.f32.mrb[0].mxu0
        %v3660 = vpop.f32.mrb[0].mxu0
        %3661 = vdwg.mxu0
        %3662 = vmatprep.subr.bf16.mxu0 %v3369
        %3663 = vmatpush1.bf16.msra.mxu0 %v3368
        %3664 = vmatprep.subr.bf16.mxu0 %v3371
        %3665 = vmatpush1.bf16.msra.mxu0 %v3370
        %3666 = vmatprep.subr.bf16.mxu0 %v3373
        %3667 = vmatpush1.bf16.msra.mxu0 %v3372
        %3668 = vmatprep.subr.bf16.mxu0 %v3375
        %3669 = vmatpush1.bf16.msra.mxu0 %v3374
        %3670 = vmatprep.subr.bf16.mxu0 %v3377
        %3671 = vmatpush1.bf16.msra.mxu0 %v3376
        %3672 = vmatprep.subr.bf16.mxu0 %v3379
        %3673 = vmatpush1.bf16.msra.mxu0 %v3378
        %3674 = vmatprep.subr.bf16.mxu0 %v3381
        %3675 = vmatpush1.bf16.msra.mxu0 %v3380
        %3676 = vmatprep.subr.bf16.mxu0 %v3383
        %3677 = vmatpush1.bf16.msra.mxu0 %v3382
        %3678 = vmatprep.subr.bf16.mxu0 %v3385
        %3679 = vmatpush1.bf16.msra.mxu0 %v3384
        %3680 = vmatprep.subr.bf16.mxu0 %v3387
        %3681 = vmatpush1.bf16.msra.mxu0 %v3386
        %3682 = vmatprep.subr.bf16.mxu0 %v3389
        %3683 = vmatpush1.bf16.msra.mxu0 %v3388
        %3684 = vmatprep.subr.bf16.mxu0 %v3391
        %3685 = vmatpush1.bf16.msra.mxu0 %v3390
        %3686 = vmatprep.subr.bf16.mxu0 %v3393
        %3687 = vmatpush1.bf16.msra.mxu0 %v3392
        %3688 = vmatprep.subr.bf16.mxu0 %v3395
        %3689 = vmatpush1.bf16.msra.mxu0 %v3394
        %3690 = vmatprep.subr.bf16.mxu0 %v3397
        %3691 = vmatpush1.bf16.msra.mxu0 %v3396
        %3692 = vmatprep.subr.bf16.mxu0 %v3399
        %3693 = vmatpush1.bf16.msra.mxu0 %v3398
        %3694 = vmatprep.mubr.bf16.mxu0 %v2769
        %3695 = vmatmul.mubr.bf16.gmra.mrb[0].mxu0 %v2768
        %v3696 = vpop.f32.mrb[0].mxu0
        %v3697 = vadd.f32 %v3646, %v3696
        %v3698 = vpop.f32.mrb[0].mxu0
        %v3699 = vadd.f32 %v3648, %v3698
        %v3700 = vpop.f32.mrb[0].mxu0
        %v3701 = vadd.f32 %v3650, %v3700
        %v3702 = vpop.f32.mrb[0].mxu0
        %v3703 = vadd.f32 %v3652, %v3702
        %3704 = vmatprep.mubr.bf16.mxu0 %v2777
        %3705 = vmatmul.mubr.bf16.gmra.mrb[0].mxu0 %v2776
        %v3706 = vpop.f32.mrb[0].mxu0
        %v3707 = vadd.f32 %v3656, %v3706
        %v3708 = vpop.f32.mrb[0].mxu0
        %v3709 = vadd.f32 %v3658, %v3708
        %v3710 = vpop.f32.mrb[0].mxu0
        %v3711 = vpop.f32.mrb[0].mxu0
        %3712 = vdwg.mxu0
        %3713 = vmatprep.subr.bf16.mxu0 %v3401
        %3714 = vmatpush1.bf16.msra.mxu0 %v3400
        %3715 = vmatprep.subr.bf16.mxu0 %v3403
        %3716 = vmatpush1.bf16.msra.mxu0 %v3402
        %3717 = vmatprep.subr.bf16.mxu0 %v3405
        %3718 = vmatpush1.bf16.msra.mxu0 %v3404
        %3719 = vmatprep.subr.bf16.mxu0 %v3407
        %3720 = vmatpush1.bf16.msra.mxu0 %v3406
        %3721 = vmatprep.subr.bf16.mxu0 %v3409
        %3722 = vmatpush1.bf16.msra.mxu0 %v3408
        %3723 = vmatprep.subr.bf16.mxu0 %v3411
        %3724 = vmatpush1.bf16.msra.mxu0 %v3410
        %3725 = vmatprep.subr.bf16.mxu0 %v3413
        %3726 = vmatpush1.bf16.msra.mxu0 %v3412
        %3727 = vmatprep.subr.bf16.mxu0 %v3415
        %3728 = vmatpush1.bf16.msra.mxu0 %v3414
        %3729 = vmatprep.subr.bf16.mxu0 %v3417
        %3730 = vmatpush1.bf16.msra.mxu0 %v3416
        %3731 = vmatprep.subr.bf16.mxu0 %v3419
        %3732 = vmatpush1.bf16.msra.mxu0 %v3418
        %3733 = vmatprep.subr.bf16.mxu0 %v3421
        %3734 = vmatpush1.bf16.msra.mxu0 %v3420
        %3735 = vmatprep.subr.bf16.mxu0 %v3423
        %3736 = vmatpush1.bf16.msra.mxu0 %v3422
        %3737 = vmatprep.subr.bf16.mxu0 %v3425
        %3738 = vmatpush1.bf16.msra.mxu0 %v3424
        %3739 = vmatprep.subr.bf16.mxu0 %v3427
        %3740 = vmatpush1.bf16.msra.mxu0 %v3426
        %3741 = vmatprep.subr.bf16.mxu0 %v3429
        %3742 = vmatpush1.bf16.msra.mxu0 %v3428
        %3743 = vmatprep.subr.bf16.mxu0 %v3431
        %3744 = vmatpush1.bf16.msra.mxu0 %v3430
        %3745 = vmatprep.mubr.bf16.mxu0 %v2771
        %3746 = vmatmul.mubr.bf16.gmra.mrb[0].mxu0 %v2770
        %v3747 = vpop.f32.mrb[0].mxu0
        %v3748 = vadd.f32 %v3697, %v3747
        %v3749 = vpop.f32.mrb[0].mxu0
        %v3750 = vadd.f32 %v3699, %v3749
        %v3751 = vpop.f32.mrb[0].mxu0
        %v3752 = vadd.f32 %v3701, %v3751
        %v3753 = vpop.f32.mrb[0].mxu0
        %v3754 = vadd.f32 %v3703, %v3753
        %3755 = vmatprep.mubr.bf16.mxu0 %v2779
        %3756 = vmatmul.mubr.bf16.gmra.mrb[0].mxu0 %v2778
        %v3757 = vpop.f32.mrb[0].mxu0
        %v3758 = vadd.f32 %v3707, %v3757
        %v3759 = vpop.f32.mrb[0].mxu0
        %v3760 = vadd.f32 %v3709, %v3759
        %v3761 = vpop.f32.mrb[0].mxu0
        %v3762 = vpop.f32.mrb[0].mxu0
        %3763 = vdwg.mxu0
        %v3764 = vxor.u32 %v3748, 2147483648
        %v3765 = vxor.u32 %v3750, 2147483648
        %v3766 = vxor.u32 %v3752, 2147483648
        %v3767 = vxor.u32 %v3754, 2147483648
        %v3768 = vxor.u32 %v3758, 2147483648
        %v3769 = vxor.u32 %v3760, 2147483648
        %v3770 = vmul.f32 %v3764, 1.442695
        %v3771 = vpow.pop %v3770
        %v3772 = vmul.f32 %v3765, 1.442695
        %v3773 = vpow.pop %v3772
        %v3774 = vmul.f32 %v3766, 1.442695
        %v3775 = vpow.pop %v3774
        %v3776 = vmul.f32 %v3767, 1.442695
        %v3777 = vpow.pop %v3776
        %v3778 = vmul.f32 %v3768, 1.442695
        %v3779 = vpow.pop %v3778
        %v3780 = vmul.f32 %v3769, 1.442695
        %v3781 = vpow.pop %v3780
        %v3782 = vadd.f32 %v3771, 1.0
        %v3783 = vadd.f32 %v3773, 1.0
        %v3784 = vadd.f32 %v3775, 1.0
        %v3785 = vadd.f32 %v3777, 1.0
        %v3786 = vadd.f32 %v3779, 1.0
        %v3787 = vadd.f32 %v3781, 1.0
        %v3788 = vrcp.pop %v3782
        %v3789 = vmul.f32 1.0, %v3788
        %v3790 = vrcp.pop %v3783
        %v3791 = vmul.f32 1.0, %v3790
        %v3792 = vrcp.pop %v3784
        %v3793 = vmul.f32 1.0, %v3792
        %v3794 = vrcp.pop %v3785
        %v3795 = vmul.f32 1.0, %v3794
        %v3796 = vrcp.pop %v3786
        %v3797 = vmul.f32 1.0, %v3796
        %v3798 = vrcp.pop %v3787
        %v3799 = vmul.f32 1.0, %v3798
        %3800 = vst [vmem:[%s341] sm:$0xff] %v3789
        %3801 = vst [vmem:[%s341 + $0x8] sm:$0xff] %v3791
        %3802 = vst [vmem:[%s341 + $0x10] sm:$0xff] %v3793
        %3803 = vst [vmem:[%s341 + $0x18] sm:$0xff] %v3795
        %3804 = vst [vmem:[%s341 + $0x20] sm:$0xff] %v3797
        %3805 = vst [vmem:[%s341 + $0x28] sm:$0xff] %v3799
        %s3806 = sand.u32 %s186, 1
        %s3807 = scalar_lea.sflag [#allocation4], %s3806
        %s3808 = sand.u32 %s186, 1
        %s3809 = smul.addr %s3808, 48
        %s3810 = scalar_lea.vmem [#allocation10], %s3809
        // Predicated region
        $region65: #{tpu_custom_call.1} parent=47 // pred_check
          %p3811 = pneg %p196
        $region66: #{tpu_custom_call.1} parent=47 // pred_check_branch
          %3813 = sbr.rel (%p3811) target = $region68
        $region67: #{tpu_custom_call.1} parent=47 // pred_region
          %s3814 = smul.u32 3, %s26
          %s3816 = ssub.s32 768, 768
          %3817 = vsyncadd %s3807, %s3816
          %s3818 = smul.addr %s3814, 2
          %s3819 = smul.addr %s3818, 128
          %s3820 = scalar_lea.hbm %s7, %s3819
          %s3821 = sshll.u32 %s3810, 4
          %s3822 = int_to_ptr.vmem [resolvable:$true] %s3821
          %3827 = dma.vmem_to_hbm [thread:$0]  %s3822, 768, %s3820, %s3807, 256, 256, 16
        $region68: #{tpu_custom_call.1} parent=47 // pred_fallthru
          _
      $region48: #{tpu_custom_call.1} parent=5 // pred_fallthru
        _
      %p3828 = scmp.le.s32.totalorder 2, %s21
      // Predicated region
      $region69: #{tpu_custom_call.1} parent=5 // pred_check
        %p3829 = pneg %p3828
      $region70: #{tpu_custom_call.1} parent=5 // pred_check_branch
        %3831 = sbr.rel (%p3829) target = $region72
      $region71: #{tpu_custom_call.1} parent=5 // pred_region
        %s3832 = ssub.s32 %s21, 2
        // Predicated region
        $region73: #{tpu_custom_call.1} parent=71 // pred_check
          %p3833 = pneg %p202
        $region74: #{tpu_custom_call.1} parent=71 // pred_check_branch
          %3835 = sbr.rel (%p3833) target = $region76
        $region75: #{tpu_custom_call.1} parent=71 // pred_region
          %s3836 = sand.u32 %s187, 1
          %s3837 = scalar_lea.sflag [#allocation4], %s3836
          %s3838 = sand.u32 %s187, 1
          %s3839 = smul.addr %s3838, 48
          %s3840 = scalar_lea.vmem [#allocation10], %s3839
          %3841 = dma.done %s3837, 768
        $region76: #{tpu_custom_call.1} parent=71 // pred_fallthru
          _
      $region72: #{tpu_custom_call.1} parent=5 // pred_fallthru
        _
    $region6: #{tpu_custom_call.1} parent=1 // loop_footer
      %s25 = sadd.s32 1, %s21
    $region7: #{tpu_custom_call.1} parent=1 // loop_footer_branch
      %20 = sbr.rel target = $region3
    $region8: #{tpu_custom_call.1} parent=1 // loop_exit
      _
    %3842 = vsyncpa [#allocation3], 1
    %s3843 = scalar_lea.sflag [#allocation3], 1
    %3844 = vsyncpa %s3843, 1
    %3845 = vsyncpa [#allocation6], 1
    %3846 = vsyncpa [#allocation9], 1
    %3847 = vsyncpa [#allocation4], 1
    %s3848 = scalar_lea.sflag [#allocation4], 1
    %3849 = vsyncpa %s3848, 1

</llo_original>
